<compile_context>
chip_gen: v7x
topology: tpu7x:2x2x1
jax: 0.10.0
libtpu: 0.0.40
codegen_flags: <defaults>
</compile_context>

<pallas_src>
import functools

import jax
import jax.numpy as jnp
from jax.experimental import pallas as pl
from jax.experimental.pallas import tpu as pltpu

hidden_dim_1 = 256
hidden_dim_2 = 128

_LANE = 128
_SUBLANE = 8


def _round_up(x, m):
    return (x + m - 1) // m * m


def _bf16(x):
    return x.astype(jnp.bfloat16)


def _mm(a, b):
    # bf16 inputs, f32 accumulation on the MXU.
    return jnp.dot(a, b, preferred_element_type=jnp.float32)


def _pad2(x, rows, cols):
    return jnp.pad(x, ((0, rows - x.shape[0]), (0, cols - x.shape[1])))


def _vmem_capacity_bytes():
    try:
        return int(pltpu.get_tpu_info().vmem_capacity_bytes)
    except Exception:
        return 64 * 1024 * 1024  # conservative: v7x per-TensorCore VMEM


# --------------------------------------------------------------------------
# The whole network in one kernel: 2 BiFusion encoder layers + pair gather
# + MLP decoder.  Every weight, adjacency matrix and intermediate stays in
# VMEM; the only HBM store is the lane-dense (1, npair_pad) prediction row.
# --------------------------------------------------------------------------
def _bifusion_net_kernel(
        row_ref, col_ref,
        ppi_ref, dd_adj_ref, drug_f_ref, dis_f_ref, prot_f_ref,
        wp1_ref, bp1_ref, wd1_ref, bd1_ref, wz1_ref, bz1_ref,
        wp2_ref, bp2_ref, wd2_ref, bd2_ref, wz2_ref, bz2_ref,
        w1a_ref, w1b_ref, b1_ref, w2_ref, b2_ref,
        pred_ref, *, drug_pad):

    def layer(drug_x, dis_x, prot_x, wp, bp, wd, bd, wz, bz):
        # GCN step on the PPI graph.
        prot_t = _mm(prot_x, wp)                                    # (P, H) f32
        prot_h = jnp.maximum(_mm(ppi_ref[...], _bf16(prot_t)) + bp, 0.0)
        prot_hb = _bf16(prot_h)
        # Drug + disease aggregation over proteins, stacked (shared K = P)
        # so the MXU sees one larger-M matmul instead of two small ones.
        dd = _mm(dd_adj_ref[...], prot_hb)                          # (D+Z, H)
        # drug_pad is a multiple of 8 -> both slices are tile-aligned views.
        drug_h = jnp.maximum(dd[:drug_pad] + _mm(drug_x, wd) + bd, 0.0)
        dis_h = jnp.maximum(dd[drug_pad:] + _mm(dis_x, wz) + bz, 0.0)
        return _bf16(drug_h), _bf16(dis_h), prot_hb

    d1, z1, p1 = layer(drug_f_ref[...], dis_f_ref[...], prot_f_ref[...],
                       wp1_ref[...], bp1_ref[...], wd1_ref[...], bd1_ref[...],
                       wz1_ref[...], bz1_ref[...])
    d2, z2, _ = layer(d1, z1, p1,
                      wp2_ref[...], bp2_ref[...], wd2_ref[...], bd2_ref[...],
                      wz2_ref[...], bz2_ref[...])

    # In-kernel pair gather: build one-hot selectors from int32 row/col via
    # iota compares (VPU) -- no HBM round-trip of one-hot matrices.
    npad = row_ref.shape[0]
    sel_drug = (jax.lax.broadcasted_iota(jnp.int32, (npad, d2.shape[0]), 1)
                == row_ref[...]).astype(jnp.bfloat16)
    sel_dis = (jax.lax.broadcasted_iota(jnp.int32, (npad, z2.shape[0]), 1)
               == col_ref[...]).astype(jnp.bfloat16)
    drug_rows = _mm(sel_drug, d2)                                   # (npad, H2)
    dis_cols = _mm(sel_dis, z2)                                     # (npad, H2)

    h = jnp.maximum(_mm(_bf16(drug_rows), w1a_ref[...]) +
                    _mm(_bf16(dis_cols), w1b_ref[...]) + b1_ref[...], 0.0)

    # Final (H2 -> 1) projection off the MXU: transpose (XLU), broadcast-mul
    # against the w2 column (VPU), sublane-reduce (XLU).  Output is one
    # lane-dense f32 row with one prediction per lane.
    h_t = h.T                                                       # (H2, npad)
    logit = jnp.sum(h_t * w2_ref[...], axis=0, keepdims=True) + b2_ref[...]
    pred_ref[...] = jax.nn.sigmoid(logit)                           # (1, npad)


# --------------------------------------------------------------------------
# One-time input preparation (hoisted out of the per-step forward):
# bf16 casts, zero padding to MXU-friendly shapes, adjacency stacking.
# --------------------------------------------------------------------------
def prepare_bifusion_inputs(params, ppi, drug_protein, disease_protein,
                            drug_feature, disease_feature, protein_feature):
    P = ppi.shape[0]
    D, Fd = drug_feature.shape
    Z, Fz = disease_feature.shape
    Fp = protein_feature.shape[1]

    P_pad = _round_up(P, _LANE)
    Fd_pad, Fz_pad, Fp_pad = (_round_up(Fd, _LANE), _round_up(Fz, _LANE),
                              _round_up(Fp, _LANE))
    D_pad, Z_pad = _round_up(D, _SUBLANE), _round_up(Z, _SUBLANE)

    e1, e2, dec = params["encoder_1"], params["encoder_2"], params["decoder"]

    # Stack the two protein-adjacency matrices (shared K = protein_num).
    dd_adj = jnp.concatenate([_pad2(drug_protein, D_pad, P_pad),
                              _pad2(disease_protein, Z_pad, P_pad)], axis=0)

    tensors = dict(
        ppi=_bf16(_pad2(ppi, P_pad, P_pad)),
        dd_adj=_bf16(dd_adj),
        drug_f=_bf16(_pad2(drug_feature, D_pad, Fd_pad)),
        dis_f=_bf16(_pad2(disease_feature, Z_pad, Fz_pad)),
        prot_f=_bf16(_pad2(protein_feature, P_pad, Fp_pad)),
        wp1=_bf16(_pad2(e1["wp"], Fp_pad, hidden_dim_1)), bp1=e1["bp"],
        wd1=_bf16(_pad2(e1["wd"], Fd_pad, hidden_dim_1)), bd1=e1["bd"],
        wz1=_bf16(_pad2(e1["wz"], Fz_pad, hidden_dim_1)), bz1=e1["bz"],
        wp2=_bf16(e2["wp"]), bp2=e2["bp"],
        wd2=_bf16(e2["wd"]), bd2=e2["bd"],
        wz2=_bf16(e2["wz"]), bz2=e2["bz"],
        w1a=_bf16(dec["w1a"]), w1b=_bf16(dec["w1b"]), b1=dec["b1"],
        w2=dec["w2"],          # (H2, 1) f32, lane-broadcast in-kernel
        b2=dec["b2"],          # (1, 1)  f32
    )
    meta = dict(drug_num=D, disease_num=Z, drug_pad=D_pad, dis_pad=Z_pad)
    return dict(tensors=tensors, meta=meta)


# --------------------------------------------------------------------------
# Forward: per-call work is just padding row/col, then one pallas_call.
# --------------------------------------------------------------------------
@functools.partial(jax.jit, static_argnames=("drug_pad",))
def _bifusion_forward_call(tensors, row_p, col_p, *, drug_pad):
    t = tensors
    npad = row_p.shape[0]
    P_pad = t["ppi"].shape[0]
    DZ = t["dd_adj"].shape[0]
    D_pad = drug_pad
    Z_pad = DZ - drug_pad
    Fp_pad, Fd_pad, Fz_pad = (t["prot_f"].shape[1], t["drug_f"].shape[1],
                              t["dis_f"].shape[1])

    inputs = (row_p, col_p,
              t["ppi"], t["dd_adj"], t["drug_f"], t["dis_f"], t["prot_f"],
              t["wp1"], t["bp1"], t["wd1"], t["bd1"], t["wz1"], t["bz1"],
              t["wp2"], t["bp2"], t["wd2"], t["bd2"], t["wz2"], t["bz2"],
              t["w1a"], t["w1b"], t["b1"], t["w2"], t["b2"])

    # Generation-aware VMEM accounting: inputs + f32 intermediates + output.
    in_bytes = sum(int(x.size) * x.dtype.itemsize for x in inputs)
    inter_bytes = 4 * (3 * P_pad * hidden_dim_1 + 2 * DZ * hidden_dim_1 +
                       3 * P_pad * hidden_dim_2 + 2 * DZ * hidden_dim_2 +
                       6 * npad * hidden_dim_2)
    out_bytes = 4 * npad
    need = in_bytes + inter_bytes + out_bytes
    cap = _vmem_capacity_bytes()
    assert 2 * need <= int(0.75 * cap), (need, cap)
    vmem_limit = int(min(0.75 * cap, max(32 * 1024 * 1024, 4 * need)))

    flops = 2 * (P_pad * Fp_pad * hidden_dim_1 + P_pad * P_pad * hidden_dim_1
                 + DZ * P_pad * hidden_dim_1
                 + D_pad * Fd_pad * hidden_dim_1 + Z_pad * Fz_pad * hidden_dim_1
                 + P_pad * hidden_dim_1 * hidden_dim_2
                 + P_pad * P_pad * hidden_dim_2
                 + DZ * P_pad * hidden_dim_2
                 + DZ * hidden_dim_1 * hidden_dim_2
                 + npad * DZ * hidden_dim_2
                 + 2 * npad * hidden_dim_2 * hidden_dim_2
                 + npad * hidden_dim_2)
    cost = pl.CostEstimate(flops=int(flops), transcendentals=int(npad),
                           bytes_accessed=int(in_bytes + out_bytes))

    vmem = pl.BlockSpec(memory_space=pltpu.MemorySpace.VMEM)
    kernel = functools.partial(_bifusion_net_kernel, drug_pad=drug_pad)

    return pl.pallas_call(
        kernel,
        out_shape=jax.ShapeDtypeStruct((1, npad), jnp.float32),
        in_specs=[vmem] * len(inputs),
        out_specs=vmem,
        compiler_params=pltpu.CompilerParams(vmem_limit_bytes=vmem_limit),
        cost_estimate=cost,
    )(*inputs)


def bifusion_net_forward(prepared, pair):
    tensors, meta = prepared["tensors"], prepared["meta"]
    row, col = pair[0], pair[1]
    num_pairs = int(row.shape[0])
    npad = _round_up(max(num_pairs, 1), _LANE)

    # Padded pair slots point at (0, 0); their predictions are sliced off.
    row_p = jnp.zeros((npad, 1), jnp.int32).at[:num_pairs, 0].set(
        row.astype(jnp.int32))
    col_p = jnp.zeros((npad, 1), jnp.int32).at[:num_pairs, 0].set(
        col.astype(jnp.int32))

    pred_row = _bifusion_forward_call(tensors, row_p, col_p,
                                      drug_pad=meta["drug_pad"])
    return pred_row[0, :num_pairs]


# --------------------------------------------------------------------------
# Deterministic parameter initialization
# --------------------------------------------------------------------------
def _linear_params(key, fan_in, fan_out):
    w = jax.random.normal(key, (fan_in, fan_out), jnp.float32) / jnp.sqrt(
        jnp.float32(fan_in))
    b = jnp.zeros((1, fan_out), jnp.float32)
    return w, b


def init_bifusion_layer(key, protein_feat, drug_feat, disease_feat, hidden):
    kp, kd, kz = jax.random.split(key, 3)
    wp, bp = _linear_params(kp, protein_feat, hidden)
    wd, bd = _linear_params(kd, drug_feat, hidden)
    wz, bz = _linear_params(kz, disease_feat, hidden)
    return dict(wp=wp, bp=bp, wd=wd, bd=bd, wz=wz, bz=bz)


def init_mlp_decoder(key, dim):
    k1, k2, k3 = jax.random.split(key, 3)
    w1a, _ = _linear_params(k1, dim, dim)
    w1b, b1 = _linear_params(k2, dim, dim)
    w2, b2 = _linear_params(k3, dim, 1)
    return dict(w1a=w1a, w1b=w1b, b1=b1, w2=w2, b2=b2)


def init_bifusion_net(key, protein_feat, drug_feat, disease_feat):
    k1, k2, k3 = jax.random.split(key, 3)
    return dict(
        encoder_1=init_bifusion_layer(k1, protein_feat, drug_feat,
                                      disease_feat, hidden_dim_1),
        encoder_2=init_bifusion_layer(k2, hidden_dim_1, hidden_dim_1,
                                      hidden_dim_1, hidden_dim_2),
        decoder=init_mlp_decoder(k3, hidden_dim_2),
    )


# --------------------------------------------------------------------------
# Pure-JAX reference with the same bf16-input / f32-accumulate numerics,
# used only as a correctness check in __main__.
# --------------------------------------------------------------------------
def _reference_forward(params, ppi, drug_protein, disease_protein,
                       drug_feature, disease_feature, protein_feature, pair):
    def mm(a, b):
        return jnp.dot(_bf16(a), _bf16(b), preferred_element_type=jnp.float32)

    def layer(p, drug_x, dis_x, prot_x):
        prot_h = jnp.maximum(mm(ppi, mm(prot_x, p["wp"])) + p["bp"], 0.0)
        drug_h = jnp.maximum(
            mm(drug_protein, prot_h) + mm(drug_x, p["wd"]) + p["bd"], 0.0)
        dis_h = jnp.maximum(
            mm(disease_protein, prot_h) + mm(dis_x, p["wz"]) + p["bz"], 0.0)
        return drug_h, dis_h, prot_h

    d, z, pr = layer(params["encoder_1"], drug_feature, disease_feature,
                     protein_feature)
    d, z, pr = layer(params["encoder_2"], d, z, pr)
    row, col = pair[0], pair[1]
    dec = params["decoder"]
    h = jnp.maximum(mm(d[row], dec["w1a"]) + mm(z[col], dec["w1b"])
                    + dec["b1"], 0.0)
    return jax.nn.sigmoid(
        jnp.dot(h, dec["w2"]) + dec["b2"]).flatten()


# --------------------------------------------------------------------------
if __name__ == "__main__":
    key = jax.random.PRNGKey(0)

    protein_num, drug_num, disease_num = 64, 32, 16
    protein_feature_num, drug_feature_num, disease_feature_num = 96, 80, 64
    num_pairs = 8

    (k_params, k_ppi, k_dp, k_zp, k_df, k_zf, k_pf,
     k_row, k_col) = jax.random.split(key, 9)

    params = init_bifusion_net(k_params, protein_feature_num,
                               drug_feature_num, disease_feature_num)

    ppi = jax.random.bernoulli(k_ppi, 0.2,
                               (protein_num, protein_num)).astype(jnp.float32)
    drug_protein = jax.random.bernoulli(
        k_dp, 0.2, (drug_num, protein_num)).astype(jnp.float32)
    disease_protein = jax.random.bernoulli(
        k_zp, 0.2, (disease_num, protein_num)).astype(jnp.float32)

    drug_feature = jax.random.normal(
        k_df, (drug_num, drug_feature_num), jnp.float32)
    disease_feature = jax.random.normal(
        k_zf, (disease_num, disease_feature_num), jnp.float32)
    protein_feature = jax.random.normal(
        k_pf, (protein_num, protein_feature_num), jnp.float32)

    row = jax.random.randint(k_row, (num_pairs,), 0, drug_num, jnp.int32)
    col = jax.random.randint(k_col, (num_pairs,), 0, disease_num, jnp.int32)
    pair = jnp.stack([row, col], axis=0)

    # One-time prep (casts / padding / stacking hoisted out of the step).
    prepared = jax.tree_util.tree_map(
        jax.block_until_ready,
        prepare_bifusion_inputs(params, ppi, drug_protein, disease_protein,
                                drug_feature, disease_feature,
                                protein_feature))

    pred = bifusion_net_forward(prepared, pair)
    pred = jax.block_until_ready(pred)

    assert pred.shape == (num_pairs,)
    assert bool(jnp.all(jnp.isfinite(pred)))

    ref = _reference_forward(params, ppi, drug_protein, disease_protein,
                             drug_feature, disease_feature, protein_feature,
                             pair)
    max_err = float(jnp.max(jnp.abs(pred - ref)))
    assert max_err < 3e-2, max_err

    print("KERNEL_OK")
</pallas_src>

<mosaic_0001>
module attributes {stable_mosaic.version = 11 : i64} {
  func.func @_bifusion_net_kernel(%arg0: memref<128x1xi32, #tpu.memory_space<vmem>>, %arg1: memref<128x1xi32, #tpu.memory_space<vmem>>, %arg2: memref<128x128xbf16, #tpu.memory_space<vmem>>, %arg3: memref<48x128xbf16, #tpu.memory_space<vmem>>, %arg4: memref<32x128xbf16, #tpu.memory_space<vmem>>, %arg5: memref<16x128xbf16, #tpu.memory_space<vmem>>, %arg6: memref<128x128xbf16, #tpu.memory_space<vmem>>, %arg7: memref<128x256xbf16, #tpu.memory_space<vmem>>, %arg8: memref<1x256xf32, #tpu.memory_space<vmem>>, %arg9: memref<128x256xbf16, #tpu.memory_space<vmem>>, %arg10: memref<1x256xf32, #tpu.memory_space<vmem>>, %arg11: memref<128x256xbf16, #tpu.memory_space<vmem>>, %arg12: memref<1x256xf32, #tpu.memory_space<vmem>>, %arg13: memref<256x128xbf16, #tpu.memory_space<vmem>>, %arg14: memref<1x128xf32, #tpu.memory_space<vmem>>, %arg15: memref<256x128xbf16, #tpu.memory_space<vmem>>, %arg16: memref<1x128xf32, #tpu.memory_space<vmem>>, %arg17: memref<256x128xbf16, #tpu.memory_space<vmem>>, %arg18: memref<1x128xf32, #tpu.memory_space<vmem>>, %arg19: memref<128x128xbf16, #tpu.memory_space<vmem>>, %arg20: memref<128x128xbf16, #tpu.memory_space<vmem>>, %arg21: memref<1x128xf32, #tpu.memory_space<vmem>>, %arg22: memref<128x1xf32, #tpu.memory_space<vmem>>, %arg23: memref<1x1xf32, #tpu.memory_space<vmem>>, %arg24: memref<1x128xf32, #tpu.memory_space<vmem>>) attributes {dimension_semantics = [], scalar_prefetch = 0 : i64, scratch_operands = 0 : i64, tpu.core_type = #tpu.core_type<tc>} {
    %c0 = arith.constant 0 : index
    %c0_0 = arith.constant 0 : index
    %0 = vector.load %arg4[%c0, %c0_0] : memref<32x128xbf16, #tpu.memory_space<vmem>>, vector<32x128xbf16>
    %c0_1 = arith.constant 0 : index
    %c0_2 = arith.constant 0 : index
    %1 = vector.load %arg5[%c0_1, %c0_2] : memref<16x128xbf16, #tpu.memory_space<vmem>>, vector<16x128xbf16>
    %c0_3 = arith.constant 0 : index
    %c0_4 = arith.constant 0 : index
    %2 = vector.load %arg6[%c0_3, %c0_4] : memref<128x128xbf16, #tpu.memory_space<vmem>>, vector<128x128xbf16>
    %c0_5 = arith.constant 0 : index
    %c0_6 = arith.constant 0 : index
    %3 = vector.load %arg7[%c0_5, %c0_6] : memref<128x256xbf16, #tpu.memory_space<vmem>>, vector<128x256xbf16>
    %c0_7 = arith.constant 0 : index
    %c0_8 = arith.constant 0 : index
    %4 = vector.load %arg8[%c0_7, %c0_8] : memref<1x256xf32, #tpu.memory_space<vmem>>, vector<1x256xf32>
    %c0_9 = arith.constant 0 : index
    %c0_10 = arith.constant 0 : index
    %5 = vector.load %arg9[%c0_9, %c0_10] : memref<128x256xbf16, #tpu.memory_space<vmem>>, vector<128x256xbf16>
    %c0_11 = arith.constant 0 : index
    %c0_12 = arith.constant 0 : index
    %6 = vector.load %arg10[%c0_11, %c0_12] : memref<1x256xf32, #tpu.memory_space<vmem>>, vector<1x256xf32>
    %c0_13 = arith.constant 0 : index
    %c0_14 = arith.constant 0 : index
    %7 = vector.load %arg11[%c0_13, %c0_14] : memref<128x256xbf16, #tpu.memory_space<vmem>>, vector<128x256xbf16>
    %c0_15 = arith.constant 0 : index
    %c0_16 = arith.constant 0 : index
    %8 = vector.load %arg12[%c0_15, %c0_16] : memref<1x256xf32, #tpu.memory_space<vmem>>, vector<1x256xf32>
    %cst = arith.constant dense<0.000000e+00> : vector<128x256xf32>
    %9 = tpu.matmul %2, %3, %cst {dimension_numbers = #tpu.dot_dimension_numbers<[1], [0], [0], [1], [0, 0, 1, 1], [], []>} : vector<128x128xbf16>, vector<128x256xbf16>, vector<128x256xf32> -> vector<128x256xf32>
    %c0_17 = arith.constant 0 : index
    %c0_18 = arith.constant 0 : index
    %10 = vector.load %arg2[%c0_17, %c0_18] : memref<128x128xbf16, #tpu.memory_space<vmem>>, vector<128x128xbf16>
    %11 = arith.truncf %9 : vector<128x256xf32> to vector<128x256xbf16>
    %cst_19 = arith.constant dense<0.000000e+00> : vector<128x256xf32>
    %12 = tpu.matmul %10, %11, %cst_19 {dimension_numbers = #tpu.dot_dimension_numbers<[1], [0], [0], [1], [0, 0, 1, 1], [], []>} : vector<128x128xbf16>, vector<128x256xbf16>, vector<128x256xf32> -> vector<128x256xf32>
    %13 = vector.broadcast %4 : vector<1x256xf32> to vector<128x256xf32>
    %14 = arith.addf %12, %13 : vector<128x256xf32>
    %cst_20 = arith.constant 0.000000e+00 : f32
    %15 = vector.broadcast %cst_20 : f32 to vector<128x256xf32>
    %16 = arith.maximumf %14, %15 : vector<128x256xf32>
    %17 = arith.truncf %16 : vector<128x256xf32> to vector<128x256xbf16>
    %c0_21 = arith.constant 0 : index
    %c0_22 = arith.constant 0 : index
    %18 = vector.load %arg3[%c0_21, %c0_22] : memref<48x128xbf16, #tpu.memory_space<vmem>>, vector<48x128xbf16>
    %cst_23 = arith.constant dense<0.000000e+00> : vector<48x256xf32>
    %19 = tpu.matmul %18, %17, %cst_23 {dimension_numbers = #tpu.dot_dimension_numbers<[1], [0], [0], [1], [0, 0, 1, 1], [], []>} : vector<48x128xbf16>, vector<128x256xbf16>, vector<48x256xf32> -> vector<48x256xf32>
    %20 = vector.extract_strided_slice %19 {offsets = [0, 0], sizes = [32, 256], strides = [1, 1]} : vector<48x256xf32> to vector<32x256xf32>
    %cst_24 = arith.constant dense<0.000000e+00> : vector<32x256xf32>
    %21 = tpu.matmul %0, %5, %cst_24 {dimension_numbers = #tpu.dot_dimension_numbers<[1], [0], [0], [1], [0, 0, 1, 1], [], []>} : vector<32x128xbf16>, vector<128x256xbf16>, vector<32x256xf32> -> vector<32x256xf32>
    %22 = arith.addf %20, %21 : vector<32x256xf32>
    %23 = vector.broadcast %6 : vector<1x256xf32> to vector<32x256xf32>
    %24 = arith.addf %22, %23 : vector<32x256xf32>
    %cst_25 = arith.constant 0.000000e+00 : f32
    %25 = vector.broadcast %cst_25 : f32 to vector<32x256xf32>
    %26 = arith.maximumf %24, %25 : vector<32x256xf32>
    %27 = vector.extract_strided_slice %19 {offsets = [32, 0], sizes = [16, 256], strides = [1, 1]} : vector<48x256xf32> to vector<16x256xf32>
    %cst_26 = arith.constant dense<0.000000e+00> : vector<16x256xf32>
    %28 = tpu.matmul %1, %7, %cst_26 {dimension_numbers = #tpu.dot_dimension_numbers<[1], [0], [0], [1], [0, 0, 1, 1], [], []>} : vector<16x128xbf16>, vector<128x256xbf16>, vector<16x256xf32> -> vector<16x256xf32>
    %29 = arith.addf %27, %28 : vector<16x256xf32>
    %30 = vector.broadcast %8 : vector<1x256xf32> to vector<16x256xf32>
    %31 = arith.addf %29, %30 : vector<16x256xf32>
    %cst_27 = arith.constant 0.000000e+00 : f32
    %32 = vector.broadcast %cst_27 : f32 to vector<16x256xf32>
    %33 = arith.maximumf %31, %32 : vector<16x256xf32>
    %34 = arith.truncf %26 : vector<32x256xf32> to vector<32x256xbf16>
    %35 = arith.truncf %33 : vector<16x256xf32> to vector<16x256xbf16>
    %c0_28 = arith.constant 0 : index
    %c0_29 = arith.constant 0 : index
    %36 = vector.load %arg13[%c0_28, %c0_29] : memref<256x128xbf16, #tpu.memory_space<vmem>>, vector<256x128xbf16>
    %c0_30 = arith.constant 0 : index
    %c0_31 = arith.constant 0 : index
    %37 = vector.load %arg14[%c0_30, %c0_31] : memref<1x128xf32, #tpu.memory_space<vmem>>, vector<1x128xf32>
    %c0_32 = arith.constant 0 : index
    %c0_33 = arith.constant 0 : index
    %38 = vector.load %arg15[%c0_32, %c0_33] : memref<256x128xbf16, #tpu.memory_space<vmem>>, vector<256x128xbf16>
    %c0_34 = arith.constant 0 : index
    %c0_35 = arith.constant 0 : index
    %39 = vector.load %arg16[%c0_34, %c0_35] : memref<1x128xf32, #tpu.memory_space<vmem>>, vector<1x128xf32>
    %c0_36 = arith.constant 0 : index
    %c0_37 = arith.constant 0 : index
    %40 = vector.load %arg17[%c0_36, %c0_37] : memref<256x128xbf16, #tpu.memory_space<vmem>>, vector<256x128xbf16>
    %c0_38 = arith.constant 0 : index
    %c0_39 = arith.constant 0 : index
    %41 = vector.load %arg18[%c0_38, %c0_39] : memref<1x128xf32, #tpu.memory_space<vmem>>, vector<1x128xf32>
    %cst_40 = arith.constant dense<0.000000e+00> : vector<128x128xf32>
    %42 = tpu.matmul %17, %36, %cst_40 {dimension_numbers = #tpu.dot_dimension_numbers<[1], [0], [0], [1], [0, 0, 1, 1], [], []>} : vector<128x256xbf16>, vector<256x128xbf16>, vector<128x128xf32> -> vector<128x128xf32>
    %c0_41 = arith.constant 0 : index
    %c0_42 = arith.constant 0 : index
    %43 = vector.load %arg2[%c0_41, %c0_42] : memref<128x128xbf16, #tpu.memory_space<vmem>>, vector<128x128xbf16>
    %44 = arith.truncf %42 : vector<128x128xf32> to vector<128x128xbf16>
    %cst_43 = arith.constant dense<0.000000e+00> : vector<128x128xf32>
    %45 = tpu.matmul %43, %44, %cst_43 {dimension_numbers = #tpu.dot_dimension_numbers<[1], [0], [0], [1], [0, 0, 1, 1], [], []>} : vector<128x128xbf16>, vector<128x128xbf16>, vector<128x128xf32> -> vector<128x128xf32>
    %46 = vector.broadcast %37 : vector<1x128xf32> to vector<128x128xf32>
    %47 = arith.addf %45, %46 : vector<128x128xf32>
    %cst_44 = arith.constant 0.000000e+00 : f32
    %48 = vector.broadcast %cst_44 : f32 to vector<128x128xf32>
    %49 = arith.maximumf %47, %48 : vector<128x128xf32>
    %50 = arith.truncf %49 : vector<128x128xf32> to vector<128x128xbf16>
    %c0_45 = arith.constant 0 : index
    %c0_46 = arith.constant 0 : index
    %51 = vector.load %arg3[%c0_45, %c0_46] : memref<48x128xbf16, #tpu.memory_space<vmem>>, vector<48x128xbf16>
    %cst_47 = arith.constant dense<0.000000e+00> : vector<48x128xf32>
    %52 = tpu.matmul %51, %50, %cst_47 {dimension_numbers = #tpu.dot_dimension_numbers<[1], [0], [0], [1], [0, 0, 1, 1], [], []>} : vector<48x128xbf16>, vector<128x128xbf16>, vector<48x128xf32> -> vector<48x128xf32>
    %53 = vector.extract_strided_slice %52 {offsets = [0, 0], sizes = [32, 128], strides = [1, 1]} : vector<48x128xf32> to vector<32x128xf32>
    %cst_48 = arith.constant dense<0.000000e+00> : vector<32x128xf32>
    %54 = tpu.matmul %34, %38, %cst_48 {dimension_numbers = #tpu.dot_dimension_numbers<[1], [0], [0], [1], [0, 0, 1, 1], [], []>} : vector<32x256xbf16>, vector<256x128xbf16>, vector<32x128xf32> -> vector<32x128xf32>
    %55 = arith.addf %53, %54 : vector<32x128xf32>
    %56 = vector.broadcast %39 : vector<1x128xf32> to vector<32x128xf32>
    %57 = arith.addf %55, %56 : vector<32x128xf32>
    %cst_49 = arith.constant 0.000000e+00 : f32
    %58 = vector.broadcast %cst_49 : f32 to vector<32x128xf32>
    %59 = arith.maximumf %57, %58 : vector<32x128xf32>
    %60 = vector.extract_strided_slice %52 {offsets = [32, 0], sizes = [16, 128], strides = [1, 1]} : vector<48x128xf32> to vector<16x128xf32>
    %cst_50 = arith.constant dense<0.000000e+00> : vector<16x128xf32>
    %61 = tpu.matmul %35, %40, %cst_50 {dimension_numbers = #tpu.dot_dimension_numbers<[1], [0], [0], [1], [0, 0, 1, 1], [], []>} : vector<16x256xbf16>, vector<256x128xbf16>, vector<16x128xf32> -> vector<16x128xf32>
    %62 = arith.addf %60, %61 : vector<16x128xf32>
    %63 = vector.broadcast %41 : vector<1x128xf32> to vector<16x128xf32>
    %64 = arith.addf %62, %63 : vector<16x128xf32>
    %cst_51 = arith.constant 0.000000e+00 : f32
    %65 = vector.broadcast %cst_51 : f32 to vector<16x128xf32>
    %66 = arith.maximumf %64, %65 : vector<16x128xf32>
    %67 = arith.truncf %59 : vector<32x128xf32> to vector<32x128xbf16>
    %68 = arith.truncf %66 : vector<16x128xf32> to vector<16x128xbf16>
    %69 = tpu.iota {dimensions = array<i32: 1>} : vector<128x32xi32>
    %c0_52 = arith.constant 0 : index
    %c0_53 = arith.constant 0 : index
    %70 = vector.load %arg0[%c0_52, %c0_53] : memref<128x1xi32, #tpu.memory_space<vmem>>, vector<128x1xi32>
    %71 = vector.broadcast %70 : vector<128x1xi32> to vector<128x32xi32>
    %72 = arith.cmpi eq, %69, %71 : vector<128x32xi32>
    %73 = arith.extui %72 : vector<128x32xi1> to vector<128x32xi32>
    %74 = arith.sitofp %73 : vector<128x32xi32> to vector<128x32xf32>
    %75 = arith.truncf %74 : vector<128x32xf32> to vector<128x32xbf16>
    %76 = tpu.iota {dimensions = array<i32: 1>} : vector<128x16xi32>
    %c0_54 = arith.constant 0 : index
    %c0_55 = arith.constant 0 : index
    %77 = vector.load %arg1[%c0_54, %c0_55] : memref<128x1xi32, #tpu.memory_space<vmem>>, vector<128x1xi32>
    %78 = vector.broadcast %77 : vector<128x1xi32> to vector<128x16xi32>
    %79 = arith.cmpi eq, %76, %78 : vector<128x16xi32>
    %80 = arith.extui %79 : vector<128x16xi1> to vector<128x16xi32>
    %81 = arith.sitofp %80 : vector<128x16xi32> to vector<128x16xf32>
    %82 = arith.truncf %81 : vector<128x16xf32> to vector<128x16xbf16>
    %cst_56 = arith.constant dense<0.000000e+00> : vector<128x128xf32>
    %83 = tpu.matmul %75, %67, %cst_56 {dimension_numbers = #tpu.dot_dimension_numbers<[1], [0], [0], [1], [0, 0, 1, 1], [], []>} : vector<128x32xbf16>, vector<32x128xbf16>, vector<128x128xf32> -> vector<128x128xf32>
    %cst_57 = arith.constant dense<0.000000e+00> : vector<128x128xf32>
    %84 = tpu.matmul %82, %68, %cst_57 {dimension_numbers = #tpu.dot_dimension_numbers<[1], [0], [0], [1], [0, 0, 1, 1], [], []>} : vector<128x16xbf16>, vector<16x128xbf16>, vector<128x128xf32> -> vector<128x128xf32>
    %85 = arith.truncf %83 : vector<128x128xf32> to vector<128x128xbf16>
    %c0_58 = arith.constant 0 : index
    %c0_59 = arith.constant 0 : index
    %86 = vector.load %arg19[%c0_58, %c0_59] : memref<128x128xbf16, #tpu.memory_space<vmem>>, vector<128x128xbf16>
    %cst_60 = arith.constant dense<0.000000e+00> : vector<128x128xf32>
    %87 = tpu.matmul %85, %86, %cst_60 {dimension_numbers = #tpu.dot_dimension_numbers<[1], [0], [0], [1], [0, 0, 1, 1], [], []>} : vector<128x128xbf16>, vector<128x128xbf16>, vector<128x128xf32> -> vector<128x128xf32>
    %88 = arith.truncf %84 : vector<128x128xf32> to vector<128x128xbf16>
    %c0_61 = arith.constant 0 : index
    %c0_62 = arith.constant 0 : index
    %89 = vector.load %arg20[%c0_61, %c0_62] : memref<128x128xbf16, #tpu.memory_space<vmem>>, vector<128x128xbf16>
    %cst_63 = arith.constant dense<0.000000e+00> : vector<128x128xf32>
    %90 = tpu.matmul %88, %89, %cst_63 {dimension_numbers = #tpu.dot_dimension_numbers<[1], [0], [0], [1], [0, 0, 1, 1], [], []>} : vector<128x128xbf16>, vector<128x128xbf16>, vector<128x128xf32> -> vector<128x128xf32>
    %91 = arith.addf %87, %90 : vector<128x128xf32>
    %c0_64 = arith.constant 0 : index
    %c0_65 = arith.constant 0 : index
    %92 = vector.load %arg21[%c0_64, %c0_65] : memref<1x128xf32, #tpu.memory_space<vmem>>, vector<1x128xf32>
    %93 = vector.broadcast %92 : vector<1x128xf32> to vector<128x128xf32>
    %94 = arith.addf %91, %93 : vector<128x128xf32>
    %cst_66 = arith.constant 0.000000e+00 : f32
    %95 = vector.broadcast %cst_66 : f32 to vector<128x128xf32>
    %96 = arith.maximumf %94, %95 : vector<128x128xf32>
    %97 = tpu.transpose %96, [1, 0] : vector<128x128xf32> -> vector<128x128xf32>
    %c0_67 = arith.constant 0 : index
    %c0_68 = arith.constant 0 : index
    %98 = vector.load %arg22[%c0_67, %c0_68] : memref<128x1xf32, #tpu.memory_space<vmem>>, vector<128x1xf32>
    %99 = vector.broadcast %98 : vector<128x1xf32> to vector<128x128xf32>
    %100 = arith.mulf %97, %99 : vector<128x128xf32>
    %cst_69 = arith.constant dense<0.000000e+00> : vector<128xf32>
    %101 = vector.multi_reduction <add>, %100, %cst_69 [0] : vector<128x128xf32> to vector<128xf32>
    %102 = vector.shape_cast %101 : vector<128xf32> to vector<1x128xf32>
    %c0_70 = arith.constant 0 : index
    %c0_71 = arith.constant 0 : index
    %103 = vector.load %arg23[%c0_70, %c0_71] : memref<1x1xf32, #tpu.memory_space<vmem>>, vector<1x1xf32>
    %104 = vector.broadcast %103 : vector<1x1xf32> to vector<1x128xf32>
    %105 = arith.addf %102, %104 : vector<1x128xf32>
    %106 = arith.negf %105 : vector<1x128xf32>
    %107 = math.exp %106 : vector<1x128xf32>
    %cst_72 = arith.constant 1.000000e+00 : f32
    %108 = vector.broadcast %cst_72 : f32 to vector<1x128xf32>
    %109 = arith.addf %108, %107 : vector<1x128xf32>
    %110 = arith.divf %108, %109 : vector<1x128xf32>
    %c0_73 = arith.constant 0 : index
    %c0_74 = arith.constant 0 : index
    %111 = vector.load %arg24[%c0_73, %c0_74] : memref<1x128xf32, #tpu.memory_space<vmem>>, vector<1x128xf32>
    tpu.vector_store %arg24[%c0_73, %c0_74], %110 {strides = array<i32>} : memref<1x128xf32, #tpu.memory_space<vmem>>, vector<1x128xf32>,
    return
  }
}

</mosaic_0001>

<llo_original>
// kernel: _bifusion_forward_call.1
$region0: #{_bifusion_forward_call.1}
  #allocation0 [shape = 'u32[]', space=smem, size = 0x4, offset = 0x4, fixed_abs, tag = 'smem constant byte address 0x4 - core index']
  #allocation1 [shape = 'u32[144,128]{1,0:T(1,128)}', space=vmem, size = 0x12000, scoped, tag = 'internal scratch']
  #allocation2 [shape = 'f32[1,1]{1,0:T(1,128)S(1)}', space=vmem, size = 0x200, scoped, tag = 'scoped memory for _bifusion_forward_call.1']
  %s0 = inlined_call_operand.vmem [shape: s32[128,1], index: 0, kind: input, shape index: {}]
  %s1 = inlined_call_operand.vmem [shape: s32[128,1], index: 1, kind: input, shape index: {}]
  %s2 = inlined_call_operand.hbm [shape: bf16[128,128], index: 2, kind: input, shape index: {}]
  %s3 = inlined_call_operand.vmem [shape: bf16[48,128], index: 3, kind: input, shape index: {}]
  %s4 = inlined_call_operand.vmem [shape: bf16[32,128], index: 4, kind: input, shape index: {}]
  %s5 = inlined_call_operand.hbm [shape: bf16[16,128], index: 5, kind: input, shape index: {}]
  %s6 = inlined_call_operand.hbm [shape: bf16[128,128], index: 6, kind: input, shape index: {}]
  %s7 = inlined_call_operand.vmem [shape: bf16[128,256], index: 7, kind: input, shape index: {}]
  %s8 = inlined_call_operand.hbm [shape: f32[1,256], index: 8, kind: input, shape index: {}]
  %s9 = inlined_call_operand.vmem [shape: bf16[128,256], index: 9, kind: input, shape index: {}]
  %s10 = inlined_call_operand.hbm [shape: f32[1,256], index: 10, kind: input, shape index: {}]
  %s11 = inlined_call_operand.vmem [shape: bf16[128,256], index: 11, kind: input, shape index: {}]
  %s12 = inlined_call_operand.hbm [shape: f32[1,256], index: 12, kind: input, shape index: {}]
  %s13 = inlined_call_operand.hbm [shape: bf16[256,128], index: 13, kind: input, shape index: {}]
  %s14 = inlined_call_operand.hbm [shape: f32[1,128], index: 14, kind: input, shape index: {}]
  %s15 = inlined_call_operand.hbm [shape: bf16[256,128], index: 15, kind: input, shape index: {}]
  %s16 = inlined_call_operand.hbm [shape: f32[1,128], index: 16, kind: input, shape index: {}]
  %s17 = inlined_call_operand.hbm [shape: bf16[256,128], index: 17, kind: input, shape index: {}]
  %s18 = inlined_call_operand.hbm [shape: f32[1,128], index: 18, kind: input, shape index: {}]
  %s19 = inlined_call_operand.hbm [shape: bf16[128,128], index: 19, kind: input, shape index: {}]
  %s20 = inlined_call_operand.hbm [shape: bf16[128,128], index: 20, kind: input, shape index: {}]
  %s21 = inlined_call_operand.hbm [shape: f32[1,128], index: 21, kind: input, shape index: {}]
  %s22 = inlined_call_operand.vmem [shape: f32[128,1], index: 22, kind: input, shape index: {}]
  %s23 = inlined_call_operand.<no memory space> [shape: f32[1,1], index: 23, kind: input, shape index: {}]
  %s24 = inlined_call_operand.hbm [shape: f32[1,128], index: 24, kind: output, shape index: {}]
  %s25 = sld [smem:[#allocation0]]
  $region166: #{_bifusion_forward_call.1} parent=0
    _
  %s27 = ssub.s32 1, %s25
  %s28 = scalar_select 0, %s27, %s25
  %v29 = vstv %s23
  %30 = vst [vmem:[#allocation2] sm:$0x1] %v29
  $region1: #{_bifusion_forward_call.1} parent=0
    #allocation3 [shape = 'u8[32768]{0}', space=vmem, size = 0x8000, scoped, tag = 'input window, operand 2, single buffered']
    #allocation4 [shape = 's32[1]{0}', space=sflag, size = 0x4, scoped, tag = 'scoped memory for _bifusion_forward_call.1']
    #allocation5 [shape = 's32[1]{0}', space=sflag, size = 0x4, scoped, tag = 'scoped memory for _bifusion_forward_call.1']
    #allocation6 [shape = 'u8[4096]{0}', space=vmem, size = 0x1000, scoped, tag = 'input window, operand 5, single buffered']
    #allocation7 [shape = 's32[1]{0}', space=sflag, size = 0x4, scoped, tag = 'scoped memory for _bifusion_forward_call.1']
    #allocation8 [shape = 'u8[32768]{0}', space=vmem, size = 0x8000, scoped, tag = 'input window, operand 6, single buffered']
    #allocation9 [shape = 'u8[1024]{0}', space=vmem, size = 0x400, scoped, tag = 'input window, operand 8, single buffered']
    #allocation10 [shape = 's32[1]{0}', space=sflag, size = 0x4, scoped, tag = 'scoped memory for _bifusion_forward_call.1']
    #allocation11 [shape = 'u8[1024]{0}', space=vmem, size = 0x400, scoped, tag = 'input window, operand 10, single buffered']
    #allocation12 [shape = 'u8[1024]{0}', space=vmem, size = 0x400, scoped, tag = 'input window, operand 12, single buffered']
    #allocation13 [shape = 's32[1]{0}', space=sflag, size = 0x4, scoped, tag = 'scoped memory for _bifusion_forward_call.1']
    #allocation14 [shape = 'u8[65536]{0}', space=vmem, size = 0x10000, scoped, tag = 'input window, operand 13, single buffered']
    #allocation15 [shape = 'u8[512]{0}', space=vmem, size = 0x400, scoped, tag = 'input window, operand 14, single buffered']
    #allocation16 [shape = 's32[1]{0}', space=sflag, size = 0x4, scoped, tag = 'scoped memory for _bifusion_forward_call.1']
    #allocation17 [shape = 'u8[65536]{0}', space=vmem, size = 0x10000, scoped, tag = 'input window, operand 15, single buffered']
    #allocation18 [shape = 'u8[512]{0}', space=vmem, size = 0x400, scoped, tag = 'input window, operand 16, single buffered']
    #allocation19 [shape = 's32[1]{0}', space=sflag, size = 0x4, scoped, tag = 'scoped memory for _bifusion_forward_call.1']
    #allocation20 [shape = 'u8[65536]{0}', space=vmem, size = 0x10000, scoped, tag = 'input window, operand 17, single buffered']
    #allocation21 [shape = 'u8[512]{0}', space=vmem, size = 0x400, scoped, tag = 'input window, operand 18, single buffered']
    #allocation22 [shape = 's32[1]{0}', space=sflag, size = 0x4, scoped, tag = 'scoped memory for _bifusion_forward_call.1']
    #allocation23 [shape = 'u8[32768]{0}', space=vmem, size = 0x8000, scoped, tag = 'input window, operand 19, single buffered']
    #allocation24 [shape = 'u8[32768]{0}', space=vmem, size = 0x8000, scoped, tag = 'input window, operand 20, single buffered']
    #allocation25 [shape = 's32[1]{0}', space=sflag, size = 0x4, scoped, tag = 'scoped memory for _bifusion_forward_call.1']
    #allocation26 [shape = 'u8[512]{0}', space=vmem, size = 0x400, scoped, tag = 'input window, operand 21, single buffered']
    #allocation27 [shape = 'u8[512]{0}', space=vmem, size = 0x400, scoped, tag = 'output window, operand 0, single buffered']
    %31 = vsyncpa [#allocation4], 0
    %32 = vsyncpa [#allocation7], 0
    %33 = vsyncpa [#allocation10], 0
    %34 = vsyncpa [#allocation13], 0
    %35 = vsyncpa [#allocation16], 0
    %36 = vsyncpa [#allocation19], 0
    %37 = vsyncpa [#allocation22], 0
    %38 = vsyncpa [#allocation25], 0
    %39 = vsyncpa [#allocation5], 0
    // Predicated region
    $region2: #{_bifusion_forward_call.1} parent=1 // pred_check
      _
    $region3: #{_bifusion_forward_call.1} parent=1 // pred_check_branch
      %41 = sbr.rel (0) target = $region5
    $region4: #{_bifusion_forward_call.1} parent=1 // pred_region
      _
    $region5: #{_bifusion_forward_call.1} parent=1 // pred_fallthru
      _
    // Predicated region
    $region6: #{_bifusion_forward_call.1} parent=1 // pred_check
      _
    $region7: #{_bifusion_forward_call.1} parent=1 // pred_check_branch
      %43 = sbr.rel (0) target = $region9
    $region8: #{_bifusion_forward_call.1} parent=1 // pred_region
      _
    $region9: #{_bifusion_forward_call.1} parent=1 // pred_fallthru
      _
    // Predicated region
    $region10: #{_bifusion_forward_call.1} parent=1 // pred_check
      _
    $region11: #{_bifusion_forward_call.1} parent=1 // pred_check_branch
      %45 = sbr.rel (0) target = $region13
    $region12: #{_bifusion_forward_call.1} parent=1 // pred_region
      %s47 = ssub.s32 1024, 1024
      %48 = vsyncadd [#allocation4], %s47
      %s49 = sshll.u32 [#allocation3], 4
      %s50 = int_to_ptr.vmem [resolvable:$true] %s49
      %55 = dma.hbm_to_vmem [thread:$0]  %s2, 1024, %s50, [#allocation4], 64, 64, 4
    $region13: #{_bifusion_forward_call.1} parent=1 // pred_fallthru
      _
    // Predicated region
    $region14: #{_bifusion_forward_call.1} parent=1 // pred_check
      _
    $region15: #{_bifusion_forward_call.1} parent=1 // pred_check_branch
      %57 = sbr.rel (0) target = $region17
    $region16: #{_bifusion_forward_call.1} parent=1 // pred_region
      _
    $region17: #{_bifusion_forward_call.1} parent=1 // pred_fallthru
      _
    // Predicated region
    $region18: #{_bifusion_forward_call.1} parent=1 // pred_check
      _
    $region19: #{_bifusion_forward_call.1} parent=1 // pred_check_branch
      %59 = sbr.rel (0) target = $region21
    $region20: #{_bifusion_forward_call.1} parent=1 // pred_region
      _
    $region21: #{_bifusion_forward_call.1} parent=1 // pred_fallthru
      _
    // Predicated region
    $region22: #{_bifusion_forward_call.1} parent=1 // pred_check
      _
    $region23: #{_bifusion_forward_call.1} parent=1 // pred_check_branch
      %61 = sbr.rel (0) target = $region25
    $region24: #{_bifusion_forward_call.1} parent=1 // pred_region
      %s63 = ssub.s32 128, 128
      %64 = vsyncadd [#allocation7], %s63
      %s65 = sshll.u32 [#allocation6], 4
      %s66 = int_to_ptr.vmem [resolvable:$true] %s65
      %71 = dma.hbm_to_vmem [thread:$0]  %s5, 128, %s66, [#allocation7], 64, 64, 4
    $region25: #{_bifusion_forward_call.1} parent=1 // pred_fallthru
      _
    // Predicated region
    $region26: #{_bifusion_forward_call.1} parent=1 // pred_check
      _
    $region27: #{_bifusion_forward_call.1} parent=1 // pred_check_branch
      %73 = sbr.rel (0) target = $region29
    $region28: #{_bifusion_forward_call.1} parent=1 // pred_region
      %s75 = ssub.s32 1024, 1024
      %76 = vsyncadd [#allocation7], %s75
      %s77 = sshll.u32 [#allocation8], 4
      %s78 = int_to_ptr.vmem [resolvable:$true] %s77
      %83 = dma.hbm_to_vmem [thread:$0]  %s6, 1024, %s78, [#allocation7], 64, 64, 4
    $region29: #{_bifusion_forward_call.1} parent=1 // pred_fallthru
      _
    // Predicated region
    $region30: #{_bifusion_forward_call.1} parent=1 // pred_check
      _
    $region31: #{_bifusion_forward_call.1} parent=1 // pred_check_branch
      %85 = sbr.rel (0) target = $region33
    $region32: #{_bifusion_forward_call.1} parent=1 // pred_region
      _
    $region33: #{_bifusion_forward_call.1} parent=1 // pred_fallthru
      _
    // Predicated region
    $region34: #{_bifusion_forward_call.1} parent=1 // pred_check
      _
    $region35: #{_bifusion_forward_call.1} parent=1 // pred_check_branch
      %87 = sbr.rel (0) target = $region37
    $region36: #{_bifusion_forward_call.1} parent=1 // pred_region
      %s89 = ssub.s32 32, 32
      %90 = vsyncadd [#allocation10], %s89
      %s92 = sshll.u32 [#allocation9], 4
      %s93 = int_to_ptr.vmem [resolvable:$true] %s92
      %95 = dma.hbm_to_vmem [thread:$0]  %s8, 32, %s93, [#allocation10]
    $region37: #{_bifusion_forward_call.1} parent=1 // pred_fallthru
      _
    // Predicated region
    $region38: #{_bifusion_forward_call.1} parent=1 // pred_check
      _
    $region39: #{_bifusion_forward_call.1} parent=1 // pred_check_branch
      %97 = sbr.rel (0) target = $region41
    $region40: #{_bifusion_forward_call.1} parent=1 // pred_region
      _
    $region41: #{_bifusion_forward_call.1} parent=1 // pred_fallthru
      _
    // Predicated region
    $region42: #{_bifusion_forward_call.1} parent=1 // pred_check
      _
    $region43: #{_bifusion_forward_call.1} parent=1 // pred_check_branch
      %99 = sbr.rel (0) target = $region45
    $region44: #{_bifusion_forward_call.1} parent=1 // pred_region
      %s101 = ssub.s32 32, 32
      %102 = vsyncadd [#allocation10], %s101
      %s104 = sshll.u32 [#allocation11], 4
      %s105 = int_to_ptr.vmem [resolvable:$true] %s104
      %107 = dma.hbm_to_vmem [thread:$0]  %s10, 32, %s105, [#allocation10]
    $region45: #{_bifusion_forward_call.1} parent=1 // pred_fallthru
      _
    // Predicated region
    $region46: #{_bifusion_forward_call.1} parent=1 // pred_check
      _
    $region47: #{_bifusion_forward_call.1} parent=1 // pred_check_branch
      %109 = sbr.rel (0) target = $region49
    $region48: #{_bifusion_forward_call.1} parent=1 // pred_region
      _
    $region49: #{_bifusion_forward_call.1} parent=1 // pred_fallthru
      _
    // Predicated region
    $region50: #{_bifusion_forward_call.1} parent=1 // pred_check
      _
    $region51: #{_bifusion_forward_call.1} parent=1 // pred_check_branch
      %111 = sbr.rel (0) target = $region53
    $region52: #{_bifusion_forward_call.1} parent=1 // pred_region
      %s113 = ssub.s32 32, 32
      %114 = vsyncadd [#allocation13], %s113
      %s116 = sshll.u32 [#allocation12], 4
      %s117 = int_to_ptr.vmem [resolvable:$true] %s116
      %119 = dma.hbm_to_vmem [thread:$0]  %s12, 32, %s117, [#allocation13]
    $region53: #{_bifusion_forward_call.1} parent=1 // pred_fallthru
      _
    // Predicated region
    $region54: #{_bifusion_forward_call.1} parent=1 // pred_check
      _
    $region55: #{_bifusion_forward_call.1} parent=1 // pred_check_branch
      %121 = sbr.rel (0) target = $region57
    $region56: #{_bifusion_forward_call.1} parent=1 // pred_region
      %s123 = ssub.s32 2048, 2048
      %124 = vsyncadd [#allocation13], %s123
      %s125 = sshll.u32 [#allocation14], 4
      %s126 = int_to_ptr.vmem [resolvable:$true] %s125
      %131 = dma.hbm_to_vmem [thread:$0]  %s13, 2048, %s126, [#allocation13], 64, 64, 4
    $region57: #{_bifusion_forward_call.1} parent=1 // pred_fallthru
      _
    // Predicated region
    $region58: #{_bifusion_forward_call.1} parent=1 // pred_check
      _
    $region59: #{_bifusion_forward_call.1} parent=1 // pred_check_branch
      %133 = sbr.rel (0) target = $region61
    $region60: #{_bifusion_forward_call.1} parent=1 // pred_region
      %s135 = ssub.s32 16, 16
      %136 = vsyncadd [#allocation16], %s135
      %s138 = sshll.u32 [#allocation15], 4
      %s139 = int_to_ptr.vmem [resolvable:$true] %s138
      %141 = dma.hbm_to_vmem [thread:$0]  %s14, 16, %s139, [#allocation16]
    $region61: #{_bifusion_forward_call.1} parent=1 // pred_fallthru
      _
    // Predicated region
    $region62: #{_bifusion_forward_call.1} parent=1 // pred_check
      _
    $region63: #{_bifusion_forward_call.1} parent=1 // pred_check_branch
      %143 = sbr.rel (0) target = $region65
    $region64: #{_bifusion_forward_call.1} parent=1 // pred_region
      %s145 = ssub.s32 2048, 2048
      %146 = vsyncadd [#allocation16], %s145
      %s147 = sshll.u32 [#allocation17], 4
      %s148 = int_to_ptr.vmem [resolvable:$true] %s147
      %153 = dma.hbm_to_vmem [thread:$0]  %s15, 2048, %s148, [#allocation16], 64, 64, 4
    $region65: #{_bifusion_forward_call.1} parent=1 // pred_fallthru
      _
    // Predicated region
    $region66: #{_bifusion_forward_call.1} parent=1 // pred_check
      _
    $region67: #{_bifusion_forward_call.1} parent=1 // pred_check_branch
      %155 = sbr.rel (0) target = $region69
    $region68: #{_bifusion_forward_call.1} parent=1 // pred_region
      %s157 = ssub.s32 16, 16
      %158 = vsyncadd [#allocation19], %s157
      %s160 = sshll.u32 [#allocation18], 4
      %s161 = int_to_ptr.vmem [resolvable:$true] %s160
      %163 = dma.hbm_to_vmem [thread:$0]  %s16, 16, %s161, [#allocation19]
    $region69: #{_bifusion_forward_call.1} parent=1 // pred_fallthru
      _
    // Predicated region
    $region70: #{_bifusion_forward_call.1} parent=1 // pred_check
      _
    $region71: #{_bifusion_forward_call.1} parent=1 // pred_check_branch
      %165 = sbr.rel (0) target = $region73
    $region72: #{_bifusion_forward_call.1} parent=1 // pred_region
      %s167 = ssub.s32 2048, 2048
      %168 = vsyncadd [#allocation19], %s167
      %s169 = sshll.u32 [#allocation20], 4
      %s170 = int_to_ptr.vmem [resolvable:$true] %s169
      %175 = dma.hbm_to_vmem [thread:$0]  %s17, 2048, %s170, [#allocation19], 64, 64, 4
    $region73: #{_bifusion_forward_call.1} parent=1 // pred_fallthru
      _
    // Predicated region
    $region74: #{_bifusion_forward_call.1} parent=1 // pred_check
      _
    $region75: #{_bifusion_forward_call.1} parent=1 // pred_check_branch
      %177 = sbr.rel (0) target = $region77
    $region76: #{_bifusion_forward_call.1} parent=1 // pred_region
      %s179 = ssub.s32 16, 16
      %180 = vsyncadd [#allocation22], %s179
      %s182 = sshll.u32 [#allocation21], 4
      %s183 = int_to_ptr.vmem [resolvable:$true] %s182
      %185 = dma.hbm_to_vmem [thread:$0]  %s18, 16, %s183, [#allocation22]
    $region77: #{_bifusion_forward_call.1} parent=1 // pred_fallthru
      _
    // Predicated region
    $region78: #{_bifusion_forward_call.1} parent=1 // pred_check
      _
    $region79: #{_bifusion_forward_call.1} parent=1 // pred_check_branch
      %187 = sbr.rel (0) target = $region81
    $region80: #{_bifusion_forward_call.1} parent=1 // pred_region
      %s189 = ssub.s32 1024, 1024
      %190 = vsyncadd [#allocation22], %s189
      %s191 = sshll.u32 [#allocation23], 4
      %s192 = int_to_ptr.vmem [resolvable:$true] %s191
      %197 = dma.hbm_to_vmem [thread:$0]  %s19, 1024, %s192, [#allocation22], 64, 64, 4
    $region81: #{_bifusion_forward_call.1} parent=1 // pred_fallthru
      _
    // Predicated region
    $region82: #{_bifusion_forward_call.1} parent=1 // pred_check
      _
    $region83: #{_bifusion_forward_call.1} parent=1 // pred_check_branch
      %199 = sbr.rel (0) target = $region85
    $region84: #{_bifusion_forward_call.1} parent=1 // pred_region
      %s201 = ssub.s32 1024, 1024
      %202 = vsyncadd [#allocation25], %s201
      %s203 = sshll.u32 [#allocation24], 4
      %s204 = int_to_ptr.vmem [resolvable:$true] %s203
      %209 = dma.hbm_to_vmem [thread:$0]  %s20, 1024, %s204, [#allocation25], 64, 64, 4
    $region85: #{_bifusion_forward_call.1} parent=1 // pred_fallthru
      _
    // Predicated region
    $region86: #{_bifusion_forward_call.1} parent=1 // pred_check
      _
    $region87: #{_bifusion_forward_call.1} parent=1 // pred_check_branch
      %211 = sbr.rel (0) target = $region89
    $region88: #{_bifusion_forward_call.1} parent=1 // pred_region
      %s213 = ssub.s32 16, 16
      %214 = vsyncadd [#allocation25], %s213
      %s216 = sshll.u32 [#allocation26], 4
      %s217 = int_to_ptr.vmem [resolvable:$true] %s216
      %219 = dma.hbm_to_vmem [thread:$0]  %s21, 16, %s217, [#allocation25]
    $region89: #{_bifusion_forward_call.1} parent=1 // pred_fallthru
      _
    // Predicated region
    $region90: #{_bifusion_forward_call.1} parent=1 // pred_check
      _
    $region91: #{_bifusion_forward_call.1} parent=1 // pred_check_branch
      %221 = sbr.rel (0) target = $region93
    $region92: #{_bifusion_forward_call.1} parent=1 // pred_region
      _
    $region93: #{_bifusion_forward_call.1} parent=1 // pred_fallthru
      _
    // Predicated region
    $region94: #{_bifusion_forward_call.1} parent=1 // pred_check
      _
    $region95: #{_bifusion_forward_call.1} parent=1 // pred_check_branch
      %223 = sbr.rel (0) target = $region97
    $region96: #{_bifusion_forward_call.1} parent=1 // pred_region
      _
    $region97: #{_bifusion_forward_call.1} parent=1 // pred_fallthru
      _
    // Predicated region
    $region98: #{_bifusion_forward_call.1} parent=1 // pred_check
      _
    $region99: #{_bifusion_forward_call.1} parent=1 // pred_check_branch
      %225 = sbr.rel (0) target = $region101
    $region100: #{_bifusion_forward_call.1} parent=1 // pred_region
      %226 = dma.done [#allocation4], 1024
    $region101: #{_bifusion_forward_call.1} parent=1 // pred_fallthru
      _
    // Predicated region
    $region102: #{_bifusion_forward_call.1} parent=1 // pred_check
      _
    $region103: #{_bifusion_forward_call.1} parent=1 // pred_check_branch
      %228 = sbr.rel (0) target = $region105
    $region104: #{_bifusion_forward_call.1} parent=1 // pred_region
      %229 = dma.done [#allocation7], 128
    $region105: #{_bifusion_forward_call.1} parent=1 // pred_fallthru
      _
    // Predicated region
    $region106: #{_bifusion_forward_call.1} parent=1 // pred_check
      _
    $region107: #{_bifusion_forward_call.1} parent=1 // pred_check_branch
      %231 = sbr.rel (0) target = $region109
    $region108: #{_bifusion_forward_call.1} parent=1 // pred_region
      %232 = dma.done [#allocation7], 1024
    $region109: #{_bifusion_forward_call.1} parent=1 // pred_fallthru
      _
    // Predicated region
    $region110: #{_bifusion_forward_call.1} parent=1 // pred_check
      _
    $region111: #{_bifusion_forward_call.1} parent=1 // pred_check_branch
      %234 = sbr.rel (0) target = $region113
    $region112: #{_bifusion_forward_call.1} parent=1 // pred_region
      %235 = dma.done [#allocation10], 32
    $region113: #{_bifusion_forward_call.1} parent=1 // pred_fallthru
      _
    // Predicated region
    $region114: #{_bifusion_forward_call.1} parent=1 // pred_check
      _
    $region115: #{_bifusion_forward_call.1} parent=1 // pred_check_branch
      %237 = sbr.rel (0) target = $region117
    $region116: #{_bifusion_forward_call.1} parent=1 // pred_region
      %238 = dma.done [#allocation10], 32
    $region117: #{_bifusion_forward_call.1} parent=1 // pred_fallthru
      _
    // Predicated region
    $region118: #{_bifusion_forward_call.1} parent=1 // pred_check
      _
    $region119: #{_bifusion_forward_call.1} parent=1 // pred_check_branch
      %240 = sbr.rel (0) target = $region121
    $region120: #{_bifusion_forward_call.1} parent=1 // pred_region
      %241 = dma.done [#allocation13], 32
    $region121: #{_bifusion_forward_call.1} parent=1 // pred_fallthru
      _
    // Predicated region
    $region122: #{_bifusion_forward_call.1} parent=1 // pred_check
      _
    $region123: #{_bifusion_forward_call.1} parent=1 // pred_check_branch
      %243 = sbr.rel (0) target = $region125
    $region124: #{_bifusion_forward_call.1} parent=1 // pred_region
      %244 = dma.done [#allocation13], 2048
    $region125: #{_bifusion_forward_call.1} parent=1 // pred_fallthru
      _
    // Predicated region
    $region126: #{_bifusion_forward_call.1} parent=1 // pred_check
      _
    $region127: #{_bifusion_forward_call.1} parent=1 // pred_check_branch
      %246 = sbr.rel (0) target = $region129
    $region128: #{_bifusion_forward_call.1} parent=1 // pred_region
      %247 = dma.done [#allocation16], 16
    $region129: #{_bifusion_forward_call.1} parent=1 // pred_fallthru
      _
    // Predicated region
    $region130: #{_bifusion_forward_call.1} parent=1 // pred_check
      _
    $region131: #{_bifusion_forward_call.1} parent=1 // pred_check_branch
      %249 = sbr.rel (0) target = $region133
    $region132: #{_bifusion_forward_call.1} parent=1 // pred_region
      %250 = dma.done [#allocation16], 2048
    $region133: #{_bifusion_forward_call.1} parent=1 // pred_fallthru
      _
    // Predicated region
    $region134: #{_bifusion_forward_call.1} parent=1 // pred_check
      _
    $region135: #{_bifusion_forward_call.1} parent=1 // pred_check_branch
      %252 = sbr.rel (0) target = $region137
    $region136: #{_bifusion_forward_call.1} parent=1 // pred_region
      %253 = dma.done [#allocation19], 16
    $region137: #{_bifusion_forward_call.1} parent=1 // pred_fallthru
      _
    // Predicated region
    $region138: #{_bifusion_forward_call.1} parent=1 // pred_check
      _
    $region139: #{_bifusion_forward_call.1} parent=1 // pred_check_branch
      %255 = sbr.rel (0) target = $region141
    $region140: #{_bifusion_forward_call.1} parent=1 // pred_region
      %256 = dma.done [#allocation19], 2048
    $region141: #{_bifusion_forward_call.1} parent=1 // pred_fallthru
      _
    // Predicated region
    $region142: #{_bifusion_forward_call.1} parent=1 // pred_check
      _
    $region143: #{_bifusion_forward_call.1} parent=1 // pred_check_branch
      %258 = sbr.rel (0) target = $region145
    $region144: #{_bifusion_forward_call.1} parent=1 // pred_region
      %259 = dma.done [#allocation22], 16
    $region145: #{_bifusion_forward_call.1} parent=1 // pred_fallthru
      _
    // Predicated region
    $region146: #{_bifusion_forward_call.1} parent=1 // pred_check
      _
    $region147: #{_bifusion_forward_call.1} parent=1 // pred_check_branch
      %261 = sbr.rel (0) target = $region149
    $region148: #{_bifusion_forward_call.1} parent=1 // pred_region
      %262 = dma.done [#allocation22], 1024
    $region149: #{_bifusion_forward_call.1} parent=1 // pred_fallthru
      _
    // Predicated region
    $region150: #{_bifusion_forward_call.1} parent=1 // pred_check
      _
    $region151: #{_bifusion_forward_call.1} parent=1 // pred_check_branch
      %264 = sbr.rel (0) target = $region153
    $region152: #{_bifusion_forward_call.1} parent=1 // pred_region
      %265 = dma.done [#allocation25], 1024
    $region153: #{_bifusion_forward_call.1} parent=1 // pred_fallthru
      _
    // Predicated region
    $region154: #{_bifusion_forward_call.1} parent=1 // pred_check
      _
    $region155: #{_bifusion_forward_call.1} parent=1 // pred_check_branch
      %267 = sbr.rel (0) target = $region157
    $region156: #{_bifusion_forward_call.1} parent=1 // pred_region
      %268 = dma.done [#allocation25], 16
    $region157: #{_bifusion_forward_call.1} parent=1 // pred_fallthru
      _
    %v270 = vld [vmem:[%s4] sm:$0xf]
    %v271 = vld [vmem:[%s4 + $0x4] sm:$0xf]
    %v272 = vld [vmem:[%s4 + $0x8] sm:$0xf]
    %v273 = vld [vmem:[%s4 + $0xc] sm:$0xf]
    %v274 = vld [vmem:[#allocation6] sm:$0xf]
    %v275 = vld [vmem:[#allocation6 + $0x4] sm:$0xf]
    %v276 = vld [vmem:[#allocation8] sm:$0xf]
    %v277 = vld [vmem:[#allocation8 + $0x4] sm:$0xf]
    %v278 = vld [vmem:[#allocation8 + $0x8] sm:$0xf]
    %v279 = vld [vmem:[#allocation8 + $0xc] sm:$0xf]
    %v280 = vld [vmem:[#allocation8 + $0x10] sm:$0xf]
    %v281 = vld [vmem:[#allocation8 + $0x14] sm:$0xf]
    %v282 = vld [vmem:[#allocation8 + $0x18] sm:$0xf]
    %v283 = vld [vmem:[#allocation8 + $0x1c] sm:$0xf]
    %v284 = vld [vmem:[#allocation8 + $0x20] sm:$0xf]
    %v285 = vld [vmem:[#allocation8 + $0x24] sm:$0xf]
    %v286 = vld [vmem:[#allocation8 + $0x28] sm:$0xf]
    %v287 = vld [vmem:[#allocation8 + $0x2c] sm:$0xf]
    %v288 = vld [vmem:[#allocation8 + $0x30] sm:$0xf]
    %v289 = vld [vmem:[#allocation8 + $0x34] sm:$0xf]
    %v290 = vld [vmem:[#allocation8 + $0x38] sm:$0xf]
    %v291 = vld [vmem:[#allocation8 + $0x3c] sm:$0xf]
    %v292 = vld [vmem:[%s7] sm:$0xff]
    %v293 = vld [vmem:[%s7 + $0x8] sm:$0xff]
    %v294 = vld [vmem:[%s7 + $0x10] sm:$0xff]
    %v295 = vld [vmem:[%s7 + $0x18] sm:$0xff]
    %v296 = vld [vmem:[%s7 + $0x20] sm:$0xff]
    %v297 = vld [vmem:[%s7 + $0x28] sm:$0xff]
    %v298 = vld [vmem:[%s7 + $0x30] sm:$0xff]
    %v299 = vld [vmem:[%s7 + $0x38] sm:$0xff]
    %v300 = vld [vmem:[%s7 + $0x40] sm:$0xff]
    %v301 = vld [vmem:[%s7 + $0x48] sm:$0xff]
    %v302 = vld [vmem:[%s7 + $0x50] sm:$0xff]
    %v303 = vld [vmem:[%s7 + $0x58] sm:$0xff]
    %v304 = vld [vmem:[%s7 + $0x60] sm:$0xff]
    %v305 = vld [vmem:[%s7 + $0x68] sm:$0xff]
    %v306 = vld [vmem:[%s7 + $0x70] sm:$0xff]
    %v307 = vld [vmem:[%s7 + $0x78] sm:$0xff]
    %v308 = vld [vmem:[#allocation9] sm:$0x3]
    %v309 = vld [vmem:[%s9] sm:$0xff]
    %v310 = vld [vmem:[%s9 + $0x8] sm:$0xff]
    %v311 = vld [vmem:[%s9 + $0x10] sm:$0xff]
    %v312 = vld [vmem:[%s9 + $0x18] sm:$0xff]
    %v313 = vld [vmem:[%s9 + $0x20] sm:$0xff]
    %v314 = vld [vmem:[%s9 + $0x28] sm:$0xff]
    %v315 = vld [vmem:[%s9 + $0x30] sm:$0xff]
    %v316 = vld [vmem:[%s9 + $0x38] sm:$0xff]
    %v317 = vld [vmem:[%s9 + $0x40] sm:$0xff]
    %v318 = vld [vmem:[%s9 + $0x48] sm:$0xff]
    %v319 = vld [vmem:[%s9 + $0x50] sm:$0xff]
    %v320 = vld [vmem:[%s9 + $0x58] sm:$0xff]
    %v321 = vld [vmem:[%s9 + $0x60] sm:$0xff]
    %v322 = vld [vmem:[%s9 + $0x68] sm:$0xff]
    %v323 = vld [vmem:[%s9 + $0x70] sm:$0xff]
    %v324 = vld [vmem:[%s9 + $0x78] sm:$0xff]
    %v325 = vld [vmem:[#allocation11] sm:$0x3]
    %v326 = vld [vmem:[%s11] sm:$0xff]
    %v327 = vld [vmem:[%s11 + $0x8] sm:$0xff]
    %v328 = vld [vmem:[%s11 + $0x10] sm:$0xff]
    %v329 = vld [vmem:[%s11 + $0x18] sm:$0xff]
    %v330 = vld [vmem:[%s11 + $0x20] sm:$0xff]
    %v331 = vld [vmem:[%s11 + $0x28] sm:$0xff]
    %v332 = vld [vmem:[%s11 + $0x30] sm:$0xff]
    %v333 = vld [vmem:[%s11 + $0x38] sm:$0xff]
    %v334 = vld [vmem:[%s11 + $0x40] sm:$0xff]
    %v335 = vld [vmem:[%s11 + $0x48] sm:$0xff]
    %v336 = vld [vmem:[%s11 + $0x50] sm:$0xff]
    %v337 = vld [vmem:[%s11 + $0x58] sm:$0xff]
    %v338 = vld [vmem:[%s11 + $0x60] sm:$0xff]
    %v339 = vld [vmem:[%s11 + $0x68] sm:$0xff]
    %v340 = vld [vmem:[%s11 + $0x70] sm:$0xff]
    %v341 = vld [vmem:[%s11 + $0x78] sm:$0xff]
    %v342 = vld [vmem:[#allocation12] sm:$0x3]
    %v359 = vunpack.c.l.b16 %v276
    %v360 = vunpack.c.l.b16 %v277
    %v361 = vunpack.c.l.b16 %v278
    %v362 = vunpack.c.l.b16 %v279
    %v363 = vunpack.c.l.b16 %v280
    %v364 = vunpack.c.l.b16 %v281
    %v365 = vunpack.c.l.b16 %v282
    %v366 = vunpack.c.l.b16 %v283
    %v367 = vunpack.c.l.b16 %v284
    %v368 = vunpack.c.l.b16 %v285
    %v369 = vunpack.c.l.b16 %v286
    %v370 = vunpack.c.l.b16 %v287
    %v371 = vunpack.c.l.b16 %v288
    %v372 = vunpack.c.l.b16 %v289
    %v373 = vunpack.c.l.b16 %v290
    %v374 = vunpack.c.l.b16 %v291
    %v375 = vpack.c.b16 %v360, %v359
    %v376 = vpack.c.b16 %v362, %v361
    %v377 = vpack.c.b16 %v364, %v363
    %v378 = vpack.c.b16 %v366, %v365
    %v379 = vpack.c.b16 %v368, %v367
    %v380 = vpack.c.b16 %v370, %v369
    %v381 = vpack.c.b16 %v372, %v371
    %v382 = vpack.c.b16 %v374, %v373
    %v407 = vunpack.c.l.b16 %v292
    %v408 = vunpack.c.h.b16 %v292
    %v409 = vunpack.c.l.b16 %v293
    %v410 = vunpack.c.h.b16 %v293
    %v411 = vunpack.c.l.b16 %v294
    %v412 = vunpack.c.h.b16 %v294
    %v413 = vunpack.c.l.b16 %v295
    %v414 = vunpack.c.h.b16 %v295
    %v415 = vunpack.c.l.b16 %v296
    %v416 = vunpack.c.h.b16 %v296
    %v417 = vunpack.c.l.b16 %v297
    %v418 = vunpack.c.h.b16 %v297
    %v419 = vunpack.c.l.b16 %v298
    %v420 = vunpack.c.h.b16 %v298
    %v421 = vunpack.c.l.b16 %v299
    %v422 = vunpack.c.h.b16 %v299
    %v423 = vunpack.c.l.b16 %v300
    %v424 = vunpack.c.h.b16 %v300
    %v425 = vunpack.c.l.b16 %v301
    %v426 = vunpack.c.h.b16 %v301
    %v427 = vunpack.c.l.b16 %v302
    %v428 = vunpack.c.h.b16 %v302
    %v429 = vunpack.c.l.b16 %v303
    %v430 = vunpack.c.h.b16 %v303
    %v431 = vunpack.c.l.b16 %v304
    %v432 = vunpack.c.h.b16 %v304
    %v433 = vunpack.c.l.b16 %v305
    %v434 = vunpack.c.h.b16 %v305
    %v435 = vunpack.c.l.b16 %v306
    %v436 = vunpack.c.h.b16 %v306
    %v437 = vunpack.c.l.b16 %v307
    %v438 = vunpack.c.h.b16 %v307
    %v439 = vpack.c.b16 %v409, %v407
    %v440 = vpack.c.b16 %v410, %v408
    %v441 = vpack.c.b16 %v413, %v411
    %v442 = vpack.c.b16 %v414, %v412
    %v443 = vpack.c.b16 %v417, %v415
    %v444 = vpack.c.b16 %v418, %v416
    %v445 = vpack.c.b16 %v421, %v419
    %v446 = vpack.c.b16 %v422, %v420
    %v447 = vpack.c.b16 %v425, %v423
    %v448 = vpack.c.b16 %v426, %v424
    %v449 = vpack.c.b16 %v429, %v427
    %v450 = vpack.c.b16 %v430, %v428
    %v451 = vpack.c.b16 %v433, %v431
    %v452 = vpack.c.b16 %v434, %v432
    %v453 = vpack.c.b16 %v437, %v435
    %v454 = vpack.c.b16 %v438, %v436
    %471 = vmatprep.subr.bf16.mxu0 %v440
    %472 = vmatpush1.bf16.msra.mxu0 %v439
    %473 = vmatprep.subr.bf16.mxu0 %v442
    %474 = vmatpush1.bf16.msra.mxu0 %v441
    %475 = vmatprep.subr.bf16.mxu0 %v444
    %476 = vmatpush1.bf16.msra.mxu0 %v443
    %477 = vmatprep.subr.bf16.mxu0 %v446
    %478 = vmatpush1.bf16.msra.mxu0 %v445
    %479 = vmatprep.subr.bf16.mxu0 %v448
    %480 = vmatpush1.bf16.msra.mxu0 %v447
    %481 = vmatprep.subr.bf16.mxu0 %v450
    %482 = vmatpush1.bf16.msra.mxu0 %v449
    %483 = vmatprep.subr.bf16.mxu0 %v452
    %484 = vmatpush1.bf16.msra.mxu0 %v451
    %485 = vmatprep.subr.bf16.mxu0 %v454
    %486 = vmatpush1.bf16.msra.mxu0 %v453
    %487 = vmatprep.subr.bf16.mxu0 0
    %488 = vmatpush1.bf16.msra.mxu0 0
    %489 = vmatprep.subr.bf16.mxu0 0
    %490 = vmatpush1.bf16.msra.mxu0 0
    %491 = vmatprep.subr.bf16.mxu0 0
    %492 = vmatpush1.bf16.msra.mxu0 0
    %493 = vmatprep.subr.bf16.mxu0 0
    %494 = vmatpush1.bf16.msra.mxu0 0
    %495 = vmatprep.subr.bf16.mxu0 0
    %496 = vmatpush1.bf16.msra.mxu0 0
    %497 = vmatprep.subr.bf16.mxu0 0
    %498 = vmatpush1.bf16.msra.mxu0 0
    %499 = vmatprep.subr.bf16.mxu0 0
    %500 = vmatpush1.bf16.msra.mxu0 0
    %501 = vmatprep.subr.bf16.mxu0 0
    %502 = vmatpush1.bf16.msra.mxu0 0
    %503 = vmatprep.mubr.bf16.mxu0 0
    %504 = vmatmul.mubr.bf16.gmra.mrb[0].mxu0 %v375
    %v505 = vpop.f32.mrb[0].mxu0
    %v506 = vadd.f32 0.0, %v505
    %v507 = vpop.f32.mrb[0].mxu0
    %v508 = vadd.f32 0.0, %v507
    %v509 = vpop.f32.mrb[0].mxu0
    %v510 = vadd.f32 0.0, %v509
    %v511 = vpop.f32.mrb[0].mxu0
    %v512 = vadd.f32 0.0, %v511
    %513 = vmatprep.mubr.bf16.mxu0 0
    %514 = vmatmul.mubr.bf16.gmra.mrb[0].mxu0 %v376
    %v515 = vpop.f32.mrb[0].mxu0
    %v516 = vadd.f32 0.0, %v515
    %v517 = vpop.f32.mrb[0].mxu0
    %v518 = vadd.f32 0.0, %v517
    %v519 = vpop.f32.mrb[0].mxu0
    %v520 = vadd.f32 0.0, %v519
    %v521 = vpop.f32.mrb[0].mxu0
    %v522 = vadd.f32 0.0, %v521
    %523 = vmatprep.mubr.bf16.mxu0 0
    %524 = vmatmul.mubr.bf16.gmra.mrb[0].mxu0 %v377
    %v525 = vpop.f32.mrb[0].mxu0
    %v526 = vadd.f32 0.0, %v525
    %v527 = vpop.f32.mrb[0].mxu0
    %v528 = vadd.f32 0.0, %v527
    %v529 = vpop.f32.mrb[0].mxu0
    %v530 = vadd.f32 0.0, %v529
    %v531 = vpop.f32.mrb[0].mxu0
    %v532 = vadd.f32 0.0, %v531
    %533 = vmatprep.mubr.bf16.mxu0 0
    %534 = vmatmul.mubr.bf16.gmra.mrb[0].mxu0 %v378
    %v535 = vpop.f32.mrb[0].mxu0
    %v536 = vadd.f32 0.0, %v535
    %v537 = vpop.f32.mrb[0].mxu0
    %v538 = vadd.f32 0.0, %v537
    %v539 = vpop.f32.mrb[0].mxu0
    %v540 = vadd.f32 0.0, %v539
    %v541 = vpop.f32.mrb[0].mxu0
    %v542 = vadd.f32 0.0, %v541
    %543 = vmatprep.mubr.bf16.mxu0 0
    %544 = vmatmul.mubr.bf16.gmra.mrb[0].mxu0 %v379
    %v545 = vpop.f32.mrb[0].mxu0
    %v546 = vadd.f32 0.0, %v545
    %v547 = vpop.f32.mrb[0].mxu0
    %v548 = vadd.f32 0.0, %v547
    %v549 = vpop.f32.mrb[0].mxu0
    %v550 = vadd.f32 0.0, %v549
    %v551 = vpop.f32.mrb[0].mxu0
    %v552 = vadd.f32 0.0, %v551
    %553 = vmatprep.mubr.bf16.mxu0 0
    %554 = vmatmul.mubr.bf16.gmra.mrb[0].mxu0 %v380
    %v555 = vpop.f32.mrb[0].mxu0
    %v556 = vadd.f32 0.0, %v555
    %v557 = vpop.f32.mrb[0].mxu0
    %v558 = vadd.f32 0.0, %v557
    %v559 = vpop.f32.mrb[0].mxu0
    %v560 = vadd.f32 0.0, %v559
    %v561 = vpop.f32.mrb[0].mxu0
    %v562 = vadd.f32 0.0, %v561
    %563 = vmatprep.mubr.bf16.mxu0 0
    %564 = vmatmul.mubr.bf16.gmra.mrb[0].mxu0 %v381
    %v565 = vpop.f32.mrb[0].mxu0
    %v566 = vadd.f32 0.0, %v565
    %v567 = vpop.f32.mrb[0].mxu0
    %v568 = vadd.f32 0.0, %v567
    %v569 = vpop.f32.mrb[0].mxu0
    %v570 = vadd.f32 0.0, %v569
    %v571 = vpop.f32.mrb[0].mxu0
    %v572 = vadd.f32 0.0, %v571
    %573 = vmatprep.mubr.bf16.mxu0 0
    %574 = vmatmul.mubr.bf16.gmra.mrb[0].mxu0 %v382
    %v575 = vpop.f32.mrb[0].mxu0
    %v576 = vadd.f32 0.0, %v575
    %v577 = vpop.f32.mrb[0].mxu0
    %v578 = vadd.f32 0.0, %v577
    %v579 = vpop.f32.mrb[0].mxu0
    %v580 = vadd.f32 0.0, %v579
    %v581 = vpop.f32.mrb[0].mxu0
    %v582 = vadd.f32 0.0, %v581
    %583 = vdwg.mxu0
    %v584 = vld [vmem:[#allocation3] sm:$0xf]
    %v585 = vld [vmem:[#allocation3 + $0x4] sm:$0xf]
    %v586 = vld [vmem:[#allocation3 + $0x8] sm:$0xf]
    %v587 = vld [vmem:[#allocation3 + $0xc] sm:$0xf]
    %v588 = vld [vmem:[#allocation3 + $0x10] sm:$0xf]
    %v589 = vld [vmem:[#allocation3 + $0x14] sm:$0xf]
    %v590 = vld [vmem:[#allocation3 + $0x18] sm:$0xf]
    %v591 = vld [vmem:[#allocation3 + $0x1c] sm:$0xf]
    %v592 = vld [vmem:[#allocation3 + $0x20] sm:$0xf]
    %v593 = vld [vmem:[#allocation3 + $0x24] sm:$0xf]
    %v594 = vld [vmem:[#allocation3 + $0x28] sm:$0xf]
    %v595 = vld [vmem:[#allocation3 + $0x2c] sm:$0xf]
    %v596 = vld [vmem:[#allocation3 + $0x30] sm:$0xf]
    %v597 = vld [vmem:[#allocation3 + $0x34] sm:$0xf]
    %v598 = vld [vmem:[#allocation3 + $0x38] sm:$0xf]
    %v599 = vld [vmem:[#allocation3 + $0x3c] sm:$0xf]
    %v600 = vpack.c.bf16 %v510, %v506
    %v601 = vpack.c.bf16 %v512, %v508
    %v602 = vpack.c.bf16 %v520, %v516
    %v603 = vpack.c.bf16 %v522, %v518
    %v604 = vpack.c.bf16 %v530, %v526
    %v605 = vpack.c.bf16 %v532, %v528
    %v606 = vpack.c.bf16 %v540, %v536
    %v607 = vpack.c.bf16 %v542, %v538
    %v608 = vpack.c.bf16 %v550, %v546
    %v609 = vpack.c.bf16 %v552, %v548
    %v610 = vpack.c.bf16 %v560, %v556
    %v611 = vpack.c.bf16 %v562, %v558
    %v612 = vpack.c.bf16 %v570, %v566
    %v613 = vpack.c.bf16 %v572, %v568
    %v614 = vpack.c.bf16 %v580, %v576
    %v615 = vpack.c.bf16 %v582, %v578
    %v617 = vlaneseq
    %v618 = vshrl.u32 %v617, 7
    %v619 = vsub.s32 0, %v618
    %v620 = vrot.slane %v308, %v619
    %v621 = vlaneseq
    %v622 = vshrl.u32 %v621, 7
    %v623 = vsub.s32 1, %v622
    %v624 = vrot.slane %v308, %v623
    %v643 = vunpack.c.l.b16 %v584
    %v644 = vunpack.c.l.b16 %v585
    %v645 = vunpack.c.l.b16 %v586
    %v646 = vunpack.c.l.b16 %v587
    %v647 = vunpack.c.l.b16 %v588
    %v648 = vunpack.c.l.b16 %v589
    %v649 = vunpack.c.l.b16 %v590
    %v650 = vunpack.c.l.b16 %v591
    %v651 = vunpack.c.l.b16 %v592
    %v652 = vunpack.c.l.b16 %v593
    %v653 = vunpack.c.l.b16 %v594
    %v654 = vunpack.c.l.b16 %v595
    %v655 = vunpack.c.l.b16 %v596
    %v656 = vunpack.c.l.b16 %v597
    %v657 = vunpack.c.l.b16 %v598
    %v658 = vunpack.c.l.b16 %v599
    %v659 = vpack.c.b16 %v644, %v643
    %v660 = vpack.c.b16 %v646, %v645
    %v661 = vpack.c.b16 %v648, %v647
    %v662 = vpack.c.b16 %v650, %v649
    %v663 = vpack.c.b16 %v652, %v651
    %v664 = vpack.c.b16 %v654, %v653
    %v665 = vpack.c.b16 %v656, %v655
    %v666 = vpack.c.b16 %v658, %v657
    %675 = vmatprep.subr.bf16.mxu0 %v601
    %676 = vmatpush1.bf16.msra.mxu0 %v600
    %677 = vmatprep.subr.bf16.mxu0 %v603
    %678 = vmatpush1.bf16.msra.mxu0 %v602
    %679 = vmatprep.subr.bf16.mxu0 %v605
    %680 = vmatpush1.bf16.msra.mxu0 %v604
    %681 = vmatprep.subr.bf16.mxu0 %v607
    %682 = vmatpush1.bf16.msra.mxu0 %v606
    %683 = vmatprep.subr.bf16.mxu0 %v609
    %684 = vmatpush1.bf16.msra.mxu0 %v608
    %685 = vmatprep.subr.bf16.mxu0 %v611
    %686 = vmatpush1.bf16.msra.mxu0 %v610
    %687 = vmatprep.subr.bf16.mxu0 %v613
    %688 = vmatpush1.bf16.msra.mxu0 %v612
    %689 = vmatprep.subr.bf16.mxu0 %v615
    %690 = vmatpush1.bf16.msra.mxu0 %v614
    %691 = vmatprep.subr.bf16.mxu0 0
    %692 = vmatpush1.bf16.msra.mxu0 0
    %693 = vmatprep.subr.bf16.mxu0 0
    %694 = vmatpush1.bf16.msra.mxu0 0
    %695 = vmatprep.subr.bf16.mxu0 0
    %696 = vmatpush1.bf16.msra.mxu0 0
    %697 = vmatprep.subr.bf16.mxu0 0
    %698 = vmatpush1.bf16.msra.mxu0 0
    %699 = vmatprep.subr.bf16.mxu0 0
    %700 = vmatpush1.bf16.msra.mxu0 0
    %701 = vmatprep.subr.bf16.mxu0 0
    %702 = vmatpush1.bf16.msra.mxu0 0
    %703 = vmatprep.subr.bf16.mxu0 0
    %704 = vmatpush1.bf16.msra.mxu0 0
    %705 = vmatprep.subr.bf16.mxu0 0
    %706 = vmatpush1.bf16.msra.mxu0 0
    %707 = vmatprep.mubr.bf16.mxu0 0
    %708 = vmatmul.mubr.bf16.gmra.mrb[0].mxu0 %v659
    %v709 = vpop.f32.mrb[0].mxu0
    %v710 = vadd.f32 %v620, %v709
    %v711 = vpop.f32.mrb[0].mxu0
    %v712 = vadd.f32 %v624, %v711
    %v713 = vpop.f32.mrb[0].mxu0
    %v714 = vadd.f32 %v620, %v713
    %v715 = vpop.f32.mrb[0].mxu0
    %v716 = vadd.f32 %v624, %v715
    %717 = vmatprep.mubr.bf16.mxu0 0
    %718 = vmatmul.mubr.bf16.gmra.mrb[0].mxu0 %v660
    %v719 = vpop.f32.mrb[0].mxu0
    %v720 = vadd.f32 %v620, %v719
    %v721 = vpop.f32.mrb[0].mxu0
    %v722 = vadd.f32 %v624, %v721
    %v723 = vpop.f32.mrb[0].mxu0
    %v724 = vadd.f32 %v620, %v723
    %v725 = vpop.f32.mrb[0].mxu0
    %v726 = vadd.f32 %v624, %v725
    %727 = vmatprep.mubr.bf16.mxu0 0
    %728 = vmatmul.mubr.bf16.gmra.mrb[0].mxu0 %v661
    %v729 = vpop.f32.mrb[0].mxu0
    %v730 = vadd.f32 %v620, %v729
    %v731 = vpop.f32.mrb[0].mxu0
    %v732 = vadd.f32 %v624, %v731
    %v733 = vpop.f32.mrb[0].mxu0
    %v734 = vadd.f32 %v620, %v733
    %v735 = vpop.f32.mrb[0].mxu0
    %v736 = vadd.f32 %v624, %v735
    %737 = vmatprep.mubr.bf16.mxu0 0
    %738 = vmatmul.mubr.bf16.gmra.mrb[0].mxu0 %v662
    %v739 = vpop.f32.mrb[0].mxu0
    %v740 = vadd.f32 %v620, %v739
    %v741 = vpop.f32.mrb[0].mxu0
    %v742 = vadd.f32 %v624, %v741
    %v743 = vpop.f32.mrb[0].mxu0
    %v744 = vadd.f32 %v620, %v743
    %v745 = vpop.f32.mrb[0].mxu0
    %v746 = vadd.f32 %v624, %v745
    %747 = vmatprep.mubr.bf16.mxu0 0
    %748 = vmatmul.mubr.bf16.gmra.mrb[0].mxu0 %v663
    %v749 = vpop.f32.mrb[0].mxu0
    %v750 = vadd.f32 %v620, %v749
    %v751 = vpop.f32.mrb[0].mxu0
    %v752 = vadd.f32 %v624, %v751
    %v753 = vpop.f32.mrb[0].mxu0
    %v754 = vadd.f32 %v620, %v753
    %v755 = vpop.f32.mrb[0].mxu0
    %v756 = vadd.f32 %v624, %v755
    %757 = vmatprep.mubr.bf16.mxu0 0
    %758 = vmatmul.mubr.bf16.gmra.mrb[0].mxu0 %v664
    %v759 = vpop.f32.mrb[0].mxu0
    %v760 = vadd.f32 %v620, %v759
    %v761 = vpop.f32.mrb[0].mxu0
    %v762 = vadd.f32 %v624, %v761
    %v763 = vpop.f32.mrb[0].mxu0
    %v764 = vadd.f32 %v620, %v763
    %v765 = vpop.f32.mrb[0].mxu0
    %v766 = vadd.f32 %v624, %v765
    %767 = vmatprep.mubr.bf16.mxu0 0
    %768 = vmatmul.mubr.bf16.gmra.mrb[0].mxu0 %v665
    %v769 = vpop.f32.mrb[0].mxu0
    %v770 = vadd.f32 %v620, %v769
    %v771 = vpop.f32.mrb[0].mxu0
    %v772 = vadd.f32 %v624, %v771
    %v773 = vpop.f32.mrb[0].mxu0
    %v774 = vadd.f32 %v620, %v773
    %v775 = vpop.f32.mrb[0].mxu0
    %v776 = vadd.f32 %v624, %v775
    %777 = vmatprep.mubr.bf16.mxu0 0
    %778 = vmatmul.mubr.bf16.gmra.mrb[0].mxu0 %v666
    %v779 = vpop.f32.mrb[0].mxu0
    %v780 = vadd.f32 %v620, %v779
    %v781 = vpop.f32.mrb[0].mxu0
    %v782 = vadd.f32 %v624, %v781
    %v783 = vpop.f32.mrb[0].mxu0
    %v784 = vadd.f32 %v620, %v783
    %v785 = vpop.f32.mrb[0].mxu0
    %v786 = vadd.f32 %v624, %v785
    %787 = vdwg.mxu0
    %v788 = vmax.f32 %v710, 0.0
    %v789 = vmax.f32 %v712, 0.0
    %v790 = vmax.f32 %v714, 0.0
    %v791 = vmax.f32 %v716, 0.0
    %v792 = vmax.f32 %v720, 0.0
    %v793 = vmax.f32 %v722, 0.0
    %v794 = vmax.f32 %v724, 0.0
    %v795 = vmax.f32 %v726, 0.0
    %v796 = vmax.f32 %v730, 0.0
    %v797 = vmax.f32 %v732, 0.0
    %v798 = vmax.f32 %v734, 0.0
    %v799 = vmax.f32 %v736, 0.0
    %v800 = vmax.f32 %v740, 0.0
    %v801 = vmax.f32 %v742, 0.0
    %v802 = vmax.f32 %v744, 0.0
    %v803 = vmax.f32 %v746, 0.0
    %v804 = vmax.f32 %v750, 0.0
    %v805 = vmax.f32 %v752, 0.0
    %v806 = vmax.f32 %v754, 0.0
    %v807 = vmax.f32 %v756, 0.0
    %v808 = vmax.f32 %v760, 0.0
    %v809 = vmax.f32 %v762, 0.0
    %v810 = vmax.f32 %v764, 0.0
    %v811 = vmax.f32 %v766, 0.0
    %v812 = vmax.f32 %v770, 0.0
    %v813 = vmax.f32 %v772, 0.0
    %v814 = vmax.f32 %v774, 0.0
    %v815 = vmax.f32 %v776, 0.0
    %v816 = vmax.f32 %v780, 0.0
    %v817 = vmax.f32 %v782, 0.0
    %v818 = vmax.f32 %v784, 0.0
    %v819 = vmax.f32 %v786, 0.0
    %v820 = vpack.c.bf16 %v790, %v788
    %v821 = vpack.c.bf16 %v791, %v789
    %v822 = vpack.c.bf16 %v794, %v792
    %v823 = vpack.c.bf16 %v795, %v793
    %v824 = vpack.c.bf16 %v798, %v796
    %v825 = vpack.c.bf16 %v799, %v797
    %v826 = vpack.c.bf16 %v802, %v800
    %v827 = vpack.c.bf16 %v803, %v801
    %v828 = vpack.c.bf16 %v806, %v804
    %v829 = vpack.c.bf16 %v807, %v805
    %v830 = vpack.c.bf16 %v810, %v808
    %v831 = vpack.c.bf16 %v811, %v809
    %v832 = vpack.c.bf16 %v814, %v812
    %v833 = vpack.c.bf16 %v815, %v813
    %v834 = vpack.c.bf16 %v818, %v816
    %v835 = vpack.c.bf16 %v819, %v817
    %v836 = vld [vmem:[%s3] sm:$0xf]
    %v837 = vld [vmem:[%s3 + $0x4] sm:$0xf]
    %v838 = vld [vmem:[%s3 + $0x8] sm:$0xf]
    %v839 = vld [vmem:[%s3 + $0xc] sm:$0xf]
    %v840 = vld [vmem:[%s3 + $0x10] sm:$0xf]
    %v841 = vld [vmem:[%s3 + $0x14] sm:$0xf]
    %v848 = vunpack.c.l.b16 %v836
    %v849 = vunpack.c.l.b16 %v837
    %v850 = vunpack.c.l.b16 %v838
    %v851 = vunpack.c.l.b16 %v839
    %v852 = vunpack.c.l.b16 %v840
    %v853 = vunpack.c.l.b16 %v841
    %v854 = vpack.c.b16 %v849, %v848
    %v855 = vpack.c.b16 %v851, %v850
    %v856 = vpack.c.b16 %v853, %v852
    %860 = vmatprep.subr.bf16.mxu0 %v821
    %861 = vmatpush1.bf16.msra.mxu0 %v820
    %862 = vmatprep.subr.bf16.mxu0 %v823
    %863 = vmatpush1.bf16.msra.mxu0 %v822
    %864 = vmatprep.subr.bf16.mxu0 %v825
    %865 = vmatpush1.bf16.msra.mxu0 %v824
    %866 = vmatprep.subr.bf16.mxu0 %v827
    %867 = vmatpush1.bf16.msra.mxu0 %v826
    %868 = vmatprep.subr.bf16.mxu0 %v829
    %869 = vmatpush1.bf16.msra.mxu0 %v828
    %870 = vmatprep.subr.bf16.mxu0 %v831
    %871 = vmatpush1.bf16.msra.mxu0 %v830
    %872 = vmatprep.subr.bf16.mxu0 %v833
    %873 = vmatpush1.bf16.msra.mxu0 %v832
    %874 = vmatprep.subr.bf16.mxu0 %v835
    %875 = vmatpush1.bf16.msra.mxu0 %v834
    %876 = vmatprep.subr.bf16.mxu0 0
    %877 = vmatpush1.bf16.msra.mxu0 0
    %878 = vmatprep.subr.bf16.mxu0 0
    %879 = vmatpush1.bf16.msra.mxu0 0
    %880 = vmatprep.subr.bf16.mxu0 0
    %881 = vmatpush1.bf16.msra.mxu0 0
    %882 = vmatprep.subr.bf16.mxu0 0
    %883 = vmatpush1.bf16.msra.mxu0 0
    %884 = vmatprep.subr.bf16.mxu0 0
    %885 = vmatpush1.bf16.msra.mxu0 0
    %886 = vmatprep.subr.bf16.mxu0 0
    %887 = vmatpush1.bf16.msra.mxu0 0
    %888 = vmatprep.subr.bf16.mxu0 0
    %889 = vmatpush1.bf16.msra.mxu0 0
    %890 = vmatprep.subr.bf16.mxu0 0
    %891 = vmatpush1.bf16.msra.mxu0 0
    %892 = vmatprep.mubr.bf16.mxu0 0
    %893 = vmatmul.mubr.bf16.gmra.mrb[0].mxu0 %v854
    %v894 = vpop.f32.mrb[0].mxu0
    %v895 = vadd.f32 0.0, %v894
    %v896 = vpop.f32.mrb[0].mxu0
    %v897 = vadd.f32 0.0, %v896
    %v898 = vpop.f32.mrb[0].mxu0
    %v899 = vadd.f32 0.0, %v898
    %v900 = vpop.f32.mrb[0].mxu0
    %v901 = vadd.f32 0.0, %v900
    %902 = vmatprep.mubr.bf16.mxu0 0
    %903 = vmatmul.mubr.bf16.gmra.mrb[0].mxu0 %v855
    %v904 = vpop.f32.mrb[0].mxu0
    %v905 = vadd.f32 0.0, %v904
    %v906 = vpop.f32.mrb[0].mxu0
    %v907 = vadd.f32 0.0, %v906
    %v908 = vpop.f32.mrb[0].mxu0
    %v909 = vadd.f32 0.0, %v908
    %v910 = vpop.f32.mrb[0].mxu0
    %v911 = vadd.f32 0.0, %v910
    %912 = vmatprep.mubr.bf16.mxu0 0
    %913 = vmatmul.mubr.bf16.gmra.mrb[0].mxu0 %v856
    %v914 = vpop.f32.mrb[0].mxu0
    %v915 = vadd.f32 0.0, %v914
    %v916 = vpop.f32.mrb[0].mxu0
    %v917 = vadd.f32 0.0, %v916
    %v918 = vpop.f32.mrb[0].mxu0
    %v919 = vadd.f32 0.0, %v918
    %v920 = vpop.f32.mrb[0].mxu0
    %v921 = vadd.f32 0.0, %v920
    %922 = vdwg.mxu0
    %v927 = vunpack.c.l.b16 %v270
    %v928 = vunpack.c.l.b16 %v271
    %v929 = vunpack.c.l.b16 %v272
    %v930 = vunpack.c.l.b16 %v273
    %v931 = vpack.c.b16 %v928, %v927
    %v932 = vpack.c.b16 %v930, %v929
    %v951 = vunpack.c.l.b16 %v309
    %v952 = vunpack.c.h.b16 %v309
    %v953 = vunpack.c.l.b16 %v310
    %v954 = vunpack.c.h.b16 %v310
    %v955 = vunpack.c.l.b16 %v311
    %v956 = vunpack.c.h.b16 %v311
    %v957 = vunpack.c.l.b16 %v312
    %v958 = vunpack.c.h.b16 %v312
    %v959 = vunpack.c.l.b16 %v313
    %v960 = vunpack.c.h.b16 %v313
    %v961 = vunpack.c.l.b16 %v314
    %v962 = vunpack.c.h.b16 %v314
    %v963 = vunpack.c.l.b16 %v315
    %v964 = vunpack.c.h.b16 %v315
    %v965 = vunpack.c.l.b16 %v316
    %v966 = vunpack.c.h.b16 %v316
    %v967 = vunpack.c.l.b16 %v317
    %v968 = vunpack.c.h.b16 %v317
    %v969 = vunpack.c.l.b16 %v318
    %v970 = vunpack.c.h.b16 %v318
    %v971 = vunpack.c.l.b16 %v319
    %v972 = vunpack.c.h.b16 %v319
    %v973 = vunpack.c.l.b16 %v320
    %v974 = vunpack.c.h.b16 %v320
    %v975 = vunpack.c.l.b16 %v321
    %v976 = vunpack.c.h.b16 %v321
    %v977 = vunpack.c.l.b16 %v322
    %v978 = vunpack.c.h.b16 %v322
    %v979 = vunpack.c.l.b16 %v323
    %v980 = vunpack.c.h.b16 %v323
    %v981 = vunpack.c.l.b16 %v324
    %v982 = vunpack.c.h.b16 %v324
    %v983 = vpack.c.b16 %v953, %v951
    %v984 = vpack.c.b16 %v954, %v952
    %v985 = vpack.c.b16 %v957, %v955
    %v986 = vpack.c.b16 %v958, %v956
    %v987 = vpack.c.b16 %v961, %v959
    %v988 = vpack.c.b16 %v962, %v960
    %v989 = vpack.c.b16 %v965, %v963
    %v990 = vpack.c.b16 %v966, %v964
    %v991 = vpack.c.b16 %v969, %v967
    %v992 = vpack.c.b16 %v970, %v968
    %v993 = vpack.c.b16 %v973, %v971
    %v994 = vpack.c.b16 %v974, %v972
    %v995 = vpack.c.b16 %v977, %v975
    %v996 = vpack.c.b16 %v978, %v976
    %v997 = vpack.c.b16 %v981, %v979
    %v998 = vpack.c.b16 %v982, %v980
    %1015 = vmatprep.subr.bf16.mxu0 %v984
    %1016 = vmatpush1.bf16.msra.mxu0 %v983
    %1017 = vmatprep.subr.bf16.mxu0 %v986
    %1018 = vmatpush1.bf16.msra.mxu0 %v985
    %1019 = vmatprep.subr.bf16.mxu0 %v988
    %1020 = vmatpush1.bf16.msra.mxu0 %v987
    %1021 = vmatprep.subr.bf16.mxu0 %v990
    %1022 = vmatpush1.bf16.msra.mxu0 %v989
    %1023 = vmatprep.subr.bf16.mxu0 %v992
    %1024 = vmatpush1.bf16.msra.mxu0 %v991
    %1025 = vmatprep.subr.bf16.mxu0 %v994
    %1026 = vmatpush1.bf16.msra.mxu0 %v993
    %1027 = vmatprep.subr.bf16.mxu0 %v996
    %1028 = vmatpush1.bf16.msra.mxu0 %v995
    %1029 = vmatprep.subr.bf16.mxu0 %v998
    %1030 = vmatpush1.bf16.msra.mxu0 %v997
    %1031 = vmatprep.subr.bf16.mxu0 0
    %1032 = vmatpush1.bf16.msra.mxu0 0
    %1033 = vmatprep.subr.bf16.mxu0 0
    %1034 = vmatpush1.bf16.msra.mxu0 0
    %1035 = vmatprep.subr.bf16.mxu0 0
    %1036 = vmatpush1.bf16.msra.mxu0 0
    %1037 = vmatprep.subr.bf16.mxu0 0
    %1038 = vmatpush1.bf16.msra.mxu0 0
    %1039 = vmatprep.subr.bf16.mxu0 0
    %1040 = vmatpush1.bf16.msra.mxu0 0
    %1041 = vmatprep.subr.bf16.mxu0 0
    %1042 = vmatpush1.bf16.msra.mxu0 0
    %1043 = vmatprep.subr.bf16.mxu0 0
    %1044 = vmatpush1.bf16.msra.mxu0 0
    %1045 = vmatprep.subr.bf16.mxu0 0
    %1046 = vmatpush1.bf16.msra.mxu0 0
    %1047 = vmatprep.mubr.bf16.mxu0 0
    %1048 = vmatmul.mubr.bf16.gmra.mrb[0].mxu0 %v931
    %v1049 = vpop.f32.mrb[0].mxu0
    %v1050 = vadd.f32 0.0, %v1049
    %v1051 = vpop.f32.mrb[0].mxu0
    %v1052 = vadd.f32 0.0, %v1051
    %v1053 = vpop.f32.mrb[0].mxu0
    %v1054 = vadd.f32 0.0, %v1053
    %v1055 = vpop.f32.mrb[0].mxu0
    %v1056 = vadd.f32 0.0, %v1055
    %1057 = vmatprep.mubr.bf16.mxu0 0
    %1058 = vmatmul.mubr.bf16.gmra.mrb[0].mxu0 %v932
    %v1059 = vpop.f32.mrb[0].mxu0
    %v1060 = vadd.f32 0.0, %v1059
    %v1061 = vpop.f32.mrb[0].mxu0
    %v1062 = vadd.f32 0.0, %v1061
    %v1063 = vpop.f32.mrb[0].mxu0
    %v1064 = vadd.f32 0.0, %v1063
    %v1065 = vpop.f32.mrb[0].mxu0
    %v1066 = vadd.f32 0.0, %v1065
    %1067 = vdwg.mxu0
    %v1068 = vadd.f32 %v895, %v1050
    %v1069 = vadd.f32 %v897, %v1052
    %v1070 = vadd.f32 %v899, %v1054
    %v1071 = vadd.f32 %v901, %v1056
    %v1072 = vadd.f32 %v905, %v1060
    %v1073 = vadd.f32 %v907, %v1062
    %v1074 = vadd.f32 %v909, %v1064
    %v1075 = vadd.f32 %v911, %v1066
    %v1077 = vlaneseq
    %v1078 = vshrl.u32 %v1077, 7
    %v1079 = vsub.s32 0, %v1078
    %v1080 = vrot.slane %v325, %v1079
    %v1081 = vlaneseq
    %v1082 = vshrl.u32 %v1081, 7
    %v1083 = vsub.s32 1, %v1082
    %v1084 = vrot.slane %v325, %v1083
    %v1087 = vadd.f32 %v1068, %v1080
    %v1088 = vadd.f32 %v1069, %v1084
    %v1089 = vadd.f32 %v1070, %v1080
    %v1090 = vadd.f32 %v1071, %v1084
    %v1091 = vadd.f32 %v1072, %v1080
    %v1092 = vadd.f32 %v1073, %v1084
    %v1093 = vadd.f32 %v1074, %v1080
    %v1094 = vadd.f32 %v1075, %v1084
    %v1095 = vmax.f32 %v1087, 0.0
    %v1096 = vmax.f32 %v1088, 0.0
    %v1097 = vmax.f32 %v1089, 0.0
    %v1098 = vmax.f32 %v1090, 0.0
    %v1099 = vmax.f32 %v1091, 0.0
    %v1100 = vmax.f32 %v1092, 0.0
    %v1101 = vmax.f32 %v1093, 0.0
    %v1102 = vmax.f32 %v1094, 0.0
    %v1105 = vunpack.c.l.b16 %v274
    %v1106 = vunpack.c.l.b16 %v275
    %v1107 = vpack.c.b16 %v1106, %v1105
    %v1125 = vunpack.c.l.b16 %v326
    %v1126 = vunpack.c.h.b16 %v326
    %v1127 = vunpack.c.l.b16 %v327
    %v1128 = vunpack.c.h.b16 %v327
    %v1129 = vunpack.c.l.b16 %v328
    %v1130 = vunpack.c.h.b16 %v328
    %v1131 = vunpack.c.l.b16 %v329
    %v1132 = vunpack.c.h.b16 %v329
    %v1133 = vunpack.c.l.b16 %v330
    %v1134 = vunpack.c.h.b16 %v330
    %v1135 = vunpack.c.l.b16 %v331
    %v1136 = vunpack.c.h.b16 %v331
    %v1137 = vunpack.c.l.b16 %v332
    %v1138 = vunpack.c.h.b16 %v332
    %v1139 = vunpack.c.l.b16 %v333
    %v1140 = vunpack.c.h.b16 %v333
    %v1141 = vunpack.c.l.b16 %v334
    %v1142 = vunpack.c.h.b16 %v334
    %v1143 = vunpack.c.l.b16 %v335
    %v1144 = vunpack.c.h.b16 %v335
    %v1145 = vunpack.c.l.b16 %v336
    %v1146 = vunpack.c.h.b16 %v336
    %v1147 = vunpack.c.l.b16 %v337
    %v1148 = vunpack.c.h.b16 %v337
    %v1149 = vunpack.c.l.b16 %v338
    %v1150 = vunpack.c.h.b16 %v338
    %v1151 = vunpack.c.l.b16 %v339
    %v1152 = vunpack.c.h.b16 %v339
    %v1153 = vunpack.c.l.b16 %v340
    %v1154 = vunpack.c.h.b16 %v340
    %v1155 = vunpack.c.l.b16 %v341
    %v1156 = vunpack.c.h.b16 %v341
    %v1157 = vpack.c.b16 %v1127, %v1125
    %v1158 = vpack.c.b16 %v1128, %v1126
    %v1159 = vpack.c.b16 %v1131, %v1129
    %v1160 = vpack.c.b16 %v1132, %v1130
    %v1161 = vpack.c.b16 %v1135, %v1133
    %v1162 = vpack.c.b16 %v1136, %v1134
    %v1163 = vpack.c.b16 %v1139, %v1137
    %v1164 = vpack.c.b16 %v1140, %v1138
    %v1165 = vpack.c.b16 %v1143, %v1141
    %v1166 = vpack.c.b16 %v1144, %v1142
    %v1167 = vpack.c.b16 %v1147, %v1145
    %v1168 = vpack.c.b16 %v1148, %v1146
    %v1169 = vpack.c.b16 %v1151, %v1149
    %v1170 = vpack.c.b16 %v1152, %v1150
    %v1171 = vpack.c.b16 %v1155, %v1153
    %v1172 = vpack.c.b16 %v1156, %v1154
    %1189 = vmatprep.subr.bf16.mxu0 %v1158
    %1190 = vmatpush1.bf16.msra.mxu0 %v1157
    %1191 = vmatprep.subr.bf16.mxu0 %v1160
    %1192 = vmatpush1.bf16.msra.mxu0 %v1159
    %1193 = vmatprep.subr.bf16.mxu0 %v1162
    %1194 = vmatpush1.bf16.msra.mxu0 %v1161
    %1195 = vmatprep.subr.bf16.mxu0 %v1164
    %1196 = vmatpush1.bf16.msra.mxu0 %v1163
    %1197 = vmatprep.subr.bf16.mxu0 %v1166
    %1198 = vmatpush1.bf16.msra.mxu0 %v1165
    %1199 = vmatprep.subr.bf16.mxu0 %v1168
    %1200 = vmatpush1.bf16.msra.mxu0 %v1167
    %1201 = vmatprep.subr.bf16.mxu0 %v1170
    %1202 = vmatpush1.bf16.msra.mxu0 %v1169
    %1203 = vmatprep.subr.bf16.mxu0 %v1172
    %1204 = vmatpush1.bf16.msra.mxu0 %v1171
    %1205 = vmatprep.subr.bf16.mxu0 0
    %1206 = vmatpush1.bf16.msra.mxu0 0
    %1207 = vmatprep.subr.bf16.mxu0 0
    %1208 = vmatpush1.bf16.msra.mxu0 0
    %1209 = vmatprep.subr.bf16.mxu0 0
    %1210 = vmatpush1.bf16.msra.mxu0 0
    %1211 = vmatprep.subr.bf16.mxu0 0
    %1212 = vmatpush1.bf16.msra.mxu0 0
    %1213 = vmatprep.subr.bf16.mxu0 0
    %1214 = vmatpush1.bf16.msra.mxu0 0
    %1215 = vmatprep.subr.bf16.mxu0 0
    %1216 = vmatpush1.bf16.msra.mxu0 0
    %1217 = vmatprep.subr.bf16.mxu0 0
    %1218 = vmatpush1.bf16.msra.mxu0 0
    %1219 = vmatprep.subr.bf16.mxu0 0
    %1220 = vmatpush1.bf16.msra.mxu0 0
    %1221 = vmatprep.mubr.bf16.mxu0 0
    %1222 = vmatmul.mubr.bf16.gmra.mrb[0].mxu0 %v1107
    %v1223 = vpop.f32.mrb[0].mxu0
    %v1224 = vadd.f32 0.0, %v1223
    %v1225 = vpop.f32.mrb[0].mxu0
    %v1226 = vadd.f32 0.0, %v1225
    %v1227 = vpop.f32.mrb[0].mxu0
    %v1228 = vadd.f32 0.0, %v1227
    %v1229 = vpop.f32.mrb[0].mxu0
    %v1230 = vadd.f32 0.0, %v1229
    %1231 = vdwg.mxu0
    %v1232 = vadd.f32 %v915, %v1224
    %v1233 = vadd.f32 %v917, %v1226
    %v1234 = vadd.f32 %v919, %v1228
    %v1235 = vadd.f32 %v921, %v1230
    %v1237 = vlaneseq
    %v1238 = vshrl.u32 %v1237, 7
    %v1239 = vsub.s32 0, %v1238
    %v1240 = vrot.slane %v342, %v1239
    %v1241 = vlaneseq
    %v1242 = vshrl.u32 %v1241, 7
    %v1243 = vsub.s32 1, %v1242
    %v1244 = vrot.slane %v342, %v1243
    %v1247 = vadd.f32 %v1232, %v1240
    %v1248 = vadd.f32 %v1233, %v1244
    %v1249 = vadd.f32 %v1234, %v1240
    %v1250 = vadd.f32 %v1235, %v1244
    %v1251 = vmax.f32 %v1247, 0.0
    %v1252 = vmax.f32 %v1248, 0.0
    %v1253 = vmax.f32 %v1249, 0.0
    %v1254 = vmax.f32 %v1250, 0.0
    %v1255 = vpack.c.bf16 %v1097, %v1095
    %v1256 = vpack.c.bf16 %v1098, %v1096
    %v1257 = vpack.c.bf16 %v1101, %v1099
    %v1258 = vpack.c.bf16 %v1102, %v1100
    %v1259 = vpack.c.bf16 %v1253, %v1251
    %v1260 = vpack.c.bf16 %v1254, %v1252
    %v1261 = vld [vmem:[#allocation14] sm:$0xf]
    %v1262 = vld [vmem:[#allocation14 + $0x4] sm:$0xf]
    %v1263 = vld [vmem:[#allocation14 + $0x8] sm:$0xf]
    %v1264 = vld [vmem:[#allocation14 + $0xc] sm:$0xf]
    %v1265 = vld [vmem:[#allocation14 + $0x10] sm:$0xf]
    %v1266 = vld [vmem:[#allocation14 + $0x14] sm:$0xf]
    %v1267 = vld [vmem:[#allocation14 + $0x18] sm:$0xf]
    %v1268 = vld [vmem:[#allocation14 + $0x1c] sm:$0xf]
    %v1269 = vld [vmem:[#allocation14 + $0x20] sm:$0xf]
    %v1270 = vld [vmem:[#allocation14 + $0x24] sm:$0xf]
    %v1271 = vld [vmem:[#allocation14 + $0x28] sm:$0xf]
    %v1272 = vld [vmem:[#allocation14 + $0x2c] sm:$0xf]
    %v1273 = vld [vmem:[#allocation14 + $0x30] sm:$0xf]
    %v1274 = vld [vmem:[#allocation14 + $0x34] sm:$0xf]
    %v1275 = vld [vmem:[#allocation14 + $0x38] sm:$0xf]
    %v1276 = vld [vmem:[#allocation14 + $0x3c] sm:$0xf]
    %v1277 = vld [vmem:[#allocation14 + $0x40] sm:$0xf]
    %v1278 = vld [vmem:[#allocation14 + $0x44] sm:$0xf]
    %v1279 = vld [vmem:[#allocation14 + $0x48] sm:$0xf]
    %v1280 = vld [vmem:[#allocation14 + $0x4c] sm:$0xf]
    %v1281 = vld [vmem:[#allocation14 + $0x50] sm:$0xf]
    %v1282 = vld [vmem:[#allocation14 + $0x54] sm:$0xf]
    %v1283 = vld [vmem:[#allocation14 + $0x58] sm:$0xf]
    %v1284 = vld [vmem:[#allocation14 + $0x5c] sm:$0xf]
    %v1285 = vld [vmem:[#allocation14 + $0x60] sm:$0xf]
    %v1286 = vld [vmem:[#allocation14 + $0x64] sm:$0xf]
    %v1287 = vld [vmem:[#allocation14 + $0x68] sm:$0xf]
    %v1288 = vld [vmem:[#allocation14 + $0x6c] sm:$0xf]
    %v1289 = vld [vmem:[#allocation14 + $0x70] sm:$0xf]
    %v1290 = vld [vmem:[#allocation14 + $0x74] sm:$0xf]
    %v1291 = vld [vmem:[#allocation14 + $0x78] sm:$0xf]
    %v1292 = vld [vmem:[#allocation14 + $0x7c] sm:$0xf]
    %v1293 = vld [vmem:[#allocation15] sm:$0x1]
    %v1294 = vld [vmem:[#allocation17] sm:$0xf]
    %v1295 = vld [vmem:[#allocation17 + $0x4] sm:$0xf]
    %v1296 = vld [vmem:[#allocation17 + $0x8] sm:$0xf]
    %v1297 = vld [vmem:[#allocation17 + $0xc] sm:$0xf]
    %v1298 = vld [vmem:[#allocation17 + $0x10] sm:$0xf]
    %v1299 = vld [vmem:[#allocation17 + $0x14] sm:$0xf]
    %v1300 = vld [vmem:[#allocation17 + $0x18] sm:$0xf]
    %v1301 = vld [vmem:[#allocation17 + $0x1c] sm:$0xf]
    %v1302 = vld [vmem:[#allocation17 + $0x20] sm:$0xf]
    %v1303 = vld [vmem:[#allocation17 + $0x24] sm:$0xf]
    %v1304 = vld [vmem:[#allocation17 + $0x28] sm:$0xf]
    %v1305 = vld [vmem:[#allocation17 + $0x2c] sm:$0xf]
    %v1306 = vld [vmem:[#allocation17 + $0x30] sm:$0xf]
    %v1307 = vld [vmem:[#allocation17 + $0x34] sm:$0xf]
    %v1308 = vld [vmem:[#allocation17 + $0x38] sm:$0xf]
    %v1309 = vld [vmem:[#allocation17 + $0x3c] sm:$0xf]
    %v1310 = vld [vmem:[#allocation17 + $0x40] sm:$0xf]
    %v1311 = vld [vmem:[#allocation17 + $0x44] sm:$0xf]
    %v1312 = vld [vmem:[#allocation17 + $0x48] sm:$0xf]
    %v1313 = vld [vmem:[#allocation17 + $0x4c] sm:$0xf]
    %v1314 = vld [vmem:[#allocation17 + $0x50] sm:$0xf]
    %v1315 = vld [vmem:[#allocation17 + $0x54] sm:$0xf]
    %v1316 = vld [vmem:[#allocation17 + $0x58] sm:$0xf]
    %v1317 = vld [vmem:[#allocation17 + $0x5c] sm:$0xf]
    %v1318 = vld [vmem:[#allocation17 + $0x60] sm:$0xf]
    %v1319 = vld [vmem:[#allocation17 + $0x64] sm:$0xf]
    %v1320 = vld [vmem:[#allocation17 + $0x68] sm:$0xf]
    %v1321 = vld [vmem:[#allocation17 + $0x6c] sm:$0xf]
    %v1322 = vld [vmem:[#allocation17 + $0x70] sm:$0xf]
    %v1323 = vld [vmem:[#allocation17 + $0x74] sm:$0xf]
    %v1324 = vld [vmem:[#allocation17 + $0x78] sm:$0xf]
    %v1325 = vld [vmem:[#allocation17 + $0x7c] sm:$0xf]
    %v1326 = vld [vmem:[#allocation18] sm:$0x1]
    %v1327 = vld [vmem:[#allocation20] sm:$0xf]
    %v1328 = vld [vmem:[#allocation20 + $0x4] sm:$0xf]
    %v1329 = vld [vmem:[#allocation20 + $0x8] sm:$0xf]
    %v1330 = vld [vmem:[#allocation20 + $0xc] sm:$0xf]
    %v1331 = vld [vmem:[#allocation20 + $0x10] sm:$0xf]
    %v1332 = vld [vmem:[#allocation20 + $0x14] sm:$0xf]
    %v1333 = vld [vmem:[#allocation20 + $0x18] sm:$0xf]
    %v1334 = vld [vmem:[#allocation20 + $0x1c] sm:$0xf]
    %v1335 = vld [vmem:[#allocation20 + $0x20] sm:$0xf]
    %v1336 = vld [vmem:[#allocation20 + $0x24] sm:$0xf]
    %v1337 = vld [vmem:[#allocation20 + $0x28] sm:$0xf]
    %v1338 = vld [vmem:[#allocation20 + $0x2c] sm:$0xf]
    %v1339 = vld [vmem:[#allocation20 + $0x30] sm:$0xf]
    %v1340 = vld [vmem:[#allocation20 + $0x34] sm:$0xf]
    %v1341 = vld [vmem:[#allocation20 + $0x38] sm:$0xf]
    %v1342 = vld [vmem:[#allocation20 + $0x3c] sm:$0xf]
    %v1343 = vld [vmem:[#allocation20 + $0x40] sm:$0xf]
    %v1344 = vld [vmem:[#allocation20 + $0x44] sm:$0xf]
    %v1345 = vld [vmem:[#allocation20 + $0x48] sm:$0xf]
    %v1346 = vld [vmem:[#allocation20 + $0x4c] sm:$0xf]
    %v1347 = vld [vmem:[#allocation20 + $0x50] sm:$0xf]
    %v1348 = vld [vmem:[#allocation20 + $0x54] sm:$0xf]
    %v1349 = vld [vmem:[#allocation20 + $0x58] sm:$0xf]
    %v1350 = vld [vmem:[#allocation20 + $0x5c] sm:$0xf]
    %v1351 = vld [vmem:[#allocation20 + $0x60] sm:$0xf]
    %v1352 = vld [vmem:[#allocation20 + $0x64] sm:$0xf]
    %v1353 = vld [vmem:[#allocation20 + $0x68] sm:$0xf]
    %v1354 = vld [vmem:[#allocation20 + $0x6c] sm:$0xf]
    %v1355 = vld [vmem:[#allocation20 + $0x70] sm:$0xf]
    %v1356 = vld [vmem:[#allocation20 + $0x74] sm:$0xf]
    %v1357 = vld [vmem:[#allocation20 + $0x78] sm:$0xf]
    %v1358 = vld [vmem:[#allocation20 + $0x7c] sm:$0xf]
    %v1359 = vld [vmem:[#allocation21] sm:$0x1]
    %v1392 = vunpack.c.l.b16 %v1261
    %v1393 = vunpack.c.l.b16 %v1262
    %v1394 = vunpack.c.l.b16 %v1263
    %v1395 = vunpack.c.l.b16 %v1264
    %v1396 = vunpack.c.l.b16 %v1265
    %v1397 = vunpack.c.l.b16 %v1266
    %v1398 = vunpack.c.l.b16 %v1267
    %v1399 = vunpack.c.l.b16 %v1268
    %v1400 = vunpack.c.l.b16 %v1269
    %v1401 = vunpack.c.l.b16 %v1270
    %v1402 = vunpack.c.l.b16 %v1271
    %v1403 = vunpack.c.l.b16 %v1272
    %v1404 = vunpack.c.l.b16 %v1273
    %v1405 = vunpack.c.l.b16 %v1274
    %v1406 = vunpack.c.l.b16 %v1275
    %v1407 = vunpack.c.l.b16 %v1276
    %v1408 = vunpack.c.l.b16 %v1277
    %v1409 = vunpack.c.l.b16 %v1278
    %v1410 = vunpack.c.l.b16 %v1279
    %v1411 = vunpack.c.l.b16 %v1280
    %v1412 = vunpack.c.l.b16 %v1281
    %v1413 = vunpack.c.l.b16 %v1282
    %v1414 = vunpack.c.l.b16 %v1283
    %v1415 = vunpack.c.l.b16 %v1284
    %v1416 = vunpack.c.l.b16 %v1285
    %v1417 = vunpack.c.l.b16 %v1286
    %v1418 = vunpack.c.l.b16 %v1287
    %v1419 = vunpack.c.l.b16 %v1288
    %v1420 = vunpack.c.l.b16 %v1289
    %v1421 = vunpack.c.l.b16 %v1290
    %v1422 = vunpack.c.l.b16 %v1291
    %v1423 = vunpack.c.l.b16 %v1292
    %v1424 = vpack.c.b16 %v1393, %v1392
    %v1425 = vpack.c.b16 %v1395, %v1394
    %v1426 = vpack.c.b16 %v1397, %v1396
    %v1427 = vpack.c.b16 %v1399, %v1398
    %v1428 = vpack.c.b16 %v1401, %v1400
    %v1429 = vpack.c.b16 %v1403, %v1402
    %v1430 = vpack.c.b16 %v1405, %v1404
    %v1431 = vpack.c.b16 %v1407, %v1406
    %v1432 = vpack.c.b16 %v1409, %v1408
    %v1433 = vpack.c.b16 %v1411, %v1410
    %v1434 = vpack.c.b16 %v1413, %v1412
    %v1435 = vpack.c.b16 %v1415, %v1414
    %v1436 = vpack.c.b16 %v1417, %v1416
    %v1437 = vpack.c.b16 %v1419, %v1418
    %v1438 = vpack.c.b16 %v1421, %v1420
    %v1439 = vpack.c.b16 %v1423, %v1422
    %1456 = vmatprep.subr.bf16.mxu0 0
    %1457 = vmatpush1.bf16.msra.mxu0 %v1424
    %1458 = vmatprep.subr.bf16.mxu0 0
    %1459 = vmatpush1.bf16.msra.mxu0 %v1425
    %1460 = vmatprep.subr.bf16.mxu0 0
    %1461 = vmatpush1.bf16.msra.mxu0 %v1426
    %1462 = vmatprep.subr.bf16.mxu0 0
    %1463 = vmatpush1.bf16.msra.mxu0 %v1427
    %1464 = vmatprep.subr.bf16.mxu0 0
    %1465 = vmatpush1.bf16.msra.mxu0 %v1428
    %1466 = vmatprep.subr.bf16.mxu0 0
    %1467 = vmatpush1.bf16.msra.mxu0 %v1429
    %1468 = vmatprep.subr.bf16.mxu0 0
    %1469 = vmatpush1.bf16.msra.mxu0 %v1430
    %1470 = vmatprep.subr.bf16.mxu0 0
    %1471 = vmatpush1.bf16.msra.mxu0 %v1431
    %1472 = vmatprep.subr.bf16.mxu0 0
    %1473 = vmatpush1.bf16.msra.mxu0 %v1432
    %1474 = vmatprep.subr.bf16.mxu0 0
    %1475 = vmatpush1.bf16.msra.mxu0 %v1433
    %1476 = vmatprep.subr.bf16.mxu0 0
    %1477 = vmatpush1.bf16.msra.mxu0 %v1434
    %1478 = vmatprep.subr.bf16.mxu0 0
    %1479 = vmatpush1.bf16.msra.mxu0 %v1435
    %1480 = vmatprep.subr.bf16.mxu0 0
    %1481 = vmatpush1.bf16.msra.mxu0 %v1436
    %1482 = vmatprep.subr.bf16.mxu0 0
    %1483 = vmatpush1.bf16.msra.mxu0 %v1437
    %1484 = vmatprep.subr.bf16.mxu0 0
    %1485 = vmatpush1.bf16.msra.mxu0 %v1438
    %1486 = vmatprep.subr.bf16.mxu0 0
    %1487 = vmatpush1.bf16.msra.mxu0 %v1439
    %1488 = vmatprep.mubr.bf16.mxu0 %v821
    %1489 = vmatmul.mubr.bf16.gmra.mrb[0].mxu0 %v820
    %v1490 = vpop.f32.mrb[0].mxu0
    %v1491 = vadd.f32 0.0, %v1490
    %v1492 = vpop.f32.mrb[0].mxu0
    %v1493 = vpop.f32.mrb[0].mxu0
    %v1494 = vadd.f32 0.0, %v1493
    %v1495 = vpop.f32.mrb[0].mxu0
    %1496 = vmatprep.mubr.bf16.mxu0 %v823
    %1497 = vmatmul.mubr.bf16.gmra.mrb[0].mxu0 %v822
    %v1498 = vpop.f32.mrb[0].mxu0
    %v1499 = vadd.f32 0.0, %v1498
    %v1500 = vpop.f32.mrb[0].mxu0
    %v1501 = vpop.f32.mrb[0].mxu0
    %v1502 = vadd.f32 0.0, %v1501
    %v1503 = vpop.f32.mrb[0].mxu0
    %1504 = vmatprep.mubr.bf16.mxu0 %v825
    %1505 = vmatmul.mubr.bf16.gmra.mrb[0].mxu0 %v824
    %v1506 = vpop.f32.mrb[0].mxu0
    %v1507 = vadd.f32 0.0, %v1506
    %v1508 = vpop.f32.mrb[0].mxu0
    %v1509 = vpop.f32.mrb[0].mxu0
    %v1510 = vadd.f32 0.0, %v1509
    %v1511 = vpop.f32.mrb[0].mxu0
    %1512 = vmatprep.mubr.bf16.mxu0 %v827
    %1513 = vmatmul.mubr.bf16.gmra.mrb[0].mxu0 %v826
    %v1514 = vpop.f32.mrb[0].mxu0
    %v1515 = vadd.f32 0.0, %v1514
    %v1516 = vpop.f32.mrb[0].mxu0
    %v1517 = vpop.f32.mrb[0].mxu0
    %v1518 = vadd.f32 0.0, %v1517
    %v1519 = vpop.f32.mrb[0].mxu0
    %1520 = vmatprep.mubr.bf16.mxu0 %v829
    %1521 = vmatmul.mubr.bf16.gmra.mrb[0].mxu0 %v828
    %v1522 = vpop.f32.mrb[0].mxu0
    %v1523 = vadd.f32 0.0, %v1522
    %v1524 = vpop.f32.mrb[0].mxu0
    %v1525 = vpop.f32.mrb[0].mxu0
    %v1526 = vadd.f32 0.0, %v1525
    %v1527 = vpop.f32.mrb[0].mxu0
    %1528 = vmatprep.mubr.bf16.mxu0 %v831
    %1529 = vmatmul.mubr.bf16.gmra.mrb[0].mxu0 %v830
    %v1530 = vpop.f32.mrb[0].mxu0
    %v1531 = vadd.f32 0.0, %v1530
    %v1532 = vpop.f32.mrb[0].mxu0
    %v1533 = vpop.f32.mrb[0].mxu0
    %v1534 = vadd.f32 0.0, %v1533
    %v1535 = vpop.f32.mrb[0].mxu0
    %1536 = vmatprep.mubr.bf16.mxu0 %v833
    %1537 = vmatmul.mubr.bf16.gmra.mrb[0].mxu0 %v832
    %v1538 = vpop.f32.mrb[0].mxu0
    %v1539 = vadd.f32 0.0, %v1538
    %v1540 = vpop.f32.mrb[0].mxu0
    %v1541 = vpop.f32.mrb[0].mxu0
    %v1542 = vadd.f32 0.0, %v1541
    %v1543 = vpop.f32.mrb[0].mxu0
    %1544 = vmatprep.mubr.bf16.mxu0 %v835
    %1545 = vmatmul.mubr.bf16.gmra.mrb[0].mxu0 %v834
    %v1546 = vpop.f32.mrb[0].mxu0
    %v1547 = vadd.f32 0.0, %v1546
    %v1548 = vpop.f32.mrb[0].mxu0
    %v1549 = vpop.f32.mrb[0].mxu0
    %v1550 = vadd.f32 0.0, %v1549
    %v1551 = vpop.f32.mrb[0].mxu0
    %1552 = vdwg.mxu0
    %v1553 = vpack.c.bf16 %v1494, %v1491
    %v1554 = vpack.c.bf16 %v1502, %v1499
    %v1555 = vpack.c.bf16 %v1510, %v1507
    %v1556 = vpack.c.bf16 %v1518, %v1515
    %v1557 = vpack.c.bf16 %v1526, %v1523
    %v1558 = vpack.c.bf16 %v1534, %v1531
    %v1559 = vpack.c.bf16 %v1542, %v1539
    %v1560 = vpack.c.bf16 %v1550, %v1547
    %v1562 = vlaneseq
    %v1563 = vshrl.u32 %v1562, 7
    %v1564 = vsub.s32 0, %v1563
    %v1565 = vrot.slane %v1293, %v1564
    %1567 = vmatprep.subr.bf16.mxu0 0
    %1568 = vmatpush1.bf16.msra.mxu0 %v1553
    %1569 = vmatprep.subr.bf16.mxu0 0
    %1570 = vmatpush1.bf16.msra.mxu0 %v1554
    %1571 = vmatprep.subr.bf16.mxu0 0
    %1572 = vmatpush1.bf16.msra.mxu0 %v1555
    %1573 = vmatprep.subr.bf16.mxu0 0
    %1574 = vmatpush1.bf16.msra.mxu0 %v1556
    %1575 = vmatprep.subr.bf16.mxu0 0
    %1576 = vmatpush1.bf16.msra.mxu0 %v1557
    %1577 = vmatprep.subr.bf16.mxu0 0
    %1578 = vmatpush1.bf16.msra.mxu0 %v1558
    %1579 = vmatprep.subr.bf16.mxu0 0
    %1580 = vmatpush1.bf16.msra.mxu0 %v1559
    %1581 = vmatprep.subr.bf16.mxu0 0
    %1582 = vmatpush1.bf16.msra.mxu0 %v1560
    %1583 = vmatprep.subr.bf16.mxu0 0
    %1584 = vmatpush1.bf16.msra.mxu0 0
    %1585 = vmatprep.subr.bf16.mxu0 0
    %1586 = vmatpush1.bf16.msra.mxu0 0
    %1587 = vmatprep.subr.bf16.mxu0 0
    %1588 = vmatpush1.bf16.msra.mxu0 0
    %1589 = vmatprep.subr.bf16.mxu0 0
    %1590 = vmatpush1.bf16.msra.mxu0 0
    %1591 = vmatprep.subr.bf16.mxu0 0
    %1592 = vmatpush1.bf16.msra.mxu0 0
    %1593 = vmatprep.subr.bf16.mxu0 0
    %1594 = vmatpush1.bf16.msra.mxu0 0
    %1595 = vmatprep.subr.bf16.mxu0 0
    %1596 = vmatpush1.bf16.msra.mxu0 0
    %1597 = vmatprep.subr.bf16.mxu0 0
    %1598 = vmatpush1.bf16.msra.mxu0 0
    %1599 = vmatprep.mubr.bf16.mxu0 0
    %1600 = vmatmul.mubr.bf16.gmra.mrb[0].mxu0 %v659
    %v1601 = vpop.f32.mrb[0].mxu0
    %v1602 = vadd.f32 %v1565, %v1601
    %v1603 = vpop.f32.mrb[0].mxu0
    %v1604 = vpop.f32.mrb[0].mxu0
    %v1605 = vadd.f32 %v1565, %v1604
    %v1606 = vpop.f32.mrb[0].mxu0
    %1607 = vmatprep.mubr.bf16.mxu0 0
    %1608 = vmatmul.mubr.bf16.gmra.mrb[0].mxu0 %v660
    %v1609 = vpop.f32.mrb[0].mxu0
    %v1610 = vadd.f32 %v1565, %v1609
    %v1611 = vpop.f32.mrb[0].mxu0
    %v1612 = vpop.f32.mrb[0].mxu0
    %v1613 = vadd.f32 %v1565, %v1612
    %v1614 = vpop.f32.mrb[0].mxu0
    %1615 = vmatprep.mubr.bf16.mxu0 0
    %1616 = vmatmul.mubr.bf16.gmra.mrb[0].mxu0 %v661
    %v1617 = vpop.f32.mrb[0].mxu0
    %v1618 = vadd.f32 %v1565, %v1617
    %v1619 = vpop.f32.mrb[0].mxu0
    %v1620 = vpop.f32.mrb[0].mxu0
    %v1621 = vadd.f32 %v1565, %v1620
    %v1622 = vpop.f32.mrb[0].mxu0
    %1623 = vmatprep.mubr.bf16.mxu0 0
    %1624 = vmatmul.mubr.bf16.gmra.mrb[0].mxu0 %v662
    %v1625 = vpop.f32.mrb[0].mxu0
    %v1626 = vadd.f32 %v1565, %v1625
    %v1627 = vpop.f32.mrb[0].mxu0
    %v1628 = vpop.f32.mrb[0].mxu0
    %v1629 = vadd.f32 %v1565, %v1628
    %v1630 = vpop.f32.mrb[0].mxu0
    %1631 = vmatprep.mubr.bf16.mxu0 0
    %1632 = vmatmul.mubr.bf16.gmra.mrb[0].mxu0 %v663
    %v1633 = vpop.f32.mrb[0].mxu0
    %v1634 = vadd.f32 %v1565, %v1633
    %v1635 = vpop.f32.mrb[0].mxu0
    %v1636 = vpop.f32.mrb[0].mxu0
    %v1637 = vadd.f32 %v1565, %v1636
    %v1638 = vpop.f32.mrb[0].mxu0
    %1639 = vmatprep.mubr.bf16.mxu0 0
    %1640 = vmatmul.mubr.bf16.gmra.mrb[0].mxu0 %v664
    %v1641 = vpop.f32.mrb[0].mxu0
    %v1642 = vadd.f32 %v1565, %v1641
    %v1643 = vpop.f32.mrb[0].mxu0
    %v1644 = vpop.f32.mrb[0].mxu0
    %v1645 = vadd.f32 %v1565, %v1644
    %v1646 = vpop.f32.mrb[0].mxu0
    %1647 = vmatprep.mubr.bf16.mxu0 0
    %1648 = vmatmul.mubr.bf16.gmra.mrb[0].mxu0 %v665
    %v1649 = vpop.f32.mrb[0].mxu0
    %v1650 = vadd.f32 %v1565, %v1649
    %v1651 = vpop.f32.mrb[0].mxu0
    %v1652 = vpop.f32.mrb[0].mxu0
    %v1653 = vadd.f32 %v1565, %v1652
    %v1654 = vpop.f32.mrb[0].mxu0
    %1655 = vmatprep.mubr.bf16.mxu0 0
    %1656 = vmatmul.mubr.bf16.gmra.mrb[0].mxu0 %v666
    %v1657 = vpop.f32.mrb[0].mxu0
    %v1658 = vadd.f32 %v1565, %v1657
    %v1659 = vpop.f32.mrb[0].mxu0
    %v1660 = vpop.f32.mrb[0].mxu0
    %v1661 = vadd.f32 %v1565, %v1660
    %v1662 = vpop.f32.mrb[0].mxu0
    %1663 = vdwg.mxu0
    %v1664 = vmax.f32 %v1602, 0.0
    %v1665 = vmax.f32 %v1605, 0.0
    %v1666 = vmax.f32 %v1610, 0.0
    %v1667 = vmax.f32 %v1613, 0.0
    %v1668 = vmax.f32 %v1618, 0.0
    %v1669 = vmax.f32 %v1621, 0.0
    %v1670 = vmax.f32 %v1626, 0.0
    %v1671 = vmax.f32 %v1629, 0.0
    %v1672 = vmax.f32 %v1634, 0.0
    %v1673 = vmax.f32 %v1637, 0.0
    %v1674 = vmax.f32 %v1642, 0.0
    %v1675 = vmax.f32 %v1645, 0.0
    %v1676 = vmax.f32 %v1650, 0.0
    %v1677 = vmax.f32 %v1653, 0.0
    %v1678 = vmax.f32 %v1658, 0.0
    %v1679 = vmax.f32 %v1661, 0.0
    %v1680 = vpack.c.bf16 %v1665, %v1664
    %v1681 = vpack.c.bf16 %v1667, %v1666
    %v1682 = vpack.c.bf16 %v1669, %v1668
    %v1683 = vpack.c.bf16 %v1671, %v1670
    %v1684 = vpack.c.bf16 %v1673, %v1672
    %v1685 = vpack.c.bf16 %v1675, %v1674
    %v1686 = vpack.c.bf16 %v1677, %v1676
    %v1687 = vpack.c.bf16 %v1679, %v1678
    %1688 = vmatprep.subr.bf16.mxu0 0
    %1689 = vmatpush1.bf16.msra.mxu0 %v1680
    %1690 = vmatprep.subr.bf16.mxu0 0
    %1691 = vmatpush1.bf16.msra.mxu0 %v1681
    %1692 = vmatprep.subr.bf16.mxu0 0
    %1693 = vmatpush1.bf16.msra.mxu0 %v1682
    %1694 = vmatprep.subr.bf16.mxu0 0
    %1695 = vmatpush1.bf16.msra.mxu0 %v1683
    %1696 = vmatprep.subr.bf16.mxu0 0
    %1697 = vmatpush1.bf16.msra.mxu0 %v1684
    %1698 = vmatprep.subr.bf16.mxu0 0
    %1699 = vmatpush1.bf16.msra.mxu0 %v1685
    %1700 = vmatprep.subr.bf16.mxu0 0
    %1701 = vmatpush1.bf16.msra.mxu0 %v1686
    %1702 = vmatprep.subr.bf16.mxu0 0
    %1703 = vmatpush1.bf16.msra.mxu0 %v1687
    %1704 = vmatprep.subr.bf16.mxu0 0
    %1705 = vmatpush1.bf16.msra.mxu0 0
    %1706 = vmatprep.subr.bf16.mxu0 0
    %1707 = vmatpush1.bf16.msra.mxu0 0
    %1708 = vmatprep.subr.bf16.mxu0 0
    %1709 = vmatpush1.bf16.msra.mxu0 0
    %1710 = vmatprep.subr.bf16.mxu0 0
    %1711 = vmatpush1.bf16.msra.mxu0 0
    %1712 = vmatprep.subr.bf16.mxu0 0
    %1713 = vmatpush1.bf16.msra.mxu0 0
    %1714 = vmatprep.subr.bf16.mxu0 0
    %1715 = vmatpush1.bf16.msra.mxu0 0
    %1716 = vmatprep.subr.bf16.mxu0 0
    %1717 = vmatpush1.bf16.msra.mxu0 0
    %1718 = vmatprep.subr.bf16.mxu0 0
    %1719 = vmatpush1.bf16.msra.mxu0 0
    %1720 = vmatprep.mubr.bf16.mxu0 0
    %1721 = vmatmul.mubr.bf16.gmra.mrb[0].mxu0 %v854
    %v1722 = vpop.f32.mrb[0].mxu0
    %v1723 = vadd.f32 0.0, %v1722
    %v1724 = vpop.f32.mrb[0].mxu0
    %v1725 = vpop.f32.mrb[0].mxu0
    %v1726 = vadd.f32 0.0, %v1725
    %v1727 = vpop.f32.mrb[0].mxu0
    %1728 = vmatprep.mubr.bf16.mxu0 0
    %1729 = vmatmul.mubr.bf16.gmra.mrb[0].mxu0 %v855
    %v1730 = vpop.f32.mrb[0].mxu0
    %v1731 = vadd.f32 0.0, %v1730
    %v1732 = vpop.f32.mrb[0].mxu0
    %v1733 = vpop.f32.mrb[0].mxu0
    %v1734 = vadd.f32 0.0, %v1733
    %v1735 = vpop.f32.mrb[0].mxu0
    %1736 = vmatprep.mubr.bf16.mxu0 0
    %1737 = vmatmul.mubr.bf16.gmra.mrb[0].mxu0 %v856
    %v1738 = vpop.f32.mrb[0].mxu0
    %v1739 = vadd.f32 0.0, %v1738
    %v1740 = vpop.f32.mrb[0].mxu0
    %v1741 = vpop.f32.mrb[0].mxu0
    %v1742 = vadd.f32 0.0, %v1741
    %v1743 = vpop.f32.mrb[0].mxu0
    %1744 = vdwg.mxu0
    %v1777 = vunpack.c.l.b16 %v1294
    %v1778 = vunpack.c.l.b16 %v1295
    %v1779 = vunpack.c.l.b16 %v1296
    %v1780 = vunpack.c.l.b16 %v1297
    %v1781 = vunpack.c.l.b16 %v1298
    %v1782 = vunpack.c.l.b16 %v1299
    %v1783 = vunpack.c.l.b16 %v1300
    %v1784 = vunpack.c.l.b16 %v1301
    %v1785 = vunpack.c.l.b16 %v1302
    %v1786 = vunpack.c.l.b16 %v1303
    %v1787 = vunpack.c.l.b16 %v1304
    %v1788 = vunpack.c.l.b16 %v1305
    %v1789 = vunpack.c.l.b16 %v1306
    %v1790 = vunpack.c.l.b16 %v1307
    %v1791 = vunpack.c.l.b16 %v1308
    %v1792 = vunpack.c.l.b16 %v1309
    %v1793 = vunpack.c.l.b16 %v1310
    %v1794 = vunpack.c.l.b16 %v1311
    %v1795 = vunpack.c.l.b16 %v1312
    %v1796 = vunpack.c.l.b16 %v1313
    %v1797 = vunpack.c.l.b16 %v1314
    %v1798 = vunpack.c.l.b16 %v1315
    %v1799 = vunpack.c.l.b16 %v1316
    %v1800 = vunpack.c.l.b16 %v1317
    %v1801 = vunpack.c.l.b16 %v1318
    %v1802 = vunpack.c.l.b16 %v1319
    %v1803 = vunpack.c.l.b16 %v1320
    %v1804 = vunpack.c.l.b16 %v1321
    %v1805 = vunpack.c.l.b16 %v1322
    %v1806 = vunpack.c.l.b16 %v1323
    %v1807 = vunpack.c.l.b16 %v1324
    %v1808 = vunpack.c.l.b16 %v1325
    %v1809 = vpack.c.b16 %v1778, %v1777
    %v1810 = vpack.c.b16 %v1780, %v1779
    %v1811 = vpack.c.b16 %v1782, %v1781
    %v1812 = vpack.c.b16 %v1784, %v1783
    %v1813 = vpack.c.b16 %v1786, %v1785
    %v1814 = vpack.c.b16 %v1788, %v1787
    %v1815 = vpack.c.b16 %v1790, %v1789
    %v1816 = vpack.c.b16 %v1792, %v1791
    %v1817 = vpack.c.b16 %v1794, %v1793
    %v1818 = vpack.c.b16 %v1796, %v1795
    %v1819 = vpack.c.b16 %v1798, %v1797
    %v1820 = vpack.c.b16 %v1800, %v1799
    %v1821 = vpack.c.b16 %v1802, %v1801
    %v1822 = vpack.c.b16 %v1804, %v1803
    %v1823 = vpack.c.b16 %v1806, %v1805
    %v1824 = vpack.c.b16 %v1808, %v1807
    %1841 = vmatprep.subr.bf16.mxu0 0
    %1842 = vmatpush1.bf16.msra.mxu0 %v1809
    %1843 = vmatprep.subr.bf16.mxu0 0
    %1844 = vmatpush1.bf16.msra.mxu0 %v1810
    %1845 = vmatprep.subr.bf16.mxu0 0
    %1846 = vmatpush1.bf16.msra.mxu0 %v1811
    %1847 = vmatprep.subr.bf16.mxu0 0
    %1848 = vmatpush1.bf16.msra.mxu0 %v1812
    %1849 = vmatprep.subr.bf16.mxu0 0
    %1850 = vmatpush1.bf16.msra.mxu0 %v1813
    %1851 = vmatprep.subr.bf16.mxu0 0
    %1852 = vmatpush1.bf16.msra.mxu0 %v1814
    %1853 = vmatprep.subr.bf16.mxu0 0
    %1854 = vmatpush1.bf16.msra.mxu0 %v1815
    %1855 = vmatprep.subr.bf16.mxu0 0
    %1856 = vmatpush1.bf16.msra.mxu0 %v1816
    %1857 = vmatprep.subr.bf16.mxu0 0
    %1858 = vmatpush1.bf16.msra.mxu0 %v1817
    %1859 = vmatprep.subr.bf16.mxu0 0
    %1860 = vmatpush1.bf16.msra.mxu0 %v1818
    %1861 = vmatprep.subr.bf16.mxu0 0
    %1862 = vmatpush1.bf16.msra.mxu0 %v1819
    %1863 = vmatprep.subr.bf16.mxu0 0
    %1864 = vmatpush1.bf16.msra.mxu0 %v1820
    %1865 = vmatprep.subr.bf16.mxu0 0
    %1866 = vmatpush1.bf16.msra.mxu0 %v1821
    %1867 = vmatprep.subr.bf16.mxu0 0
    %1868 = vmatpush1.bf16.msra.mxu0 %v1822
    %1869 = vmatprep.subr.bf16.mxu0 0
    %1870 = vmatpush1.bf16.msra.mxu0 %v1823
    %1871 = vmatprep.subr.bf16.mxu0 0
    %1872 = vmatpush1.bf16.msra.mxu0 %v1824
    %1873 = vmatprep.mubr.bf16.mxu0 %v1256
    %1874 = vmatmul.mubr.bf16.gmra.mrb[0].mxu0 %v1255
    %v1875 = vpop.f32.mrb[0].mxu0
    %v1876 = vadd.f32 0.0, %v1875
    %v1877 = vpop.f32.mrb[0].mxu0
    %v1878 = vpop.f32.mrb[0].mxu0
    %v1879 = vadd.f32 0.0, %v1878
    %v1880 = vpop.f32.mrb[0].mxu0
    %1881 = vmatprep.mubr.bf16.mxu0 %v1258
    %1882 = vmatmul.mubr.bf16.gmra.mrb[0].mxu0 %v1257
    %v1883 = vpop.f32.mrb[0].mxu0
    %v1884 = vadd.f32 0.0, %v1883
    %v1885 = vpop.f32.mrb[0].mxu0
    %v1886 = vpop.f32.mrb[0].mxu0
    %v1887 = vadd.f32 0.0, %v1886
    %v1888 = vpop.f32.mrb[0].mxu0
    %1889 = vdwg.mxu0
    %v1890 = vadd.f32 %v1723, %v1876
    %v1891 = vadd.f32 %v1726, %v1879
    %v1892 = vadd.f32 %v1731, %v1884
    %v1893 = vadd.f32 %v1734, %v1887
    %v1895 = vlaneseq
    %v1896 = vshrl.u32 %v1895, 7
    %v1897 = vsub.s32 0, %v1896
    %v1898 = vrot.slane %v1326, %v1897
    %v1900 = vadd.f32 %v1890, %v1898
    %v1901 = vadd.f32 %v1891, %v1898
    %v1902 = vadd.f32 %v1892, %v1898
    %v1903 = vadd.f32 %v1893, %v1898
    %v1904 = vmax.f32 %v1900, 0.0
    %v1905 = vmax.f32 %v1901, 0.0
    %v1906 = vmax.f32 %v1902, 0.0
    %v1907 = vmax.f32 %v1903, 0.0
    %v1940 = vunpack.c.l.b16 %v1327
    %v1941 = vunpack.c.l.b16 %v1328
    %v1942 = vunpack.c.l.b16 %v1329
    %v1943 = vunpack.c.l.b16 %v1330
    %v1944 = vunpack.c.l.b16 %v1331
    %v1945 = vunpack.c.l.b16 %v1332
    %v1946 = vunpack.c.l.b16 %v1333
    %v1947 = vunpack.c.l.b16 %v1334
    %v1948 = vunpack.c.l.b16 %v1335
    %v1949 = vunpack.c.l.b16 %v1336
    %v1950 = vunpack.c.l.b16 %v1337
    %v1951 = vunpack.c.l.b16 %v1338
    %v1952 = vunpack.c.l.b16 %v1339
    %v1953 = vunpack.c.l.b16 %v1340
    %v1954 = vunpack.c.l.b16 %v1341
    %v1955 = vunpack.c.l.b16 %v1342
    %v1956 = vunpack.c.l.b16 %v1343
    %v1957 = vunpack.c.l.b16 %v1344
    %v1958 = vunpack.c.l.b16 %v1345
    %v1959 = vunpack.c.l.b16 %v1346
    %v1960 = vunpack.c.l.b16 %v1347
    %v1961 = vunpack.c.l.b16 %v1348
    %v1962 = vunpack.c.l.b16 %v1349
    %v1963 = vunpack.c.l.b16 %v1350
    %v1964 = vunpack.c.l.b16 %v1351
    %v1965 = vunpack.c.l.b16 %v1352
    %v1966 = vunpack.c.l.b16 %v1353
    %v1967 = vunpack.c.l.b16 %v1354
    %v1968 = vunpack.c.l.b16 %v1355
    %v1969 = vunpack.c.l.b16 %v1356
    %v1970 = vunpack.c.l.b16 %v1357
    %v1971 = vunpack.c.l.b16 %v1358
    %v1972 = vpack.c.b16 %v1941, %v1940
    %v1973 = vpack.c.b16 %v1943, %v1942
    %v1974 = vpack.c.b16 %v1945, %v1944
    %v1975 = vpack.c.b16 %v1947, %v1946
    %v1976 = vpack.c.b16 %v1949, %v1948
    %v1977 = vpack.c.b16 %v1951, %v1950
    %v1978 = vpack.c.b16 %v1953, %v1952
    %v1979 = vpack.c.b16 %v1955, %v1954
    %v1980 = vpack.c.b16 %v1957, %v1956
    %v1981 = vpack.c.b16 %v1959, %v1958
    %v1982 = vpack.c.b16 %v1961, %v1960
    %v1983 = vpack.c.b16 %v1963, %v1962
    %v1984 = vpack.c.b16 %v1965, %v1964
    %v1985 = vpack.c.b16 %v1967, %v1966
    %v1986 = vpack.c.b16 %v1969, %v1968
    %v1987 = vpack.c.b16 %v1971, %v1970
    %2004 = vmatprep.subr.bf16.mxu0 0
    %2005 = vmatpush1.bf16.msra.mxu0 %v1972
    %2006 = vmatprep.subr.bf16.mxu0 0
    %2007 = vmatpush1.bf16.msra.mxu0 %v1973
    %2008 = vmatprep.subr.bf16.mxu0 0
    %2009 = vmatpush1.bf16.msra.mxu0 %v1974
    %2010 = vmatprep.subr.bf16.mxu0 0
    %2011 = vmatpush1.bf16.msra.mxu0 %v1975
    %2012 = vmatprep.subr.bf16.mxu0 0
    %2013 = vmatpush1.bf16.msra.mxu0 %v1976
    %2014 = vmatprep.subr.bf16.mxu0 0
    %2015 = vmatpush1.bf16.msra.mxu0 %v1977
    %2016 = vmatprep.subr.bf16.mxu0 0
    %2017 = vmatpush1.bf16.msra.mxu0 %v1978
    %2018 = vmatprep.subr.bf16.mxu0 0
    %2019 = vmatpush1.bf16.msra.mxu0 %v1979
    %2020 = vmatprep.subr.bf16.mxu0 0
    %2021 = vmatpush1.bf16.msra.mxu0 %v1980
    %2022 = vmatprep.subr.bf16.mxu0 0
    %2023 = vmatpush1.bf16.msra.mxu0 %v1981
    %2024 = vmatprep.subr.bf16.mxu0 0
    %2025 = vmatpush1.bf16.msra.mxu0 %v1982
    %2026 = vmatprep.subr.bf16.mxu0 0
    %2027 = vmatpush1.bf16.msra.mxu0 %v1983
    %2028 = vmatprep.subr.bf16.mxu0 0
    %2029 = vmatpush1.bf16.msra.mxu0 %v1984
    %2030 = vmatprep.subr.bf16.mxu0 0
    %2031 = vmatpush1.bf16.msra.mxu0 %v1985
    %2032 = vmatprep.subr.bf16.mxu0 0
    %2033 = vmatpush1.bf16.msra.mxu0 %v1986
    %2034 = vmatprep.subr.bf16.mxu0 0
    %2035 = vmatpush1.bf16.msra.mxu0 %v1987
    %2036 = vmatprep.mubr.bf16.mxu0 %v1260
    %2037 = vmatmul.mubr.bf16.gmra.mrb[0].mxu0 %v1259
    %v2038 = vpop.f32.mrb[0].mxu0
    %v2039 = vadd.f32 0.0, %v2038
    %v2040 = vpop.f32.mrb[0].mxu0
    %v2041 = vpop.f32.mrb[0].mxu0
    %v2042 = vadd.f32 0.0, %v2041
    %v2043 = vpop.f32.mrb[0].mxu0
    %2044 = vdwg.mxu0
    %v2045 = vadd.f32 %v1739, %v2039
    %v2046 = vadd.f32 %v1742, %v2042
    %v2048 = vlaneseq
    %v2049 = vshrl.u32 %v2048, 7
    %v2050 = vsub.s32 0, %v2049
    %v2051 = vrot.slane %v1359, %v2050
    %v2053 = vadd.f32 %v2045, %v2051
    %v2054 = vadd.f32 %v2046, %v2051
    %v2055 = vmax.f32 %v2053, 0.0
    %v2056 = vmax.f32 %v2054, 0.0
    %v2057 = vpack.c.bf16 %v1905, %v1904
    %v2058 = vpack.c.bf16 %v1907, %v1906
    %v2059 = vpack.c.bf16 %v2056, %v2055
    %v2060 = vlaneseq
    %v2061 = vand.u32 %v2060, 127
    %v2062 = vld [vmem:[%s0] sm:$0xff]
    %v2063 = vld [vmem:[%s0 + $0x8] sm:$0xff]
    %v2064 = vld [vmem:[%s0 + $0x10] sm:$0xff]
    %v2065 = vld [vmem:[%s0 + $0x18] sm:$0xff]
    %v2066 = vld [vmem:[%s0 + $0x20] sm:$0xff]
    %v2067 = vld [vmem:[%s0 + $0x28] sm:$0xff]
    %v2068 = vld [vmem:[%s0 + $0x30] sm:$0xff]
    %v2069 = vld [vmem:[%s0 + $0x38] sm:$0xff]
    %v2070 = vld [vmem:[%s0 + $0x40] sm:$0xff]
    %v2071 = vld [vmem:[%s0 + $0x48] sm:$0xff]
    %v2072 = vld [vmem:[%s0 + $0x50] sm:$0xff]
    %v2073 = vld [vmem:[%s0 + $0x58] sm:$0xff]
    %v2074 = vld [vmem:[%s0 + $0x60] sm:$0xff]
    %v2075 = vld [vmem:[%s0 + $0x68] sm:$0xff]
    %v2076 = vld [vmem:[%s0 + $0x70] sm:$0xff]
    %v2077 = vld [vmem:[%s0 + $0x78] sm:$0xff]
    %2078 = vset.pattern.permute.xlu0 0
    %2079 = vperm.xlu0 %2078, %v2062
    %v2080 = vpop.permute.xlu0 %2079
    %2081 = vset.pattern.permute.xlu0 0
    %2082 = vperm.xlu0 %2081, %v2063
    %v2083 = vpop.permute.xlu0 %2082
    %2084 = vset.pattern.permute.xlu0 0
    %2085 = vperm.xlu0 %2084, %v2064
    %v2086 = vpop.permute.xlu0 %2085
    %2087 = vset.pattern.permute.xlu0 0
    %2088 = vperm.xlu0 %2087, %v2065
    %v2089 = vpop.permute.xlu0 %2088
    %2090 = vset.pattern.permute.xlu0 0
    %2091 = vperm.xlu0 %2090, %v2066
    %v2092 = vpop.permute.xlu0 %2091
    %2093 = vset.pattern.permute.xlu0 0
    %2094 = vperm.xlu0 %2093, %v2067
    %v2095 = vpop.permute.xlu0 %2094
    %2096 = vset.pattern.permute.xlu0 0
    %2097 = vperm.xlu0 %2096, %v2068
    %v2098 = vpop.permute.xlu0 %2097
    %2099 = vset.pattern.permute.xlu0 0
    %2100 = vperm.xlu0 %2099, %v2069
    %v2101 = vpop.permute.xlu0 %2100
    %2102 = vset.pattern.permute.xlu0 0
    %2103 = vperm.xlu0 %2102, %v2070
    %v2104 = vpop.permute.xlu0 %2103
    %2105 = vset.pattern.permute.xlu0 0
    %2106 = vperm.xlu0 %2105, %v2071
    %v2107 = vpop.permute.xlu0 %2106
    %2108 = vset.pattern.permute.xlu0 0
    %2109 = vperm.xlu0 %2108, %v2072
    %v2110 = vpop.permute.xlu0 %2109
    %2111 = vset.pattern.permute.xlu0 0
    %2112 = vperm.xlu0 %2111, %v2073
    %v2113 = vpop.permute.xlu0 %2112
    %2114 = vset.pattern.permute.xlu0 0
    %2115 = vperm.xlu0 %2114, %v2074
    %v2116 = vpop.permute.xlu0 %2115
    %2117 = vset.pattern.permute.xlu0 0
    %2118 = vperm.xlu0 %2117, %v2075
    %v2119 = vpop.permute.xlu0 %2118
    %2120 = vset.pattern.permute.xlu0 0
    %2121 = vperm.xlu0 %2120, %v2076
    %v2122 = vpop.permute.xlu0 %2121
    %2123 = vset.pattern.permute.xlu0 0
    %2124 = vperm.xlu0 %2123, %v2077
    %v2125 = vpop.permute.xlu0 %2124
    %vm2126 = vcmp.eq.s32.totalorder %v2061, %v2080
    %vm2127 = vcmp.eq.s32.totalorder %v2061, %v2083
    %vm2128 = vcmp.eq.s32.totalorder %v2061, %v2086
    %vm2129 = vcmp.eq.s32.totalorder %v2061, %v2089
    %vm2130 = vcmp.eq.s32.totalorder %v2061, %v2092
    %vm2131 = vcmp.eq.s32.totalorder %v2061, %v2095
    %vm2132 = vcmp.eq.s32.totalorder %v2061, %v2098
    %vm2133 = vcmp.eq.s32.totalorder %v2061, %v2101
    %vm2134 = vcmp.eq.s32.totalorder %v2061, %v2104
    %vm2135 = vcmp.eq.s32.totalorder %v2061, %v2107
    %vm2136 = vcmp.eq.s32.totalorder %v2061, %v2110
    %vm2137 = vcmp.eq.s32.totalorder %v2061, %v2113
    %vm2138 = vcmp.eq.s32.totalorder %v2061, %v2116
    %vm2139 = vcmp.eq.s32.totalorder %v2061, %v2119
    %vm2140 = vcmp.eq.s32.totalorder %v2061, %v2122
    %vm2141 = vcmp.eq.s32.totalorder %v2061, %v2125
    %v2142 = vsel %vm2126, 1, 0
    %v2143 = vsel %vm2127, 1, 0
    %v2144 = vsel %vm2128, 1, 0
    %v2145 = vsel %vm2129, 1, 0
    %v2146 = vsel %vm2130, 1, 0
    %v2147 = vsel %vm2131, 1, 0
    %v2148 = vsel %vm2132, 1, 0
    %v2149 = vsel %vm2133, 1, 0
    %v2150 = vsel %vm2134, 1, 0
    %v2151 = vsel %vm2135, 1, 0
    %v2152 = vsel %vm2136, 1, 0
    %v2153 = vsel %vm2137, 1, 0
    %v2154 = vsel %vm2138, 1, 0
    %v2155 = vsel %vm2139, 1, 0
    %v2156 = vsel %vm2140, 1, 0
    %v2157 = vsel %vm2141, 1, 0
    %v2158 = vcvt.s32.f32 %v2142
    %v2159 = vcvt.s32.f32 %v2143
    %v2160 = vcvt.s32.f32 %v2144
    %v2161 = vcvt.s32.f32 %v2145
    %v2162 = vcvt.s32.f32 %v2146
    %v2163 = vcvt.s32.f32 %v2147
    %v2164 = vcvt.s32.f32 %v2148
    %v2165 = vcvt.s32.f32 %v2149
    %v2166 = vcvt.s32.f32 %v2150
    %v2167 = vcvt.s32.f32 %v2151
    %v2168 = vcvt.s32.f32 %v2152
    %v2169 = vcvt.s32.f32 %v2153
    %v2170 = vcvt.s32.f32 %v2154
    %v2171 = vcvt.s32.f32 %v2155
    %v2172 = vcvt.s32.f32 %v2156
    %v2173 = vcvt.s32.f32 %v2157
    %v2174 = vpack.c.bf16 %v2159, %v2158
    %v2175 = vpack.c.bf16 %v2161, %v2160
    %v2176 = vpack.c.bf16 %v2163, %v2162
    %v2177 = vpack.c.bf16 %v2165, %v2164
    %v2178 = vpack.c.bf16 %v2167, %v2166
    %v2179 = vpack.c.bf16 %v2169, %v2168
    %v2180 = vpack.c.bf16 %v2171, %v2170
    %v2181 = vpack.c.bf16 %v2173, %v2172
    %v2182 = vld [vmem:[%s1] sm:$0xff]
    %v2183 = vld [vmem:[%s1 + $0x8] sm:$0xff]
    %v2184 = vld [vmem:[%s1 + $0x10] sm:$0xff]
    %v2185 = vld [vmem:[%s1 + $0x18] sm:$0xff]
    %v2186 = vld [vmem:[%s1 + $0x20] sm:$0xff]
    %v2187 = vld [vmem:[%s1 + $0x28] sm:$0xff]
    %v2188 = vld [vmem:[%s1 + $0x30] sm:$0xff]
    %v2189 = vld [vmem:[%s1 + $0x38] sm:$0xff]
    %v2190 = vld [vmem:[%s1 + $0x40] sm:$0xff]
    %v2191 = vld [vmem:[%s1 + $0x48] sm:$0xff]
    %v2192 = vld [vmem:[%s1 + $0x50] sm:$0xff]
    %v2193 = vld [vmem:[%s1 + $0x58] sm:$0xff]
    %v2194 = vld [vmem:[%s1 + $0x60] sm:$0xff]
    %v2195 = vld [vmem:[%s1 + $0x68] sm:$0xff]
    %v2196 = vld [vmem:[%s1 + $0x70] sm:$0xff]
    %v2197 = vld [vmem:[%s1 + $0x78] sm:$0xff]
    %2198 = vset.pattern.permute.xlu0 0
    %2199 = vperm.xlu0 %2198, %v2182
    %v2200 = vpop.permute.xlu0 %2199
    %2201 = vset.pattern.permute.xlu0 0
    %2202 = vperm.xlu0 %2201, %v2183
    %v2203 = vpop.permute.xlu0 %2202
    %2204 = vset.pattern.permute.xlu0 0
    %2205 = vperm.xlu0 %2204, %v2184
    %v2206 = vpop.permute.xlu0 %2205
    %2207 = vset.pattern.permute.xlu0 0
    %2208 = vperm.xlu0 %2207, %v2185
    %v2209 = vpop.permute.xlu0 %2208
    %2210 = vset.pattern.permute.xlu0 0
    %2211 = vperm.xlu0 %2210, %v2186
    %v2212 = vpop.permute.xlu0 %2211
    %2213 = vset.pattern.permute.xlu0 0
    %2214 = vperm.xlu0 %2213, %v2187
    %v2215 = vpop.permute.xlu0 %2214
    %2216 = vset.pattern.permute.xlu0 0
    %2217 = vperm.xlu0 %2216, %v2188
    %v2218 = vpop.permute.xlu0 %2217
    %2219 = vset.pattern.permute.xlu0 0
    %2220 = vperm.xlu0 %2219, %v2189
    %v2221 = vpop.permute.xlu0 %2220
    %2222 = vset.pattern.permute.xlu0 0
    %2223 = vperm.xlu0 %2222, %v2190
    %v2224 = vpop.permute.xlu0 %2223
    %2225 = vset.pattern.permute.xlu0 0
    %2226 = vperm.xlu0 %2225, %v2191
    %v2227 = vpop.permute.xlu0 %2226
    %2228 = vset.pattern.permute.xlu0 0
    %2229 = vperm.xlu0 %2228, %v2192
    %v2230 = vpop.permute.xlu0 %2229
    %2231 = vset.pattern.permute.xlu0 0
    %2232 = vperm.xlu0 %2231, %v2193
    %v2233 = vpop.permute.xlu0 %2232
    %2234 = vset.pattern.permute.xlu0 0
    %2235 = vperm.xlu0 %2234, %v2194
    %v2236 = vpop.permute.xlu0 %2235
    %2237 = vset.pattern.permute.xlu0 0
    %2238 = vperm.xlu0 %2237, %v2195
    %v2239 = vpop.permute.xlu0 %2238
    %2240 = vset.pattern.permute.xlu0 0
    %2241 = vperm.xlu0 %2240, %v2196
    %v2242 = vpop.permute.xlu0 %2241
    %2243 = vset.pattern.permute.xlu0 0
    %2244 = vperm.xlu0 %2243, %v2197
    %v2245 = vpop.permute.xlu0 %2244
    %vm2246 = vcmp.eq.s32.totalorder %v2061, %v2200
    %vm2247 = vcmp.eq.s32.totalorder %v2061, %v2203
    %vm2248 = vcmp.eq.s32.totalorder %v2061, %v2206
    %vm2249 = vcmp.eq.s32.totalorder %v2061, %v2209
    %vm2250 = vcmp.eq.s32.totalorder %v2061, %v2212
    %vm2251 = vcmp.eq.s32.totalorder %v2061, %v2215
    %vm2252 = vcmp.eq.s32.totalorder %v2061, %v2218
    %vm2253 = vcmp.eq.s32.totalorder %v2061, %v2221
    %vm2254 = vcmp.eq.s32.totalorder %v2061, %v2224
    %vm2255 = vcmp.eq.s32.totalorder %v2061, %v2227
    %vm2256 = vcmp.eq.s32.totalorder %v2061, %v2230
    %vm2257 = vcmp.eq.s32.totalorder %v2061, %v2233
    %vm2258 = vcmp.eq.s32.totalorder %v2061, %v2236
    %vm2259 = vcmp.eq.s32.totalorder %v2061, %v2239
    %vm2260 = vcmp.eq.s32.totalorder %v2061, %v2242
    %vm2261 = vcmp.eq.s32.totalorder %v2061, %v2245
    %v2262 = vsel %vm2246, 1, 0
    %v2263 = vsel %vm2247, 1, 0
    %v2264 = vsel %vm2248, 1, 0
    %v2265 = vsel %vm2249, 1, 0
    %v2266 = vsel %vm2250, 1, 0
    %v2267 = vsel %vm2251, 1, 0
    %v2268 = vsel %vm2252, 1, 0
    %v2269 = vsel %vm2253, 1, 0
    %v2270 = vsel %vm2254, 1, 0
    %v2271 = vsel %vm2255, 1, 0
    %v2272 = vsel %vm2256, 1, 0
    %v2273 = vsel %vm2257, 1, 0
    %v2274 = vsel %vm2258, 1, 0
    %v2275 = vsel %vm2259, 1, 0
    %v2276 = vsel %vm2260, 1, 0
    %v2277 = vsel %vm2261, 1, 0
    %v2278 = vcvt.s32.f32 %v2262
    %v2279 = vcvt.s32.f32 %v2263
    %v2280 = vcvt.s32.f32 %v2264
    %v2281 = vcvt.s32.f32 %v2265
    %v2282 = vcvt.s32.f32 %v2266
    %v2283 = vcvt.s32.f32 %v2267
    %v2284 = vcvt.s32.f32 %v2268
    %v2285 = vcvt.s32.f32 %v2269
    %v2286 = vcvt.s32.f32 %v2270
    %v2287 = vcvt.s32.f32 %v2271
    %v2288 = vcvt.s32.f32 %v2272
    %v2289 = vcvt.s32.f32 %v2273
    %v2290 = vcvt.s32.f32 %v2274
    %v2291 = vcvt.s32.f32 %v2275
    %v2292 = vcvt.s32.f32 %v2276
    %v2293 = vcvt.s32.f32 %v2277
    %v2294 = vpack.c.bf16 %v2279, %v2278
    %v2295 = vpack.c.bf16 %v2281, %v2280
    %v2296 = vpack.c.bf16 %v2283, %v2282
    %v2297 = vpack.c.bf16 %v2285, %v2284
    %v2298 = vpack.c.bf16 %v2287, %v2286
    %v2299 = vpack.c.bf16 %v2289, %v2288
    %v2300 = vpack.c.bf16 %v2291, %v2290
    %v2301 = vpack.c.bf16 %v2293, %v2292
    %vm2302 = vcmask 261120
    %v2304 = vsel %vm2302, %v2174, 0
    %v2307 = vsel %vm2302, %v2175, 0
    %v2310 = vsel %vm2302, %v2176, 0
    %v2313 = vsel %vm2302, %v2177, 0
    %v2316 = vsel %vm2302, %v2178, 0
    %v2319 = vsel %vm2302, %v2179, 0
    %v2322 = vsel %vm2302, %v2180, 0
    %v2325 = vsel %vm2302, %v2181, 0
    %2327 = vmatprep.subr.bf16.mxu0 0
    %2328 = vmatpush1.bf16.msra.mxu0 %v2057
    %2329 = vmatprep.subr.bf16.mxu0 0
    %2330 = vmatpush1.bf16.msra.mxu0 %v2058
    %2331 = vmatprep.subr.bf16.mxu0 0
    %2332 = vmatpush1.bf16.msra.mxu0 0
    %2333 = vmatprep.subr.bf16.mxu0 0
    %2334 = vmatpush1.bf16.msra.mxu0 0
    %2335 = vmatprep.subr.bf16.mxu0 0
    %2336 = vmatpush1.bf16.msra.mxu0 0
    %2337 = vmatprep.subr.bf16.mxu0 0
    %2338 = vmatpush1.bf16.msra.mxu0 0
    %2339 = vmatprep.subr.bf16.mxu0 0
    %2340 = vmatpush1.bf16.msra.mxu0 0
    %2341 = vmatprep.subr.bf16.mxu0 0
    %2342 = vmatpush1.bf16.msra.mxu0 0
    %2343 = vmatprep.subr.bf16.mxu0 0
    %2344 = vmatpush1.bf16.msra.mxu0 0
    %2345 = vmatprep.subr.bf16.mxu0 0
    %2346 = vmatpush1.bf16.msra.mxu0 0
    %2347 = vmatprep.subr.bf16.mxu0 0
    %2348 = vmatpush1.bf16.msra.mxu0 0
    %2349 = vmatprep.subr.bf16.mxu0 0
    %2350 = vmatpush1.bf16.msra.mxu0 0
    %2351 = vmatprep.subr.bf16.mxu0 0
    %2352 = vmatpush1.bf16.msra.mxu0 0
    %2353 = vmatprep.subr.bf16.mxu0 0
    %2354 = vmatpush1.bf16.msra.mxu0 0
    %2355 = vmatprep.subr.bf16.mxu0 0
    %2356 = vmatpush1.bf16.msra.mxu0 0
    %2357 = vmatprep.subr.bf16.mxu0 0
    %2358 = vmatpush1.bf16.msra.mxu0 0
    %2359 = vmatprep.mubr.bf16.mxu0 0
    %2360 = vmatmul.mubr.bf16.gmra.mrb[0].mxu0 %v2304
    %v2361 = vpop.f32.mrb[0].mxu0
    %v2362 = vadd.f32 0.0, %v2361
    %v2363 = vpop.f32.mrb[0].mxu0
    %v2364 = vpop.f32.mrb[0].mxu0
    %v2365 = vadd.f32 0.0, %v2364
    %v2366 = vpop.f32.mrb[0].mxu0
    %2367 = vmatprep.mubr.bf16.mxu0 0
    %2368 = vmatmul.mubr.bf16.gmra.mrb[0].mxu0 %v2307
    %v2369 = vpop.f32.mrb[0].mxu0
    %v2370 = vadd.f32 0.0, %v2369
    %v2371 = vpop.f32.mrb[0].mxu0
    %v2372 = vpop.f32.mrb[0].mxu0
    %v2373 = vadd.f32 0.0, %v2372
    %v2374 = vpop.f32.mrb[0].mxu0
    %2375 = vmatprep.mubr.bf16.mxu0 0
    %2376 = vmatmul.mubr.bf16.gmra.mrb[0].mxu0 %v2310
    %v2377 = vpop.f32.mrb[0].mxu0
    %v2378 = vadd.f32 0.0, %v2377
    %v2379 = vpop.f32.mrb[0].mxu0
    %v2380 = vpop.f32.mrb[0].mxu0
    %v2381 = vadd.f32 0.0, %v2380
    %v2382 = vpop.f32.mrb[0].mxu0
    %2383 = vmatprep.mubr.bf16.mxu0 0
    %2384 = vmatmul.mubr.bf16.gmra.mrb[0].mxu0 %v2313
    %v2385 = vpop.f32.mrb[0].mxu0
    %v2386 = vadd.f32 0.0, %v2385
    %v2387 = vpop.f32.mrb[0].mxu0
    %v2388 = vpop.f32.mrb[0].mxu0
    %v2389 = vadd.f32 0.0, %v2388
    %v2390 = vpop.f32.mrb[0].mxu0
    %2391 = vmatprep.mubr.bf16.mxu0 0
    %2392 = vmatmul.mubr.bf16.gmra.mrb[0].mxu0 %v2316
    %v2393 = vpop.f32.mrb[0].mxu0
    %v2394 = vadd.f32 0.0, %v2393
    %v2395 = vpop.f32.mrb[0].mxu0
    %v2396 = vpop.f32.mrb[0].mxu0
    %v2397 = vadd.f32 0.0, %v2396
    %v2398 = vpop.f32.mrb[0].mxu0
    %2399 = vmatprep.mubr.bf16.mxu0 0
    %2400 = vmatmul.mubr.bf16.gmra.mrb[0].mxu0 %v2319
    %v2401 = vpop.f32.mrb[0].mxu0
    %v2402 = vadd.f32 0.0, %v2401
    %v2403 = vpop.f32.mrb[0].mxu0
    %v2404 = vpop.f32.mrb[0].mxu0
    %v2405 = vadd.f32 0.0, %v2404
    %v2406 = vpop.f32.mrb[0].mxu0
    %2407 = vmatprep.mubr.bf16.mxu0 0
    %2408 = vmatmul.mubr.bf16.gmra.mrb[0].mxu0 %v2322
    %v2409 = vpop.f32.mrb[0].mxu0
    %v2410 = vadd.f32 0.0, %v2409
    %v2411 = vpop.f32.mrb[0].mxu0
    %v2412 = vpop.f32.mrb[0].mxu0
    %v2413 = vadd.f32 0.0, %v2412
    %v2414 = vpop.f32.mrb[0].mxu0
    %2415 = vmatprep.mubr.bf16.mxu0 0
    %2416 = vmatmul.mubr.bf16.gmra.mrb[0].mxu0 %v2325
    %v2417 = vpop.f32.mrb[0].mxu0
    %v2418 = vadd.f32 0.0, %v2417
    %v2419 = vpop.f32.mrb[0].mxu0
    %v2420 = vpop.f32.mrb[0].mxu0
    %v2421 = vadd.f32 0.0, %v2420
    %v2422 = vpop.f32.mrb[0].mxu0
    %2423 = vdwg.mxu0
    %vm2424 = vcmask 130048
    %v2426 = vsel %vm2424, %v2294, 0
    %v2429 = vsel %vm2424, %v2295, 0
    %v2432 = vsel %vm2424, %v2296, 0
    %v2435 = vsel %vm2424, %v2297, 0
    %v2438 = vsel %vm2424, %v2298, 0
    %v2441 = vsel %vm2424, %v2299, 0
    %v2444 = vsel %vm2424, %v2300, 0
    %v2447 = vsel %vm2424, %v2301, 0
    %2449 = vmatprep.subr.bf16.mxu0 0
    %2450 = vmatpush1.bf16.msra.mxu0 %v2059
    %2451 = vmatprep.subr.bf16.mxu0 0
    %2452 = vmatpush1.bf16.msra.mxu0 0
    %2453 = vmatprep.subr.bf16.mxu0 0
    %2454 = vmatpush1.bf16.msra.mxu0 0
    %2455 = vmatprep.subr.bf16.mxu0 0
    %2456 = vmatpush1.bf16.msra.mxu0 0
    %2457 = vmatprep.subr.bf16.mxu0 0
    %2458 = vmatpush1.bf16.msra.mxu0 0
    %2459 = vmatprep.subr.bf16.mxu0 0
    %2460 = vmatpush1.bf16.msra.mxu0 0
    %2461 = vmatprep.subr.bf16.mxu0 0
    %2462 = vmatpush1.bf16.msra.mxu0 0
    %2463 = vmatprep.subr.bf16.mxu0 0
    %2464 = vmatpush1.bf16.msra.mxu0 0
    %2465 = vmatprep.subr.bf16.mxu0 0
    %2466 = vmatpush1.bf16.msra.mxu0 0
    %2467 = vmatprep.subr.bf16.mxu0 0
    %2468 = vmatpush1.bf16.msra.mxu0 0
    %2469 = vmatprep.subr.bf16.mxu0 0
    %2470 = vmatpush1.bf16.msra.mxu0 0
    %2471 = vmatprep.subr.bf16.mxu0 0
    %2472 = vmatpush1.bf16.msra.mxu0 0
    %2473 = vmatprep.subr.bf16.mxu0 0
    %2474 = vmatpush1.bf16.msra.mxu0 0
    %2475 = vmatprep.subr.bf16.mxu0 0
    %2476 = vmatpush1.bf16.msra.mxu0 0
    %2477 = vmatprep.subr.bf16.mxu0 0
    %2478 = vmatpush1.bf16.msra.mxu0 0
    %2479 = vmatprep.subr.bf16.mxu0 0
    %2480 = vmatpush1.bf16.msra.mxu0 0
    %2481 = vmatprep.mubr.bf16.mxu0 0
    %2482 = vmatmul.mubr.bf16.gmra.mrb[0].mxu0 %v2426
    %v2483 = vpop.f32.mrb[0].mxu0
    %v2484 = vadd.f32 0.0, %v2483
    %v2485 = vpop.f32.mrb[0].mxu0
    %v2486 = vpop.f32.mrb[0].mxu0
    %v2487 = vadd.f32 0.0, %v2486
    %v2488 = vpop.f32.mrb[0].mxu0
    %2489 = vmatprep.mubr.bf16.mxu0 0
    %2490 = vmatmul.mubr.bf16.gmra.mrb[0].mxu0 %v2429
    %v2491 = vpop.f32.mrb[0].mxu0
    %v2492 = vadd.f32 0.0, %v2491
    %v2493 = vpop.f32.mrb[0].mxu0
    %v2494 = vpop.f32.mrb[0].mxu0
    %v2495 = vadd.f32 0.0, %v2494
    %v2496 = vpop.f32.mrb[0].mxu0
    %2497 = vmatprep.mubr.bf16.mxu0 0
    %2498 = vmatmul.mubr.bf16.gmra.mrb[0].mxu0 %v2432
    %v2499 = vpop.f32.mrb[0].mxu0
    %v2500 = vadd.f32 0.0, %v2499
    %v2501 = vpop.f32.mrb[0].mxu0
    %v2502 = vpop.f32.mrb[0].mxu0
    %v2503 = vadd.f32 0.0, %v2502
    %v2504 = vpop.f32.mrb[0].mxu0
    %2505 = vmatprep.mubr.bf16.mxu0 0
    %2506 = vmatmul.mubr.bf16.gmra.mrb[0].mxu0 %v2435
    %v2507 = vpop.f32.mrb[0].mxu0
    %v2508 = vadd.f32 0.0, %v2507
    %v2509 = vpop.f32.mrb[0].mxu0
    %v2510 = vpop.f32.mrb[0].mxu0
    %v2511 = vadd.f32 0.0, %v2510
    %v2512 = vpop.f32.mrb[0].mxu0
    %2513 = vmatprep.mubr.bf16.mxu0 0
    %2514 = vmatmul.mubr.bf16.gmra.mrb[0].mxu0 %v2438
    %v2515 = vpop.f32.mrb[0].mxu0
    %v2516 = vadd.f32 0.0, %v2515
    %v2517 = vpop.f32.mrb[0].mxu0
    %v2518 = vpop.f32.mrb[0].mxu0
    %v2519 = vadd.f32 0.0, %v2518
    %v2520 = vpop.f32.mrb[0].mxu0
    %2521 = vmatprep.mubr.bf16.mxu0 0
    %2522 = vmatmul.mubr.bf16.gmra.mrb[0].mxu0 %v2441
    %v2523 = vpop.f32.mrb[0].mxu0
    %v2524 = vadd.f32 0.0, %v2523
    %v2525 = vpop.f32.mrb[0].mxu0
    %v2526 = vpop.f32.mrb[0].mxu0
    %v2527 = vadd.f32 0.0, %v2526
    %v2528 = vpop.f32.mrb[0].mxu0
    %2529 = vmatprep.mubr.bf16.mxu0 0
    %2530 = vmatmul.mubr.bf16.gmra.mrb[0].mxu0 %v2444
    %v2531 = vpop.f32.mrb[0].mxu0
    %v2532 = vadd.f32 0.0, %v2531
    %v2533 = vpop.f32.mrb[0].mxu0
    %v2534 = vpop.f32.mrb[0].mxu0
    %v2535 = vadd.f32 0.0, %v2534
    %v2536 = vpop.f32.mrb[0].mxu0
    %2537 = vmatprep.mubr.bf16.mxu0 0
    %2538 = vmatmul.mubr.bf16.gmra.mrb[0].mxu0 %v2447
    %v2539 = vpop.f32.mrb[0].mxu0
    %v2540 = vadd.f32 0.0, %v2539
    %v2541 = vpop.f32.mrb[0].mxu0
    %v2542 = vpop.f32.mrb[0].mxu0
    %v2543 = vadd.f32 0.0, %v2542
    %v2544 = vpop.f32.mrb[0].mxu0
    %2545 = vdwg.mxu0
    %v2546 = vpack.c.bf16 %v2365, %v2362
    %v2547 = vpack.c.bf16 %v2373, %v2370
    %v2548 = vpack.c.bf16 %v2381, %v2378
    %v2549 = vpack.c.bf16 %v2389, %v2386
    %v2550 = vpack.c.bf16 %v2397, %v2394
    %v2551 = vpack.c.bf16 %v2405, %v2402
    %v2552 = vpack.c.bf16 %v2413, %v2410
    %v2553 = vpack.c.bf16 %v2421, %v2418
    %v2554 = vld [vmem:[#allocation23] sm:$0xf]
    %v2555 = vld [vmem:[#allocation23 + $0x4] sm:$0xf]
    %v2556 = vld [vmem:[#allocation23 + $0x8] sm:$0xf]
    %v2557 = vld [vmem:[#allocation23 + $0xc] sm:$0xf]
    %v2558 = vld [vmem:[#allocation23 + $0x10] sm:$0xf]
    %v2559 = vld [vmem:[#allocation23 + $0x14] sm:$0xf]
    %v2560 = vld [vmem:[#allocation23 + $0x18] sm:$0xf]
    %v2561 = vld [vmem:[#allocation23 + $0x1c] sm:$0xf]
    %v2562 = vld [vmem:[#allocation23 + $0x20] sm:$0xf]
    %v2563 = vld [vmem:[#allocation23 + $0x24] sm:$0xf]
    %v2564 = vld [vmem:[#allocation23 + $0x28] sm:$0xf]
    %v2565 = vld [vmem:[#allocation23 + $0x2c] sm:$0xf]
    %v2566 = vld [vmem:[#allocation23 + $0x30] sm:$0xf]
    %v2567 = vld [vmem:[#allocation23 + $0x34] sm:$0xf]
    %v2568 = vld [vmem:[#allocation23 + $0x38] sm:$0xf]
    %v2569 = vld [vmem:[#allocation23 + $0x3c] sm:$0xf]
    %v2570 = vpack.c.bf16 %v2487, %v2484
    %v2571 = vpack.c.bf16 %v2495, %v2492
    %v2572 = vpack.c.bf16 %v2503, %v2500
    %v2573 = vpack.c.bf16 %v2511, %v2508
    %v2574 = vpack.c.bf16 %v2519, %v2516
    %v2575 = vpack.c.bf16 %v2527, %v2524
    %v2576 = vpack.c.bf16 %v2535, %v2532
    %v2577 = vpack.c.bf16 %v2543, %v2540
    %v2578 = vld [vmem:[#allocation24] sm:$0xf]
    %v2579 = vld [vmem:[#allocation24 + $0x4] sm:$0xf]
    %v2580 = vld [vmem:[#allocation24 + $0x8] sm:$0xf]
    %v2581 = vld [vmem:[#allocation24 + $0xc] sm:$0xf]
    %v2582 = vld [vmem:[#allocation24 + $0x10] sm:$0xf]
    %v2583 = vld [vmem:[#allocation24 + $0x14] sm:$0xf]
    %v2584 = vld [vmem:[#allocation24 + $0x18] sm:$0xf]
    %v2585 = vld [vmem:[#allocation24 + $0x1c] sm:$0xf]
    %v2586 = vld [vmem:[#allocation24 + $0x20] sm:$0xf]
    %v2587 = vld [vmem:[#allocation24 + $0x24] sm:$0xf]
    %v2588 = vld [vmem:[#allocation24 + $0x28] sm:$0xf]
    %v2589 = vld [vmem:[#allocation24 + $0x2c] sm:$0xf]
    %v2590 = vld [vmem:[#allocation24 + $0x30] sm:$0xf]
    %v2591 = vld [vmem:[#allocation24 + $0x34] sm:$0xf]
    %v2592 = vld [vmem:[#allocation24 + $0x38] sm:$0xf]
    %v2593 = vld [vmem:[#allocation24 + $0x3c] sm:$0xf]
    %v2610 = vunpack.c.l.b16 %v2578
    %v2611 = vunpack.c.l.b16 %v2579
    %v2612 = vunpack.c.l.b16 %v2580
    %v2613 = vunpack.c.l.b16 %v2581
    %v2614 = vunpack.c.l.b16 %v2582
    %v2615 = vunpack.c.l.b16 %v2583
    %v2616 = vunpack.c.l.b16 %v2584
    %v2617 = vunpack.c.l.b16 %v2585
    %v2618 = vunpack.c.l.b16 %v2586
    %v2619 = vunpack.c.l.b16 %v2587
    %v2620 = vunpack.c.l.b16 %v2588
    %v2621 = vunpack.c.l.b16 %v2589
    %v2622 = vunpack.c.l.b16 %v2590
    %v2623 = vunpack.c.l.b16 %v2591
    %v2624 = vunpack.c.l.b16 %v2592
    %v2625 = vunpack.c.l.b16 %v2593
    %v2626 = vpack.c.b16 %v2611, %v2610
    %v2627 = vpack.c.b16 %v2613, %v2612
    %v2628 = vpack.c.b16 %v2615, %v2614
    %v2629 = vpack.c.b16 %v2617, %v2616
    %v2630 = vpack.c.b16 %v2619, %v2618
    %v2631 = vpack.c.b16 %v2621, %v2620
    %v2632 = vpack.c.b16 %v2623, %v2622
    %v2633 = vpack.c.b16 %v2625, %v2624
    %2642 = vmatprep.subr.bf16.mxu0 0
    %2643 = vmatpush1.bf16.msra.mxu0 %v2626
    %2644 = vmatprep.subr.bf16.mxu0 0
    %2645 = vmatpush1.bf16.msra.mxu0 %v2627
    %2646 = vmatprep.subr.bf16.mxu0 0
    %2647 = vmatpush1.bf16.msra.mxu0 %v2628
    %2648 = vmatprep.subr.bf16.mxu0 0
    %2649 = vmatpush1.bf16.msra.mxu0 %v2629
    %2650 = vmatprep.subr.bf16.mxu0 0
    %2651 = vmatpush1.bf16.msra.mxu0 %v2630
    %2652 = vmatprep.subr.bf16.mxu0 0
    %2653 = vmatpush1.bf16.msra.mxu0 %v2631
    %2654 = vmatprep.subr.bf16.mxu0 0
    %2655 = vmatpush1.bf16.msra.mxu0 %v2632
    %2656 = vmatprep.subr.bf16.mxu0 0
    %2657 = vmatpush1.bf16.msra.mxu0 %v2633
    %2658 = vmatprep.subr.bf16.mxu0 0
    %2659 = vmatpush1.bf16.msra.mxu0 0
    %2660 = vmatprep.subr.bf16.mxu0 0
    %2661 = vmatpush1.bf16.msra.mxu0 0
    %2662 = vmatprep.subr.bf16.mxu0 0
    %2663 = vmatpush1.bf16.msra.mxu0 0
    %2664 = vmatprep.subr.bf16.mxu0 0
    %2665 = vmatpush1.bf16.msra.mxu0 0
    %2666 = vmatprep.subr.bf16.mxu0 0
    %2667 = vmatpush1.bf16.msra.mxu0 0
    %2668 = vmatprep.subr.bf16.mxu0 0
    %2669 = vmatpush1.bf16.msra.mxu0 0
    %2670 = vmatprep.subr.bf16.mxu0 0
    %2671 = vmatpush1.bf16.msra.mxu0 0
    %2672 = vmatprep.subr.bf16.mxu0 0
    %2673 = vmatpush1.bf16.msra.mxu0 0
    %2674 = vmatprep.mubr.bf16.mxu0 0
    %2675 = vmatmul.mubr.bf16.gmra.mrb[0].mxu0 %v2570
    %v2676 = vpop.f32.mrb[0].mxu0
    %v2677 = vadd.f32 0.0, %v2676
    %v2678 = vpop.f32.mrb[0].mxu0
    %v2679 = vpop.f32.mrb[0].mxu0
    %v2680 = vadd.f32 0.0, %v2679
    %v2681 = vpop.f32.mrb[0].mxu0
    %2682 = vmatprep.mubr.bf16.mxu0 0
    %2683 = vmatmul.mubr.bf16.gmra.mrb[0].mxu0 %v2571
    %v2684 = vpop.f32.mrb[0].mxu0
    %v2685 = vadd.f32 0.0, %v2684
    %v2686 = vpop.f32.mrb[0].mxu0
    %v2687 = vpop.f32.mrb[0].mxu0
    %v2688 = vadd.f32 0.0, %v2687
    %v2689 = vpop.f32.mrb[0].mxu0
    %2690 = vmatprep.mubr.bf16.mxu0 0
    %2691 = vmatmul.mubr.bf16.gmra.mrb[0].mxu0 %v2572
    %v2692 = vpop.f32.mrb[0].mxu0
    %v2693 = vadd.f32 0.0, %v2692
    %v2694 = vpop.f32.mrb[0].mxu0
    %v2695 = vpop.f32.mrb[0].mxu0
    %v2696 = vadd.f32 0.0, %v2695
    %v2697 = vpop.f32.mrb[0].mxu0
    %2698 = vmatprep.mubr.bf16.mxu0 0
    %2699 = vmatmul.mubr.bf16.gmra.mrb[0].mxu0 %v2573
    %v2700 = vpop.f32.mrb[0].mxu0
    %v2701 = vadd.f32 0.0, %v2700
    %v2702 = vpop.f32.mrb[0].mxu0
    %v2703 = vpop.f32.mrb[0].mxu0
    %v2704 = vadd.f32 0.0, %v2703
    %v2705 = vpop.f32.mrb[0].mxu0
    %2706 = vmatprep.mubr.bf16.mxu0 0
    %2707 = vmatmul.mubr.bf16.gmra.mrb[0].mxu0 %v2574
    %v2708 = vpop.f32.mrb[0].mxu0
    %v2709 = vadd.f32 0.0, %v2708
    %v2710 = vpop.f32.mrb[0].mxu0
    %v2711 = vpop.f32.mrb[0].mxu0
    %v2712 = vadd.f32 0.0, %v2711
    %v2713 = vpop.f32.mrb[0].mxu0
    %2714 = vmatprep.mubr.bf16.mxu0 0
    %2715 = vmatmul.mubr.bf16.gmra.mrb[0].mxu0 %v2575
    %v2716 = vpop.f32.mrb[0].mxu0
    %v2717 = vadd.f32 0.0, %v2716
    %v2718 = vpop.f32.mrb[0].mxu0
    %v2719 = vpop.f32.mrb[0].mxu0
    %v2720 = vadd.f32 0.0, %v2719
    %v2721 = vpop.f32.mrb[0].mxu0
    %2722 = vmatprep.mubr.bf16.mxu0 0
    %2723 = vmatmul.mubr.bf16.gmra.mrb[0].mxu0 %v2576
    %v2724 = vpop.f32.mrb[0].mxu0
    %v2725 = vadd.f32 0.0, %v2724
    %v2726 = vpop.f32.mrb[0].mxu0
    %v2727 = vpop.f32.mrb[0].mxu0
    %v2728 = vadd.f32 0.0, %v2727
    %v2729 = vpop.f32.mrb[0].mxu0
    %2730 = vmatprep.mubr.bf16.mxu0 0
    %2731 = vmatmul.mubr.bf16.gmra.mrb[0].mxu0 %v2577
    %v2732 = vpop.f32.mrb[0].mxu0
    %v2733 = vadd.f32 0.0, %v2732
    %v2734 = vpop.f32.mrb[0].mxu0
    %v2735 = vpop.f32.mrb[0].mxu0
    %v2736 = vadd.f32 0.0, %v2735
    %v2737 = vpop.f32.mrb[0].mxu0
    %2738 = vdwg.mxu0
    %v2755 = vunpack.c.l.b16 %v2554
    %v2756 = vunpack.c.l.b16 %v2555
    %v2757 = vunpack.c.l.b16 %v2556
    %v2758 = vunpack.c.l.b16 %v2557
    %v2759 = vunpack.c.l.b16 %v2558
    %v2760 = vunpack.c.l.b16 %v2559
    %v2761 = vunpack.c.l.b16 %v2560
    %v2762 = vunpack.c.l.b16 %v2561
    %v2763 = vunpack.c.l.b16 %v2562
    %v2764 = vunpack.c.l.b16 %v2563
    %v2765 = vunpack.c.l.b16 %v2564
    %v2766 = vunpack.c.l.b16 %v2565
    %v2767 = vunpack.c.l.b16 %v2566
    %v2768 = vunpack.c.l.b16 %v2567
    %v2769 = vunpack.c.l.b16 %v2568
    %v2770 = vunpack.c.l.b16 %v2569
    %v2771 = vpack.c.b16 %v2756, %v2755
    %v2772 = vpack.c.b16 %v2758, %v2757
    %v2773 = vpack.c.b16 %v2760, %v2759
    %v2774 = vpack.c.b16 %v2762, %v2761
    %v2775 = vpack.c.b16 %v2764, %v2763
    %v2776 = vpack.c.b16 %v2766, %v2765
    %v2777 = vpack.c.b16 %v2768, %v2767
    %v2778 = vpack.c.b16 %v2770, %v2769
    %2787 = vmatprep.subr.bf16.mxu0 0
    %2788 = vmatpush1.bf16.msra.mxu0 %v2771
    %2789 = vmatprep.subr.bf16.mxu0 0
    %2790 = vmatpush1.bf16.msra.mxu0 %v2772
    %2791 = vmatprep.subr.bf16.mxu0 0
    %2792 = vmatpush1.bf16.msra.mxu0 %v2773
    %2793 = vmatprep.subr.bf16.mxu0 0
    %2794 = vmatpush1.bf16.msra.mxu0 %v2774
    %2795 = vmatprep.subr.bf16.mxu0 0
    %2796 = vmatpush1.bf16.msra.mxu0 %v2775
    %2797 = vmatprep.subr.bf16.mxu0 0
    %2798 = vmatpush1.bf16.msra.mxu0 %v2776
    %2799 = vmatprep.subr.bf16.mxu0 0
    %2800 = vmatpush1.bf16.msra.mxu0 %v2777
    %2801 = vmatprep.subr.bf16.mxu0 0
    %2802 = vmatpush1.bf16.msra.mxu0 %v2778
    %2803 = vmatprep.subr.bf16.mxu0 0
    %2804 = vmatpush1.bf16.msra.mxu0 0
    %2805 = vmatprep.subr.bf16.mxu0 0
    %2806 = vmatpush1.bf16.msra.mxu0 0
    %2807 = vmatprep.subr.bf16.mxu0 0
    %2808 = vmatpush1.bf16.msra.mxu0 0
    %2809 = vmatprep.subr.bf16.mxu0 0
    %2810 = vmatpush1.bf16.msra.mxu0 0
    %2811 = vmatprep.subr.bf16.mxu0 0
    %2812 = vmatpush1.bf16.msra.mxu0 0
    %2813 = vmatprep.subr.bf16.mxu0 0
    %2814 = vmatpush1.bf16.msra.mxu0 0
    %2815 = vmatprep.subr.bf16.mxu0 0
    %2816 = vmatpush1.bf16.msra.mxu0 0
    %2817 = vmatprep.subr.bf16.mxu0 0
    %2818 = vmatpush1.bf16.msra.mxu0 0
    %2819 = vmatprep.mubr.bf16.mxu0 0
    %2820 = vmatmul.mubr.bf16.gmra.mrb[0].mxu0 %v2546
    %v2821 = vpop.f32.mrb[0].mxu0
    %v2822 = vadd.f32 %v2677, %v2821
    %v2823 = vpop.f32.mrb[0].mxu0
    %v2824 = vpop.f32.mrb[0].mxu0
    %v2825 = vadd.f32 %v2680, %v2824
    %v2826 = vpop.f32.mrb[0].mxu0
    %2827 = vmatprep.mubr.bf16.mxu0 0
    %2828 = vmatmul.mubr.bf16.gmra.mrb[0].mxu0 %v2547
    %v2829 = vpop.f32.mrb[0].mxu0
    %v2830 = vadd.f32 %v2685, %v2829
    %v2831 = vpop.f32.mrb[0].mxu0
    %v2832 = vpop.f32.mrb[0].mxu0
    %v2833 = vadd.f32 %v2688, %v2832
    %v2834 = vpop.f32.mrb[0].mxu0
    %2835 = vmatprep.mubr.bf16.mxu0 0
    %2836 = vmatmul.mubr.bf16.gmra.mrb[0].mxu0 %v2548
    %v2837 = vpop.f32.mrb[0].mxu0
    %v2838 = vadd.f32 %v2693, %v2837
    %v2839 = vpop.f32.mrb[0].mxu0
    %v2840 = vpop.f32.mrb[0].mxu0
    %v2841 = vadd.f32 %v2696, %v2840
    %v2842 = vpop.f32.mrb[0].mxu0
    %2843 = vmatprep.mubr.bf16.mxu0 0
    %2844 = vmatmul.mubr.bf16.gmra.mrb[0].mxu0 %v2549
    %v2845 = vpop.f32.mrb[0].mxu0
    %v2846 = vadd.f32 %v2701, %v2845
    %v2847 = vpop.f32.mrb[0].mxu0
    %v2848 = vpop.f32.mrb[0].mxu0
    %v2849 = vadd.f32 %v2704, %v2848
    %v2850 = vpop.f32.mrb[0].mxu0
    %2851 = vmatprep.mubr.bf16.mxu0 0
    %2852 = vmatmul.mubr.bf16.gmra.mrb[0].mxu0 %v2550
    %v2853 = vpop.f32.mrb[0].mxu0
    %v2854 = vadd.f32 %v2709, %v2853
    %v2855 = vpop.f32.mrb[0].mxu0
    %v2856 = vpop.f32.mrb[0].mxu0
    %v2857 = vadd.f32 %v2712, %v2856
    %v2858 = vpop.f32.mrb[0].mxu0
    %2859 = vmatprep.mubr.bf16.mxu0 0
    %2860 = vmatmul.mubr.bf16.gmra.mrb[0].mxu0 %v2551
    %v2861 = vpop.f32.mrb[0].mxu0
    %v2862 = vadd.f32 %v2717, %v2861
    %v2863 = vpop.f32.mrb[0].mxu0
    %v2864 = vpop.f32.mrb[0].mxu0
    %v2865 = vadd.f32 %v2720, %v2864
    %v2866 = vpop.f32.mrb[0].mxu0
    %2867 = vmatprep.mubr.bf16.mxu0 0
    %2868 = vmatmul.mubr.bf16.gmra.mrb[0].mxu0 %v2552
    %v2869 = vpop.f32.mrb[0].mxu0
    %v2870 = vadd.f32 %v2725, %v2869
    %v2871 = vpop.f32.mrb[0].mxu0
    %v2872 = vpop.f32.mrb[0].mxu0
    %v2873 = vadd.f32 %v2728, %v2872
    %v2874 = vpop.f32.mrb[0].mxu0
    %2875 = vmatprep.mubr.bf16.mxu0 0
    %2876 = vmatmul.mubr.bf16.gmra.mrb[0].mxu0 %v2553
    %v2877 = vpop.f32.mrb[0].mxu0
    %v2878 = vadd.f32 %v2733, %v2877
    %v2879 = vpop.f32.mrb[0].mxu0
    %v2880 = vpop.f32.mrb[0].mxu0
    %v2881 = vadd.f32 %v2736, %v2880
    %v2882 = vpop.f32.mrb[0].mxu0
    %2883 = vdwg.mxu0
    %v2884 = vld [vmem:[#allocation26] sm:$0x1]
    %v2886 = vlaneseq
    %v2887 = vshrl.u32 %v2886, 7
    %v2888 = vsub.s32 0, %v2887
    %v2889 = vrot.slane %v2884, %v2888
    %v2891 = vadd.f32 %v2822, %v2889
    %v2892 = vadd.f32 %v2825, %v2889
    %v2893 = vadd.f32 %v2830, %v2889
    %v2894 = vadd.f32 %v2833, %v2889
    %v2895 = vadd.f32 %v2838, %v2889
    %v2896 = vadd.f32 %v2841, %v2889
    %v2897 = vadd.f32 %v2846, %v2889
    %v2898 = vadd.f32 %v2849, %v2889
    %v2899 = vadd.f32 %v2854, %v2889
    %v2900 = vadd.f32 %v2857, %v2889
    %v2901 = vadd.f32 %v2862, %v2889
    %v2902 = vadd.f32 %v2865, %v2889
    %v2903 = vadd.f32 %v2870, %v2889
    %v2904 = vadd.f32 %v2873, %v2889
    %v2905 = vadd.f32 %v2878, %v2889
    %v2906 = vadd.f32 %v2881, %v2889
    %v2907 = vmax.f32 %v2891, 0.0
    %v2908 = vmax.f32 %v2892, 0.0
    %v2909 = vmax.f32 %v2893, 0.0
    %v2910 = vmax.f32 %v2894, 0.0
    %v2911 = vmax.f32 %v2895, 0.0
    %v2912 = vmax.f32 %v2896, 0.0
    %v2913 = vmax.f32 %v2897, 0.0
    %v2914 = vmax.f32 %v2898, 0.0
    %v2915 = vmax.f32 %v2899, 0.0
    %v2916 = vmax.f32 %v2900, 0.0
    %v2917 = vmax.f32 %v2901, 0.0
    %v2918 = vmax.f32 %v2902, 0.0
    %v2919 = vmax.f32 %v2903, 0.0
    %v2920 = vmax.f32 %v2904, 0.0
    %v2921 = vmax.f32 %v2905, 0.0
    %v2922 = vmax.f32 %v2906, 0.0
    %2923 = vxpose.xlu0.b32.start [1/16] %v2907, 128
    %2924 = vxpose.xlu0.b32.cont [2/16] %v2908, 128
    %2925 = vxpose.xlu0.b32.cont [3/16] %v2909, 128
    %2926 = vxpose.xlu0.b32.cont [4/16] %v2910, 128
    %2927 = vxpose.xlu0.b32.cont [5/16] %v2911, 128
    %2928 = vxpose.xlu0.b32.cont [6/16] %v2912, 128
    %2929 = vxpose.xlu0.b32.cont [7/16] %v2913, 128
    %2930 = vxpose.xlu0.b32.cont [8/16] %v2914, 128
    %2931 = vxpose.xlu0.b32.cont [9/16] %v2915, 128
    %2932 = vxpose.xlu0.b32.cont [10/16] %v2916, 128
    %2933 = vxpose.xlu0.b32.cont [11/16] %v2917, 128
    %2934 = vxpose.xlu0.b32.cont [12/16] %v2918, 128
    %2935 = vxpose.xlu0.b32.cont [13/16] %v2919, 128
    %2936 = vxpose.xlu0.b32.cont [14/16] %v2920, 128
    %2937 = vxpose.xlu0.b32.cont [15/16] %v2921, 128
    %2938 = vxpose.xlu0.b32.end [16/16] %v2922, 128
    %v2939 = vpop.trf.xlu0
    %v2940 = vpop.trf.xlu0
    %v2941 = vpop.trf.xlu0
    %v2942 = vpop.trf.xlu0
    %v2943 = vpop.trf.xlu0
    %v2944 = vpop.trf.xlu0
    %v2945 = vpop.trf.xlu0
    %v2946 = vpop.trf.xlu0
    %v2947 = vpop.trf.xlu0
    %v2948 = vpop.trf.xlu0
    %v2949 = vpop.trf.xlu0
    %v2950 = vpop.trf.xlu0
    %v2951 = vpop.trf.xlu0
    %v2952 = vpop.trf.xlu0
    %v2953 = vpop.trf.xlu0
    %v2954 = vpop.trf.xlu0
    %v2955 = vld [vmem:[%s22] sm:$0xff]
    %v2956 = vld [vmem:[%s22 + $0x8] sm:$0xff]
    %v2957 = vld [vmem:[%s22 + $0x10] sm:$0xff]
    %v2958 = vld [vmem:[%s22 + $0x18] sm:$0xff]
    %v2959 = vld [vmem:[%s22 + $0x20] sm:$0xff]
    %v2960 = vld [vmem:[%s22 + $0x28] sm:$0xff]
    %v2961 = vld [vmem:[%s22 + $0x30] sm:$0xff]
    %v2962 = vld [vmem:[%s22 + $0x38] sm:$0xff]
    %v2963 = vld [vmem:[%s22 + $0x40] sm:$0xff]
    %v2964 = vld [vmem:[%s22 + $0x48] sm:$0xff]
    %v2965 = vld [vmem:[%s22 + $0x50] sm:$0xff]
    %v2966 = vld [vmem:[%s22 + $0x58] sm:$0xff]
    %v2967 = vld [vmem:[%s22 + $0x60] sm:$0xff]
    %v2968 = vld [vmem:[%s22 + $0x68] sm:$0xff]
    %v2969 = vld [vmem:[%s22 + $0x70] sm:$0xff]
    %v2970 = vld [vmem:[%s22 + $0x78] sm:$0xff]
    %2972 = vset.pattern.permute.xlu0 0
    %2973 = vperm.xlu0 %2972, %v2955
    %v2974 = vpop.permute.xlu0 %2973
    %2977 = vset.pattern.permute.xlu0 0
    %2978 = vperm.xlu0 %2977, %v2956
    %v2979 = vpop.permute.xlu0 %2978
    %2982 = vset.pattern.permute.xlu0 0
    %2983 = vperm.xlu0 %2982, %v2957
    %v2984 = vpop.permute.xlu0 %2983
    %2987 = vset.pattern.permute.xlu0 0
    %2988 = vperm.xlu0 %2987, %v2958
    %v2989 = vpop.permute.xlu0 %2988
    %2992 = vset.pattern.permute.xlu0 0
    %2993 = vperm.xlu0 %2992, %v2959
    %v2994 = vpop.permute.xlu0 %2993
    %2997 = vset.pattern.permute.xlu0 0
    %2998 = vperm.xlu0 %2997, %v2960
    %v2999 = vpop.permute.xlu0 %2998
    %3002 = vset.pattern.permute.xlu0 0
    %3003 = vperm.xlu0 %3002, %v2961
    %v3004 = vpop.permute.xlu0 %3003
    %3007 = vset.pattern.permute.xlu0 0
    %3008 = vperm.xlu0 %3007, %v2962
    %v3009 = vpop.permute.xlu0 %3008
    %3012 = vset.pattern.permute.xlu0 0
    %3013 = vperm.xlu0 %3012, %v2963
    %v3014 = vpop.permute.xlu0 %3013
    %3017 = vset.pattern.permute.xlu0 0
    %3018 = vperm.xlu0 %3017, %v2964
    %v3019 = vpop.permute.xlu0 %3018
    %3022 = vset.pattern.permute.xlu0 0
    %3023 = vperm.xlu0 %3022, %v2965
    %v3024 = vpop.permute.xlu0 %3023
    %3027 = vset.pattern.permute.xlu0 0
    %3028 = vperm.xlu0 %3027, %v2966
    %v3029 = vpop.permute.xlu0 %3028
    %3032 = vset.pattern.permute.xlu0 0
    %3033 = vperm.xlu0 %3032, %v2967
    %v3034 = vpop.permute.xlu0 %3033
    %3037 = vset.pattern.permute.xlu0 0
    %3038 = vperm.xlu0 %3037, %v2968
    %v3039 = vpop.permute.xlu0 %3038
    %3042 = vset.pattern.permute.xlu0 0
    %3043 = vperm.xlu0 %3042, %v2969
    %v3044 = vpop.permute.xlu0 %3043
    %3047 = vset.pattern.permute.xlu0 0
    %3048 = vperm.xlu0 %3047, %v2970
    %v3049 = vpop.permute.xlu0 %3048
    %v3051 = vmul.f32 %v2939, %v2974
    %v3052 = vmul.f32 %v2940, %v2979
    %v3053 = vmul.f32 %v2941, %v2984
    %v3054 = vmul.f32 %v2942, %v2989
    %v3055 = vmul.f32 %v2943, %v2994
    %v3056 = vmul.f32 %v2944, %v2999
    %v3057 = vmul.f32 %v2945, %v3004
    %v3058 = vmul.f32 %v2946, %v3009
    %v3059 = vmul.f32 %v2947, %v3014
    %v3060 = vmul.f32 %v2948, %v3019
    %v3061 = vmul.f32 %v2949, %v3024
    %v3062 = vmul.f32 %v2950, %v3029
    %v3063 = vmul.f32 %v2951, %v3034
    %v3064 = vmul.f32 %v2952, %v3039
    %v3065 = vmul.f32 %v2953, %v3044
    %v3066 = vmul.f32 %v2954, %v3049
    %v3067 = vadd.f32 %v3051, %v3052
    %v3068 = vadd.f32 %v3067, %v3053
    %v3069 = vadd.f32 %v3068, %v3054
    %v3070 = vadd.f32 %v3069, %v3055
    %v3071 = vadd.f32 %v3070, %v3056
    %v3072 = vadd.f32 %v3071, %v3057
    %v3073 = vadd.f32 %v3072, %v3058
    %v3074 = vadd.f32 %v3073, %v3059
    %v3075 = vadd.f32 %v3074, %v3060
    %v3076 = vadd.f32 %v3075, %v3061
    %v3077 = vadd.f32 %v3076, %v3062
    %v3078 = vadd.f32 %v3077, %v3063
    %v3079 = vadd.f32 %v3078, %v3064
    %v3080 = vadd.f32 %v3079, %v3065
    %v3081 = vadd.f32 %v3080, %v3066
    %v3082 = vrot.slane %v3081, 4
    %v3083 = vadd.f32 %v3081, %v3082
    %v3084 = vrot.slane %v3083, 2
    %v3085 = vadd.f32 %v3083, %v3084
    %v3086 = vrot.slane %v3085, 1
    %v3087 = vadd.f32 %v3085, %v3086
    %v3088 = vld [vmem:[#allocation2] sm:$0x1]
    %3090 = vset.pattern.permute.xlu0 0
    %3091 = vperm.xlu0 %3090, %v3088
    %v3092 = vpop.permute.xlu0 %3091
    %v3094 = vlaneseq
    %v3095 = vshrl.u32 %v3094, 7
    %v3096 = vsub.s32 0, %v3095
    %v3097 = vrot.slane %v3092, %v3096
    %v3098 = vadd.f32 %v3087, %v3097
    %v3099 = vxor.u32 %v3098, 2147483648
    %v3100 = vmul.f32 %v3099, 1.442695
    %v3101 = vpow.pop %v3100
    %v3102 = vadd.f32 %v3101, 1.0
    %v3103 = vrcp.pop %v3102
    %v3104 = vmul.f32 1.0, %v3103
    %3105 = vst [vmem:[#allocation27] sm:$0x1] %v3104
    // Predicated region
    $region158: #{_bifusion_forward_call.1} parent=1 // pred_check
      _
    $region159: #{_bifusion_forward_call.1} parent=1 // pred_check_branch
      %3107 = sbr.rel (0) target = $region161
    $region160: #{_bifusion_forward_call.1} parent=1 // pred_region
      %s3109 = ssub.s32 16, 16
      %3110 = vsyncadd [#allocation5], %s3109
      %s3112 = sshll.u32 [#allocation27], 4
      %s3113 = int_to_ptr.vmem [resolvable:$true] %s3112
      %3115 = dma.vmem_to_hbm [thread:$0]  %s3113, 16, %s24, [#allocation5]
    $region161: #{_bifusion_forward_call.1} parent=1 // pred_fallthru
      _
    // Predicated region
    $region162: #{_bifusion_forward_call.1} parent=1 // pred_check
      _
    $region163: #{_bifusion_forward_call.1} parent=1 // pred_check_branch
      %3117 = sbr.rel (0) target = $region165
    $region164: #{_bifusion_forward_call.1} parent=1 // pred_region
      %3118 = dma.done [#allocation5], 16
    $region165: #{_bifusion_forward_call.1} parent=1 // pred_fallthru
      _
    %3119 = vsyncpa [#allocation4], 1
    %3120 = vsyncpa [#allocation7], 1
    %3121 = vsyncpa [#allocation10], 1
    %3122 = vsyncpa [#allocation13], 1
    %3123 = vsyncpa [#allocation16], 1
    %3124 = vsyncpa [#allocation19], 1
    %3125 = vsyncpa [#allocation22], 1
    %3126 = vsyncpa [#allocation25], 1
    %3127 = vsyncpa [#allocation5], 1

</llo_original>
